<compile_context>
chip_gen: v6e
topology: v6e:2x2x1
jax: 0.10.0
libtpu: 0.0.40
codegen_flags: <defaults>
</compile_context>

<pallas_src>
import jax
import jax.numpy as jnp
import numpy as np
from jax import lax
from jax.experimental import pallas as pl
from jax.experimental.pallas import tpu as pltpu

LN_DIM = [31, 15, 7, 3]
LN_EPS = 1e-5
NUM_LAYERS = 4
KSIZE = 3
STRIDE = 2


# ----------------------------- fused Pallas kernel ---------------------------

def _encoder_kernel(flag_ref, obs_ref, *refs):
    """Whole PixelEncoder forward for one sample (one grid step).

    flag_ref : SMEM (1,) int32 scalar prefetch -- 1 iff obs must be divided by 255.
    obs_ref  : (1, W0, C0*H0) sample in transposed layout z[w, c*H + h] = obs[c, h, w].
    refs     : 5 operands per conv layer (S^T, A^T, bias_row, ln_w^T, ln_b^T),
               then head operands (G, fc_b, ln_fc_w, ln_fc_b), then the output ref.
    """
    out_ref = refs[-1]
    layer_refs = refs[:5 * NUM_LAYERS]
    g_ref, fcb_ref, lnfw_ref, lnfb_ref = refs[5 * NUM_LAYERS:5 * NUM_LAYERS + 4]

    scale = jnp.where(flag_ref[0] > 0, jnp.float32(1.0 / 255.0), jnp.float32(1.0))
    z = obs_ref[0] * scale                                    # (W0, C0*H0), lane-dense

    for l in range(NUM_LAYERS):
        st_ref, at_ref, b_ref, lnw_ref, lnb_ref = layer_refs[5 * l:5 * l + 5]
        # conv3x3 stride-2 as 6 unit-stride matmuls, f32 accumulation (DEFAULT MXU precision).
        y = None
        for kj in range(KSIZE):
            xc = jnp.dot(st_ref[kj], z, preferred_element_type=jnp.float32)   # (Wo, Cin*Hin)
            p = jnp.dot(xc, at_ref[kj], preferred_element_type=jnp.float32)   # (Wo, Cout*Ho)
            y = p if y is None else y + p
        y = y + b_ref[...]                                    # bias row, broadcast over Wo rows
        # LayerNorm over the full (Cout, Ho, Wo) slab of this sample (biased variance);
        # the block holds exactly the real elements, so whole-array stats are correct.
        mu = jnp.mean(y)
        var = jnp.mean((y - mu) ** 2)
        yn = (y - mu) * lax.rsqrt(var + LN_EPS)
        z = jnp.maximum(yn * lnw_ref[...] + lnb_ref[...], 0.0)   # next z: (Wo, Cout*Ho)

    # fc -> LayerNorm(feature_dim) -> tanh, fused.  z is (3, 48); the NCHW flatten order is
    # absorbed into the pre-permuted fc weight G[j], so no in-kernel reshape/transpose.
    h = fcb_ref[...]                                          # (1, F)
    for j in range(LN_DIM[-1]):
        h = h + jnp.dot(z[j:j + 1, :], g_ref[j], preferred_element_type=jnp.float32)
    mu = jnp.mean(h)
    var = jnp.mean((h - mu) ** 2)
    hn = (h - mu) * lax.rsqrt(var + LN_EPS)
    out_ref[0] = jnp.tanh(hn * lnfw_ref[...] + lnfb_ref[...])


# -------------------- wrapper-side (weight-only) operand prep -----------------

def _conv_layer_operands(w, b, lnw, lnb, hin, win):
    """Turn torch-layout conv + LayerNorm params into the kernel's matmul operands."""
    cout, cin = w.shape[0], w.shape[1]
    ho = (hin - KSIZE) // STRIDE + 1
    wo = (win - KSIZE) // STRIDE + 1

    # S^T[kj, oj, w] = 1  iff  w == 2*oj + kj   (constant 0/1 column selector).
    st = np.zeros((KSIZE, wo, win), np.float32)
    oj = np.arange(wo)
    for kj in range(KSIZE):
        st[kj, oj, STRIDE * oj + kj] = 1.0
    st = jnp.asarray(st)

    # A^T[kj, ci*hin + h, co*ho + oi] = W[co, ci, h - 2*oi, kj]  (0 outside the band).
    oi = np.arange(ho)
    hh = np.arange(hin)
    ki = hh[None, :] - STRIDE * oi[:, None]                   # (ho, hin)
    valid = jnp.asarray((ki >= 0) & (ki < KSIZE), jnp.float32)
    ki_clip = np.clip(ki, 0, KSIZE - 1).reshape(-1)
    wk = jnp.take(w, jnp.asarray(ki_clip), axis=2)            # (cout, cin, ho*hin, 3)
    wk = wk.reshape(cout, cin, ho, hin, KSIZE) * valid[None, None, :, :, None]
    at = jnp.transpose(wk, (4, 1, 3, 0, 2)).reshape(KSIZE, cin * hin, cout * ho)

    b_row = jnp.repeat(b, ho)[None, :]                        # (1, cout*ho)
    lnw_t = jnp.transpose(lnw, (2, 0, 1)).reshape(wo, cout * ho)
    lnb_t = jnp.transpose(lnb, (2, 0, 1)).reshape(wo, cout * ho)
    return [st, at, b_row, lnw_t, lnb_t], ho, wo


def _head_operands(params, num_filters):
    f_dim, fc_in = params["fc_w"].shape
    d = LN_DIM[-1]
    assert fc_in == num_filters * d * d
    # G[oj, co*d + oi, f] = fc_w[f, co*d*d + oi*d + oj]  (absorbs the (C,H,W) flatten order).
    g = jnp.transpose(params["fc_w"].reshape(f_dim, num_filters, d, d), (3, 1, 2, 0))
    g = g.reshape(d, num_filters * d, f_dim)
    return [g, params["fc_b"][None, :], params["ln_fc_w"][None, :],
            params["ln_fc_b"][None, :]]


def pixel_encoder_forward(obs, params):
    """obs: (B, C, H, W) float32, NCHW like the PyTorch module (main image branch).

    # TODO(synk): the non-image forward branches (obs.shape[1] == feature_dim / pre-flattened
    # feature input), detach / detach_fc flags, output_logits=True and the self.outputs logging
    # dict are autograd / bookkeeping paths that do not affect this forward's values.
    """
    B, C, H, W = obs.shape
    assert (H, W) == (64, 64) and len(params["conv"]) == NUM_LAYERS, (
        "fc in_features hardcodes LN_DIM[-1]**2 -> requires 64x64 input and 4 conv layers")

    # forward_conv's `if obs.max() > 1: obs /= 255`: only the (batch-global) flag is computed
    # here; the division happens inside the kernel, so obs is never rewritten in HBM.
    flag = (jnp.max(obs) > 1.0).astype(jnp.int32).reshape(1)

    # Transposed, lane-dense layout for the kernel: z0[b, w, c*H + h] = obs[b, c, h, w].
    z0 = jnp.transpose(obs, (0, 3, 1, 2)).reshape(B, W, C * H).astype(jnp.float32)

    operands = []
    hin, win = H, W
    num_filters = params["conv"][0][0].shape[0]
    for i in range(NUM_LAYERS):
        w, b, lnw, lnb = params["conv"][i]
        ops, hin, win = _conv_layer_operands(w, b, lnw, lnb, hin, win)
        operands += ops
    operands += _head_operands(params, num_filters)
    f_dim = params["fc_w"].shape[0]

    def _const_spec(x):
        zeros = (0,) * x.ndim
        return pl.BlockSpec(x.shape, lambda b, flag_ref: zeros)

    in_specs = [pl.BlockSpec((1, W, C * H), lambda b, flag_ref: (b, 0, 0))]
    in_specs += [_const_spec(x) for x in operands]

    out = pl.pallas_call(
        _encoder_kernel,
        out_shape=jax.ShapeDtypeStruct((B, 1, f_dim), jnp.float32),
        grid_spec=pltpu.PrefetchScalarGridSpec(
            num_scalar_prefetch=1,
            grid=(B,),
            in_specs=in_specs,
            out_specs=pl.BlockSpec((1, 1, f_dim), lambda b, flag_ref: (b, 0, 0)),
        ),
        compiler_params=pltpu.CompilerParams(
            dimension_semantics=("parallel",)),
    )(flag, z0, *operands)
    return out.reshape(B, f_dim)


# -------------------------------- reference -----------------------------------

def init_params(key, obs_shape, feature_dim, num_layers, num_filters):
    c_in = obs_shape[0]
    out_dim = LN_DIM[-1]
    params = {"conv": []}
    for i in range(num_layers):
        cin = c_in if i == 0 else num_filters
        key, k1, k2, k3, k4 = jax.random.split(key, 5)
        fan_in = cin * 9
        w = jax.random.normal(k1, (num_filters, cin, 3, 3), jnp.float32) / jnp.sqrt(fan_in)
        b = 0.01 * jax.random.normal(k2, (num_filters,), jnp.float32)
        d = LN_DIM[i]
        lnw = 1.0 + 0.1 * jax.random.normal(k3, (num_filters, d, d), jnp.float32)
        lnb = 0.1 * jax.random.normal(k4, (num_filters, d, d), jnp.float32)
        params["conv"].append((w, b, lnw, lnb))
    key, k1, k2, k3, k4 = jax.random.split(key, 5)
    fc_in = num_filters * out_dim * out_dim
    params["fc_w"] = jax.random.normal(k1, (feature_dim, fc_in), jnp.float32) / jnp.sqrt(fc_in)
    params["fc_b"] = 0.01 * jax.random.normal(k2, (feature_dim,), jnp.float32)
    params["ln_fc_w"] = 1.0 + 0.1 * jax.random.normal(k3, (feature_dim,), jnp.float32)
    params["ln_fc_b"] = 0.1 * jax.random.normal(k4, (feature_dim,), jnp.float32)
    return params


def reference_forward(obs, params, num_layers=NUM_LAYERS):
    """Pure-JAX/XLA reference of the PyTorch forward (main image branch, HIGHEST precision)."""
    x = jnp.where(jnp.max(obs) > 1.0, obs / 255.0, obs)
    for i in range(num_layers):
        w, b, lnw, lnb = params["conv"][i]
        x = lax.conv_general_dilated(
            x, w, window_strides=(2, 2), padding="VALID",
            dimension_numbers=("NCHW", "OIHW", "NCHW"),
            precision=lax.Precision.HIGHEST)
        x = x + b[None, :, None, None]
        mu = x.mean(axis=(1, 2, 3), keepdims=True)
        var = ((x - mu) ** 2).mean(axis=(1, 2, 3), keepdims=True)
        x = (x - mu) / jnp.sqrt(var + LN_EPS) * lnw[None] + lnb[None]
        x = jnp.maximum(x, 0.0)
    h = x.reshape(x.shape[0], -1)
    y = jnp.dot(h, params["fc_w"].T, precision=lax.Precision.HIGHEST) + params["fc_b"]
    mu = y.mean(-1, keepdims=True)
    var = ((y - mu) ** 2).mean(-1, keepdims=True)
    y = (y - mu) / jnp.sqrt(var + LN_EPS) * params["ln_fc_w"] + params["ln_fc_b"]
    return jnp.tanh(y)


if __name__ == "__main__":
    B = 2
    obs_shape = (3, 64, 64)     # 64x64 input -> spatial sizes [31, 15, 7, 3] == LN_DIM
    feature_dim = 32
    num_filters = 16

    key = jax.random.PRNGKey(0)
    kp, kx = jax.random.split(key)
    params = init_params(kp, obs_shape, feature_dim, NUM_LAYERS, num_filters)
    # Pixel observations in [0, 255] -> exercises the obs/255 branch.
    obs = jax.random.uniform(kx, (B,) + obs_shape, jnp.float32, 0.0, 255.0)

    fwd = jax.jit(pixel_encoder_forward)
    out = jax.block_until_ready(fwd(obs, params))
    ref = jax.block_until_ready(reference_forward(obs, params))

    assert out.shape == (B, feature_dim)
    err = float(jnp.max(jnp.abs(out - ref)))
    # Kernel uses DEFAULT MXU precision (f32 accumulation); reference uses HIGHEST.
    # Observed deviation is ~1e-3; 1e-2 bounds it with margin.
    assert err < 1e-2, err
    print("KERNEL_OK")
</pallas_src>

<mosaic_0001>
module attributes {stable_mosaic.version = 11 : i64} {
  func.func @_encoder_kernel(%arg0: i32, %arg1: memref<1xi32, #tpu.memory_space<smem>>, %arg2: memref<1x64x192xf32, #tpu.memory_space<vmem>>, %arg3: memref<3x31x64xf32, #tpu.memory_space<vmem>>, %arg4: memref<3x192x496xf32, #tpu.memory_space<vmem>>, %arg5: memref<1x496xf32, #tpu.memory_space<vmem>>, %arg6: memref<31x496xf32, #tpu.memory_space<vmem>>, %arg7: memref<31x496xf32, #tpu.memory_space<vmem>>, %arg8: memref<3x15x31xf32, #tpu.memory_space<vmem>>, %arg9: memref<3x496x240xf32, #tpu.memory_space<vmem>>, %arg10: memref<1x240xf32, #tpu.memory_space<vmem>>, %arg11: memref<15x240xf32, #tpu.memory_space<vmem>>, %arg12: memref<15x240xf32, #tpu.memory_space<vmem>>, %arg13: memref<3x7x15xf32, #tpu.memory_space<vmem>>, %arg14: memref<3x240x112xf32, #tpu.memory_space<vmem>>, %arg15: memref<1x112xf32, #tpu.memory_space<vmem>>, %arg16: memref<7x112xf32, #tpu.memory_space<vmem>>, %arg17: memref<7x112xf32, #tpu.memory_space<vmem>>, %arg18: memref<3x3x7xf32, #tpu.memory_space<vmem>>, %arg19: memref<3x112x48xf32, #tpu.memory_space<vmem>>, %arg20: memref<1x48xf32, #tpu.memory_space<vmem>>, %arg21: memref<3x48xf32, #tpu.memory_space<vmem>>, %arg22: memref<3x48xf32, #tpu.memory_space<vmem>>, %arg23: memref<3x48x32xf32, #tpu.memory_space<vmem>>, %arg24: memref<1x32xf32, #tpu.memory_space<vmem>>, %arg25: memref<1x32xf32, #tpu.memory_space<vmem>>, %arg26: memref<1x32xf32, #tpu.memory_space<vmem>>, %arg27: memref<1x1x32xf32, #tpu.memory_space<vmem>>) attributes {dimension_semantics = [#tpu.dimension_semantics<parallel>], iteration_bounds = array<i64: 2>, scalar_prefetch = 1 : i64, scratch_operands = 0 : i64, tpu.core_type = #tpu.core_type<tc>, window_params = [{transform_indices = @transform_0, window_bounds = array<i64: 1, 64, 192>}, {pipeline_mode = #tpu.pipeline_mode<synchronous>, transform_indices = @transform_1, window_bounds = array<i64: 3, 31, 64>}, {pipeline_mode = #tpu.pipeline_mode<synchronous>, transform_indices = @transform_2, window_bounds = array<i64: 3, 192, 496>}, {pipeline_mode = #tpu.pipeline_mode<synchronous>, transform_indices = @transform_3, window_bounds = array<i64: 1, 496>}, {pipeline_mode = #tpu.pipeline_mode<synchronous>, transform_indices = @transform_4, window_bounds = array<i64: 31, 496>}, {pipeline_mode = #tpu.pipeline_mode<synchronous>, transform_indices = @transform_5, window_bounds = array<i64: 31, 496>}, {pipeline_mode = #tpu.pipeline_mode<synchronous>, transform_indices = @transform_6, window_bounds = array<i64: 3, 15, 31>}, {pipeline_mode = #tpu.pipeline_mode<synchronous>, transform_indices = @transform_7, window_bounds = array<i64: 3, 496, 240>}, {pipeline_mode = #tpu.pipeline_mode<synchronous>, transform_indices = @transform_8, window_bounds = array<i64: 1, 240>}, {pipeline_mode = #tpu.pipeline_mode<synchronous>, transform_indices = @transform_9, window_bounds = array<i64: 15, 240>}, {pipeline_mode = #tpu.pipeline_mode<synchronous>, transform_indices = @transform_10, window_bounds = array<i64: 15, 240>}, {pipeline_mode = #tpu.pipeline_mode<synchronous>, transform_indices = @transform_11, window_bounds = array<i64: 3, 7, 15>}, {pipeline_mode = #tpu.pipeline_mode<synchronous>, transform_indices = @transform_12, window_bounds = array<i64: 3, 240, 112>}, {pipeline_mode = #tpu.pipeline_mode<synchronous>, transform_indices = @transform_13, window_bounds = array<i64: 1, 112>}, {pipeline_mode = #tpu.pipeline_mode<synchronous>, transform_indices = @transform_14, window_bounds = array<i64: 7, 112>}, {pipeline_mode = #tpu.pipeline_mode<synchronous>, transform_indices = @transform_15, window_bounds = array<i64: 7, 112>}, {pipeline_mode = #tpu.pipeline_mode<synchronous>, transform_indices = @transform_16, window_bounds = array<i64: 3, 3, 7>}, {pipeline_mode = #tpu.pipeline_mode<synchronous>, transform_indices = @transform_17, window_bounds = array<i64: 3, 112, 48>}, {pipeline_mode = #tpu.pipeline_mode<synchronous>, transform_indices = @transform_18, window_bounds = array<i64: 1, 48>}, {pipeline_mode = #tpu.pipeline_mode<synchronous>, transform_indices = @transform_19, window_bounds = array<i64: 3, 48>}, {pipeline_mode = #tpu.pipeline_mode<synchronous>, transform_indices = @transform_20, window_bounds = array<i64: 3, 48>}, {pipeline_mode = #tpu.pipeline_mode<synchronous>, transform_indices = @transform_21, window_bounds = array<i64: 3, 48, 32>}, {pipeline_mode = #tpu.pipeline_mode<synchronous>, transform_indices = @transform_22, window_bounds = array<i64: 1, 32>}, {pipeline_mode = #tpu.pipeline_mode<synchronous>, transform_indices = @transform_23, window_bounds = array<i64: 1, 32>}, {pipeline_mode = #tpu.pipeline_mode<synchronous>, transform_indices = @transform_24, window_bounds = array<i64: 1, 32>}, {transform_indices = @transform_25, window_bounds = array<i64: 1, 1, 32>}]} {
    %c0 = arith.constant 0 : index
    %0 = memref.load %arg1[%c0] : memref<1xi32, #tpu.memory_space<smem>>
    %c0_i32 = arith.constant 0 : i32
    %1 = arith.cmpi sgt, %0, %c0_i32 : i32
    %cst = arith.constant 0.00392156886 : f32
    %cst_0 = arith.constant 1.000000e+00 : f32
    %2 = arith.select %1, %cst, %cst_0 : f32
    %c0_1 = arith.constant 0 : index
    %c0_2 = arith.constant 0 : index
    %c0_3 = arith.constant 0 : index
    %3 = vector.load %arg2[%c0_1, %c0_2, %c0_3] : memref<1x64x192xf32, #tpu.memory_space<vmem>>, vector<1x64x192xf32>
    %4 = vector.shape_cast %3 : vector<1x64x192xf32> to vector<64x192xf32>
    %5 = vector.broadcast %2 : f32 to vector<64x192xf32>
    %6 = arith.mulf %4, %5 : vector<64x192xf32>
    %c0_4 = arith.constant 0 : index
    %c0_5 = arith.constant 0 : index
    %c0_6 = arith.constant 0 : index
    %7 = vector.load %arg3[%c0_4, %c0_5, %c0_6] : memref<3x31x64xf32, #tpu.memory_space<vmem>>, vector<1x31x64xf32>
    %8 = vector.shape_cast %7 : vector<1x31x64xf32> to vector<31x64xf32>
    %cst_7 = arith.constant dense<0.000000e+00> : vector<31x192xf32>
    %9 = tpu.matmul %8, %6, %cst_7 {dimension_numbers = #tpu.dot_dimension_numbers<[1], [0], [0], [1], [0, 0, 1, 1], [], []>} : vector<31x64xf32>, vector<64x192xf32>, vector<31x192xf32> -> vector<31x192xf32>
    %c0_8 = arith.constant 0 : index
    %c0_9 = arith.constant 0 : index
    %c0_10 = arith.constant 0 : index
    %10 = vector.load %arg4[%c0_8, %c0_9, %c0_10] : memref<3x192x496xf32, #tpu.memory_space<vmem>>, vector<1x192x496xf32>
    %11 = vector.shape_cast %10 : vector<1x192x496xf32> to vector<192x496xf32>
    %cst_11 = arith.constant dense<0.000000e+00> : vector<31x496xf32>
    %12 = tpu.matmul %9, %11, %cst_11 {dimension_numbers = #tpu.dot_dimension_numbers<[1], [0], [0], [1], [0, 0, 1, 1], [], []>} : vector<31x192xf32>, vector<192x496xf32>, vector<31x496xf32> -> vector<31x496xf32>
    %c1 = arith.constant 1 : index
    %c0_12 = arith.constant 0 : index
    %c0_13 = arith.constant 0 : index
    %13 = vector.load %arg3[%c1, %c0_12, %c0_13] : memref<3x31x64xf32, #tpu.memory_space<vmem>>, vector<1x31x64xf32>
    %14 = vector.shape_cast %13 : vector<1x31x64xf32> to vector<31x64xf32>
    %cst_14 = arith.constant dense<0.000000e+00> : vector<31x192xf32>
    %15 = tpu.matmul %14, %6, %cst_14 {dimension_numbers = #tpu.dot_dimension_numbers<[1], [0], [0], [1], [0, 0, 1, 1], [], []>} : vector<31x64xf32>, vector<64x192xf32>, vector<31x192xf32> -> vector<31x192xf32>
    %c1_15 = arith.constant 1 : index
    %c0_16 = arith.constant 0 : index
    %c0_17 = arith.constant 0 : index
    %16 = vector.load %arg4[%c1_15, %c0_16, %c0_17] : memref<3x192x496xf32, #tpu.memory_space<vmem>>, vector<1x192x496xf32>
    %17 = vector.shape_cast %16 : vector<1x192x496xf32> to vector<192x496xf32>
    %cst_18 = arith.constant dense<0.000000e+00> : vector<31x496xf32>
    %18 = tpu.matmul %15, %17, %cst_18 {dimension_numbers = #tpu.dot_dimension_numbers<[1], [0], [0], [1], [0, 0, 1, 1], [], []>} : vector<31x192xf32>, vector<192x496xf32>, vector<31x496xf32> -> vector<31x496xf32>
    %19 = arith.addf %12, %18 : vector<31x496xf32>
    %c2 = arith.constant 2 : index
    %c0_19 = arith.constant 0 : index
    %c0_20 = arith.constant 0 : index
    %20 = vector.load %arg3[%c2, %c0_19, %c0_20] : memref<3x31x64xf32, #tpu.memory_space<vmem>>, vector<1x31x64xf32>
    %21 = vector.shape_cast %20 : vector<1x31x64xf32> to vector<31x64xf32>
    %cst_21 = arith.constant dense<0.000000e+00> : vector<31x192xf32>
    %22 = tpu.matmul %21, %6, %cst_21 {dimension_numbers = #tpu.dot_dimension_numbers<[1], [0], [0], [1], [0, 0, 1, 1], [], []>} : vector<31x64xf32>, vector<64x192xf32>, vector<31x192xf32> -> vector<31x192xf32>
    %c2_22 = arith.constant 2 : index
    %c0_23 = arith.constant 0 : index
    %c0_24 = arith.constant 0 : index
    %23 = vector.load %arg4[%c2_22, %c0_23, %c0_24] : memref<3x192x496xf32, #tpu.memory_space<vmem>>, vector<1x192x496xf32>
    %24 = vector.shape_cast %23 : vector<1x192x496xf32> to vector<192x496xf32>
    %cst_25 = arith.constant dense<0.000000e+00> : vector<31x496xf32>
    %25 = tpu.matmul %22, %24, %cst_25 {dimension_numbers = #tpu.dot_dimension_numbers<[1], [0], [0], [1], [0, 0, 1, 1], [], []>} : vector<31x192xf32>, vector<192x496xf32>, vector<31x496xf32> -> vector<31x496xf32>
    %26 = arith.addf %19, %25 : vector<31x496xf32>
    %c0_26 = arith.constant 0 : index
    %c0_27 = arith.constant 0 : index
    %27 = vector.load %arg5[%c0_26, %c0_27] : memref<1x496xf32, #tpu.memory_space<vmem>>, vector<1x496xf32>
    %28 = vector.broadcast %27 : vector<1x496xf32> to vector<31x496xf32>
    %29 = arith.addf %26, %28 : vector<31x496xf32>
    %30 = vector.shape_cast %29 : vector<31x496xf32> to vector<1x31x496xf32>
    %cst_28 = arith.constant dense<0.000000e+00> : vector<1xf32>
    %31 = vector.multi_reduction <add>, %30, %cst_28 [1, 2] : vector<1x31x496xf32> to vector<1xf32>
    %32 = vector.shape_cast %31 : vector<1xf32> to vector<1x1x1xf32>
    %33 = vector.extract %32[0, 0, 0] : f32 from vector<1x1x1xf32>
    %cst_29 = arith.constant 1.537600e+04 : f32
    %34 = arith.divf %33, %cst_29 : f32
    %35 = vector.broadcast %34 : f32 to vector<31x496xf32>
    %36 = arith.subf %29, %35 : vector<31x496xf32>
    %37 = arith.mulf %36, %36 : vector<31x496xf32>
    %38 = vector.shape_cast %37 : vector<31x496xf32> to vector<1x31x496xf32>
    %cst_30 = arith.constant dense<0.000000e+00> : vector<1xf32>
    %39 = vector.multi_reduction <add>, %38, %cst_30 [1, 2] : vector<1x31x496xf32> to vector<1xf32>
    %40 = vector.shape_cast %39 : vector<1xf32> to vector<1x1x1xf32>
    %41 = vector.extract %40[0, 0, 0] : f32 from vector<1x1x1xf32>
    %cst_31 = arith.constant 1.537600e+04 : f32
    %42 = arith.divf %41, %cst_31 : f32
    %43 = vector.broadcast %34 : f32 to vector<31x496xf32>
    %44 = arith.subf %29, %43 : vector<31x496xf32>
    %cst_32 = arith.constant 9.99999974E-6 : f32
    %45 = arith.addf %42, %cst_32 : f32
    %46 = math.rsqrt %45 : f32
    %47 = vector.broadcast %46 : f32 to vector<31x496xf32>
    %48 = arith.mulf %44, %47 : vector<31x496xf32>
    %c0_33 = arith.constant 0 : index
    %c0_34 = arith.constant 0 : index
    %49 = vector.load %arg6[%c0_33, %c0_34] : memref<31x496xf32, #tpu.memory_space<vmem>>, vector<31x496xf32>
    %50 = arith.mulf %48, %49 : vector<31x496xf32>
    %c0_35 = arith.constant 0 : index
    %c0_36 = arith.constant 0 : index
    %51 = vector.load %arg7[%c0_35, %c0_36] : memref<31x496xf32, #tpu.memory_space<vmem>>, vector<31x496xf32>
    %52 = arith.addf %50, %51 : vector<31x496xf32>
    %cst_37 = arith.constant 0.000000e+00 : f32
    %53 = vector.broadcast %cst_37 : f32 to vector<31x496xf32>
    %54 = arith.maximumf %52, %53 : vector<31x496xf32>
    %c0_38 = arith.constant 0 : index
    %c0_39 = arith.constant 0 : index
    %c0_40 = arith.constant 0 : index
    %55 = vector.load %arg8[%c0_38, %c0_39, %c0_40] : memref<3x15x31xf32, #tpu.memory_space<vmem>>, vector<1x15x31xf32>
    %56 = vector.shape_cast %55 : vector<1x15x31xf32> to vector<15x31xf32>
    %cst_41 = arith.constant dense<0.000000e+00> : vector<15x496xf32>
    %57 = tpu.matmul %56, %54, %cst_41 {dimension_numbers = #tpu.dot_dimension_numbers<[1], [0], [0], [1], [0, 0, 1, 1], [], []>} : vector<15x31xf32>, vector<31x496xf32>, vector<15x496xf32> -> vector<15x496xf32>
    %c0_42 = arith.constant 0 : index
    %c0_43 = arith.constant 0 : index
    %c0_44 = arith.constant 0 : index
    %58 = vector.load %arg9[%c0_42, %c0_43, %c0_44] : memref<3x496x240xf32, #tpu.memory_space<vmem>>, vector<1x496x240xf32>
    %59 = vector.shape_cast %58 : vector<1x496x240xf32> to vector<496x240xf32>
    %cst_45 = arith.constant dense<0.000000e+00> : vector<15x240xf32>
    %60 = tpu.matmul %57, %59, %cst_45 {dimension_numbers = #tpu.dot_dimension_numbers<[1], [0], [0], [1], [0, 0, 1, 1], [], []>} : vector<15x496xf32>, vector<496x240xf32>, vector<15x240xf32> -> vector<15x240xf32>
    %c1_46 = arith.constant 1 : index
    %c0_47 = arith.constant 0 : index
    %c0_48 = arith.constant 0 : index
    %61 = vector.load %arg8[%c1_46, %c0_47, %c0_48] : memref<3x15x31xf32, #tpu.memory_space<vmem>>, vector<1x15x31xf32>
    %62 = vector.shape_cast %61 : vector<1x15x31xf32> to vector<15x31xf32>
    %cst_49 = arith.constant dense<0.000000e+00> : vector<15x496xf32>
    %63 = tpu.matmul %62, %54, %cst_49 {dimension_numbers = #tpu.dot_dimension_numbers<[1], [0], [0], [1], [0, 0, 1, 1], [], []>} : vector<15x31xf32>, vector<31x496xf32>, vector<15x496xf32> -> vector<15x496xf32>
    %c1_50 = arith.constant 1 : index
    %c0_51 = arith.constant 0 : index
    %c0_52 = arith.constant 0 : index
    %64 = vector.load %arg9[%c1_50, %c0_51, %c0_52] : memref<3x496x240xf32, #tpu.memory_space<vmem>>, vector<1x496x240xf32>
    %65 = vector.shape_cast %64 : vector<1x496x240xf32> to vector<496x240xf32>
    %cst_53 = arith.constant dense<0.000000e+00> : vector<15x240xf32>
    %66 = tpu.matmul %63, %65, %cst_53 {dimension_numbers = #tpu.dot_dimension_numbers<[1], [0], [0], [1], [0, 0, 1, 1], [], []>} : vector<15x496xf32>, vector<496x240xf32>, vector<15x240xf32> -> vector<15x240xf32>
    %67 = arith.addf %60, %66 : vector<15x240xf32>
    %c2_54 = arith.constant 2 : index
    %c0_55 = arith.constant 0 : index
    %c0_56 = arith.constant 0 : index
    %68 = vector.load %arg8[%c2_54, %c0_55, %c0_56] : memref<3x15x31xf32, #tpu.memory_space<vmem>>, vector<1x15x31xf32>
    %69 = vector.shape_cast %68 : vector<1x15x31xf32> to vector<15x31xf32>
    %cst_57 = arith.constant dense<0.000000e+00> : vector<15x496xf32>
    %70 = tpu.matmul %69, %54, %cst_57 {dimension_numbers = #tpu.dot_dimension_numbers<[1], [0], [0], [1], [0, 0, 1, 1], [], []>} : vector<15x31xf32>, vector<31x496xf32>, vector<15x496xf32> -> vector<15x496xf32>
    %c2_58 = arith.constant 2 : index
    %c0_59 = arith.constant 0 : index
    %c0_60 = arith.constant 0 : index
    %71 = vector.load %arg9[%c2_58, %c0_59, %c0_60] : memref<3x496x240xf32, #tpu.memory_space<vmem>>, vector<1x496x240xf32>
    %72 = vector.shape_cast %71 : vector<1x496x240xf32> to vector<496x240xf32>
    %cst_61 = arith.constant dense<0.000000e+00> : vector<15x240xf32>
    %73 = tpu.matmul %70, %72, %cst_61 {dimension_numbers = #tpu.dot_dimension_numbers<[1], [0], [0], [1], [0, 0, 1, 1], [], []>} : vector<15x496xf32>, vector<496x240xf32>, vector<15x240xf32> -> vector<15x240xf32>
    %74 = arith.addf %67, %73 : vector<15x240xf32>
    %c0_62 = arith.constant 0 : index
    %c0_63 = arith.constant 0 : index
    %75 = vector.load %arg10[%c0_62, %c0_63] : memref<1x240xf32, #tpu.memory_space<vmem>>, vector<1x240xf32>
    %76 = vector.broadcast %75 : vector<1x240xf32> to vector<15x240xf32>
    %77 = arith.addf %74, %76 : vector<15x240xf32>
    %78 = vector.shape_cast %77 : vector<15x240xf32> to vector<1x15x240xf32>
    %cst_64 = arith.constant dense<0.000000e+00> : vector<1xf32>
    %79 = vector.multi_reduction <add>, %78, %cst_64 [1, 2] : vector<1x15x240xf32> to vector<1xf32>
    %80 = vector.shape_cast %79 : vector<1xf32> to vector<1x1x1xf32>
    %81 = vector.extract %80[0, 0, 0] : f32 from vector<1x1x1xf32>
    %cst_65 = arith.constant 3.600000e+03 : f32
    %82 = arith.divf %81, %cst_65 : f32
    %83 = vector.broadcast %82 : f32 to vector<15x240xf32>
    %84 = arith.subf %77, %83 : vector<15x240xf32>
    %85 = arith.mulf %84, %84 : vector<15x240xf32>
    %86 = vector.shape_cast %85 : vector<15x240xf32> to vector<1x15x240xf32>
    %cst_66 = arith.constant dense<0.000000e+00> : vector<1xf32>
    %87 = vector.multi_reduction <add>, %86, %cst_66 [1, 2] : vector<1x15x240xf32> to vector<1xf32>
    %88 = vector.shape_cast %87 : vector<1xf32> to vector<1x1x1xf32>
    %89 = vector.extract %88[0, 0, 0] : f32 from vector<1x1x1xf32>
    %cst_67 = arith.constant 3.600000e+03 : f32
    %90 = arith.divf %89, %cst_67 : f32
    %91 = vector.broadcast %82 : f32 to vector<15x240xf32>
    %92 = arith.subf %77, %91 : vector<15x240xf32>
    %cst_68 = arith.constant 9.99999974E-6 : f32
    %93 = arith.addf %90, %cst_68 : f32
    %94 = math.rsqrt %93 : f32
    %95 = vector.broadcast %94 : f32 to vector<15x240xf32>
    %96 = arith.mulf %92, %95 : vector<15x240xf32>
    %c0_69 = arith.constant 0 : index
    %c0_70 = arith.constant 0 : index
    %97 = vector.load %arg11[%c0_69, %c0_70] : memref<15x240xf32, #tpu.memory_space<vmem>>, vector<15x240xf32>
    %98 = arith.mulf %96, %97 : vector<15x240xf32>
    %c0_71 = arith.constant 0 : index
    %c0_72 = arith.constant 0 : index
    %99 = vector.load %arg12[%c0_71, %c0_72] : memref<15x240xf32, #tpu.memory_space<vmem>>, vector<15x240xf32>
    %100 = arith.addf %98, %99 : vector<15x240xf32>
    %cst_73 = arith.constant 0.000000e+00 : f32
    %101 = vector.broadcast %cst_73 : f32 to vector<15x240xf32>
    %102 = arith.maximumf %100, %101 : vector<15x240xf32>
    %c0_74 = arith.constant 0 : index
    %c0_75 = arith.constant 0 : index
    %c0_76 = arith.constant 0 : index
    %103 = vector.load %arg13[%c0_74, %c0_75, %c0_76] : memref<3x7x15xf32, #tpu.memory_space<vmem>>, vector<1x7x15xf32>
    %104 = vector.shape_cast %103 : vector<1x7x15xf32> to vector<7x15xf32>
    %cst_77 = arith.constant dense<0.000000e+00> : vector<7x240xf32>
    %105 = tpu.matmul %104, %102, %cst_77 {dimension_numbers = #tpu.dot_dimension_numbers<[1], [0], [0], [1], [0, 0, 1, 1], [], []>} : vector<7x15xf32>, vector<15x240xf32>, vector<7x240xf32> -> vector<7x240xf32>
    %c0_78 = arith.constant 0 : index
    %c0_79 = arith.constant 0 : index
    %c0_80 = arith.constant 0 : index
    %106 = vector.load %arg14[%c0_78, %c0_79, %c0_80] : memref<3x240x112xf32, #tpu.memory_space<vmem>>, vector<1x240x112xf32>
    %107 = vector.shape_cast %106 : vector<1x240x112xf32> to vector<240x112xf32>
    %cst_81 = arith.constant dense<0.000000e+00> : vector<7x112xf32>
    %108 = tpu.matmul %105, %107, %cst_81 {dimension_numbers = #tpu.dot_dimension_numbers<[1], [0], [0], [1], [0, 0, 1, 1], [], []>} : vector<7x240xf32>, vector<240x112xf32>, vector<7x112xf32> -> vector<7x112xf32>
    %c1_82 = arith.constant 1 : index
    %c0_83 = arith.constant 0 : index
    %c0_84 = arith.constant 0 : index
    %109 = vector.load %arg13[%c1_82, %c0_83, %c0_84] : memref<3x7x15xf32, #tpu.memory_space<vmem>>, vector<1x7x15xf32>
    %110 = vector.shape_cast %109 : vector<1x7x15xf32> to vector<7x15xf32>
    %cst_85 = arith.constant dense<0.000000e+00> : vector<7x240xf32>
    %111 = tpu.matmul %110, %102, %cst_85 {dimension_numbers = #tpu.dot_dimension_numbers<[1], [0], [0], [1], [0, 0, 1, 1], [], []>} : vector<7x15xf32>, vector<15x240xf32>, vector<7x240xf32> -> vector<7x240xf32>
    %c1_86 = arith.constant 1 : index
    %c0_87 = arith.constant 0 : index
    %c0_88 = arith.constant 0 : index
    %112 = vector.load %arg14[%c1_86, %c0_87, %c0_88] : memref<3x240x112xf32, #tpu.memory_space<vmem>>, vector<1x240x112xf32>
    %113 = vector.shape_cast %112 : vector<1x240x112xf32> to vector<240x112xf32>
    %cst_89 = arith.constant dense<0.000000e+00> : vector<7x112xf32>
    %114 = tpu.matmul %111, %113, %cst_89 {dimension_numbers = #tpu.dot_dimension_numbers<[1], [0], [0], [1], [0, 0, 1, 1], [], []>} : vector<7x240xf32>, vector<240x112xf32>, vector<7x112xf32> -> vector<7x112xf32>
    %115 = arith.addf %108, %114 : vector<7x112xf32>
    %c2_90 = arith.constant 2 : index
    %c0_91 = arith.constant 0 : index
    %c0_92 = arith.constant 0 : index
    %116 = vector.load %arg13[%c2_90, %c0_91, %c0_92] : memref<3x7x15xf32, #tpu.memory_space<vmem>>, vector<1x7x15xf32>
    %117 = vector.shape_cast %116 : vector<1x7x15xf32> to vector<7x15xf32>
    %cst_93 = arith.constant dense<0.000000e+00> : vector<7x240xf32>
    %118 = tpu.matmul %117, %102, %cst_93 {dimension_numbers = #tpu.dot_dimension_numbers<[1], [0], [0], [1], [0, 0, 1, 1], [], []>} : vector<7x15xf32>, vector<15x240xf32>, vector<7x240xf32> -> vector<7x240xf32>
    %c2_94 = arith.constant 2 : index
    %c0_95 = arith.constant 0 : index
    %c0_96 = arith.constant 0 : index
    %119 = vector.load %arg14[%c2_94, %c0_95, %c0_96] : memref<3x240x112xf32, #tpu.memory_space<vmem>>, vector<1x240x112xf32>
    %120 = vector.shape_cast %119 : vector<1x240x112xf32> to vector<240x112xf32>
    %cst_97 = arith.constant dense<0.000000e+00> : vector<7x112xf32>
    %121 = tpu.matmul %118, %120, %cst_97 {dimension_numbers = #tpu.dot_dimension_numbers<[1], [0], [0], [1], [0, 0, 1, 1], [], []>} : vector<7x240xf32>, vector<240x112xf32>, vector<7x112xf32> -> vector<7x112xf32>
    %122 = arith.addf %115, %121 : vector<7x112xf32>
    %c0_98 = arith.constant 0 : index
    %c0_99 = arith.constant 0 : index
    %123 = vector.load %arg15[%c0_98, %c0_99] : memref<1x112xf32, #tpu.memory_space<vmem>>, vector<1x112xf32>
    %124 = vector.broadcast %123 : vector<1x112xf32> to vector<7x112xf32>
    %125 = arith.addf %122, %124 : vector<7x112xf32>
    %126 = vector.shape_cast %125 : vector<7x112xf32> to vector<1x7x112xf32>
    %cst_100 = arith.constant dense<0.000000e+00> : vector<1xf32>
    %127 = vector.multi_reduction <add>, %126, %cst_100 [1, 2] : vector<1x7x112xf32> to vector<1xf32>
    %128 = vector.shape_cast %127 : vector<1xf32> to vector<1x1x1xf32>
    %129 = vector.extract %128[0, 0, 0] : f32 from vector<1x1x1xf32>
    %cst_101 = arith.constant 7.840000e+02 : f32
    %130 = arith.divf %129, %cst_101 : f32
    %131 = vector.broadcast %130 : f32 to vector<7x112xf32>
    %132 = arith.subf %125, %131 : vector<7x112xf32>
    %133 = arith.mulf %132, %132 : vector<7x112xf32>
    %134 = vector.shape_cast %133 : vector<7x112xf32> to vector<1x7x112xf32>
    %cst_102 = arith.constant dense<0.000000e+00> : vector<1xf32>
    %135 = vector.multi_reduction <add>, %134, %cst_102 [1, 2] : vector<1x7x112xf32> to vector<1xf32>
    %136 = vector.shape_cast %135 : vector<1xf32> to vector<1x1x1xf32>
    %137 = vector.extract %136[0, 0, 0] : f32 from vector<1x1x1xf32>
    %cst_103 = arith.constant 7.840000e+02 : f32
    %138 = arith.divf %137, %cst_103 : f32
    %139 = vector.broadcast %130 : f32 to vector<7x112xf32>
    %140 = arith.subf %125, %139 : vector<7x112xf32>
    %cst_104 = arith.constant 9.99999974E-6 : f32
    %141 = arith.addf %138, %cst_104 : f32
    %142 = math.rsqrt %141 : f32
    %143 = vector.broadcast %142 : f32 to vector<7x112xf32>
    %144 = arith.mulf %140, %143 : vector<7x112xf32>
    %c0_105 = arith.constant 0 : index
    %c0_106 = arith.constant 0 : index
    %145 = vector.load %arg16[%c0_105, %c0_106] : memref<7x112xf32, #tpu.memory_space<vmem>>, vector<7x112xf32>
    %146 = arith.mulf %144, %145 : vector<7x112xf32>
    %c0_107 = arith.constant 0 : index
    %c0_108 = arith.constant 0 : index
    %147 = vector.load %arg17[%c0_107, %c0_108] : memref<7x112xf32, #tpu.memory_space<vmem>>, vector<7x112xf32>
    %148 = arith.addf %146, %147 : vector<7x112xf32>
    %cst_109 = arith.constant 0.000000e+00 : f32
    %149 = vector.broadcast %cst_109 : f32 to vector<7x112xf32>
    %150 = arith.maximumf %148, %149 : vector<7x112xf32>
    %c0_110 = arith.constant 0 : index
    %c0_111 = arith.constant 0 : index
    %c0_112 = arith.constant 0 : index
    %151 = vector.load %arg18[%c0_110, %c0_111, %c0_112] : memref<3x3x7xf32, #tpu.memory_space<vmem>>, vector<1x3x7xf32>
    %152 = vector.shape_cast %151 : vector<1x3x7xf32> to vector<3x7xf32>
    %cst_113 = arith.constant dense<0.000000e+00> : vector<3x112xf32>
    %153 = tpu.matmul %152, %150, %cst_113 {dimension_numbers = #tpu.dot_dimension_numbers<[1], [0], [0], [1], [0, 0, 1, 1], [], []>} : vector<3x7xf32>, vector<7x112xf32>, vector<3x112xf32> -> vector<3x112xf32>
    %c0_114 = arith.constant 0 : index
    %c0_115 = arith.constant 0 : index
    %c0_116 = arith.constant 0 : index
    %154 = vector.load %arg19[%c0_114, %c0_115, %c0_116] : memref<3x112x48xf32, #tpu.memory_space<vmem>>, vector<1x112x48xf32>
    %155 = vector.shape_cast %154 : vector<1x112x48xf32> to vector<112x48xf32>
    %cst_117 = arith.constant dense<0.000000e+00> : vector<3x48xf32>
    %156 = tpu.matmul %153, %155, %cst_117 {dimension_numbers = #tpu.dot_dimension_numbers<[1], [0], [0], [1], [0, 0, 1, 1], [], []>} : vector<3x112xf32>, vector<112x48xf32>, vector<3x48xf32> -> vector<3x48xf32>
    %c1_118 = arith.constant 1 : index
    %c0_119 = arith.constant 0 : index
    %c0_120 = arith.constant 0 : index
    %157 = vector.load %arg18[%c1_118, %c0_119, %c0_120] : memref<3x3x7xf32, #tpu.memory_space<vmem>>, vector<1x3x7xf32>
    %158 = vector.shape_cast %157 : vector<1x3x7xf32> to vector<3x7xf32>
    %cst_121 = arith.constant dense<0.000000e+00> : vector<3x112xf32>
    %159 = tpu.matmul %158, %150, %cst_121 {dimension_numbers = #tpu.dot_dimension_numbers<[1], [0], [0], [1], [0, 0, 1, 1], [], []>} : vector<3x7xf32>, vector<7x112xf32>, vector<3x112xf32> -> vector<3x112xf32>
    %c1_122 = arith.constant 1 : index
    %c0_123 = arith.constant 0 : index
    %c0_124 = arith.constant 0 : index
    %160 = vector.load %arg19[%c1_122, %c0_123, %c0_124] : memref<3x112x48xf32, #tpu.memory_space<vmem>>, vector<1x112x48xf32>
    %161 = vector.shape_cast %160 : vector<1x112x48xf32> to vector<112x48xf32>
    %cst_125 = arith.constant dense<0.000000e+00> : vector<3x48xf32>
    %162 = tpu.matmul %159, %161, %cst_125 {dimension_numbers = #tpu.dot_dimension_numbers<[1], [0], [0], [1], [0, 0, 1, 1], [], []>} : vector<3x112xf32>, vector<112x48xf32>, vector<3x48xf32> -> vector<3x48xf32>
    %163 = arith.addf %156, %162 : vector<3x48xf32>
    %c2_126 = arith.constant 2 : index
    %c0_127 = arith.constant 0 : index
    %c0_128 = arith.constant 0 : index
    %164 = vector.load %arg18[%c2_126, %c0_127, %c0_128] : memref<3x3x7xf32, #tpu.memory_space<vmem>>, vector<1x3x7xf32>
    %165 = vector.shape_cast %164 : vector<1x3x7xf32> to vector<3x7xf32>
    %cst_129 = arith.constant dense<0.000000e+00> : vector<3x112xf32>
    %166 = tpu.matmul %165, %150, %cst_129 {dimension_numbers = #tpu.dot_dimension_numbers<[1], [0], [0], [1], [0, 0, 1, 1], [], []>} : vector<3x7xf32>, vector<7x112xf32>, vector<3x112xf32> -> vector<3x112xf32>
    %c2_130 = arith.constant 2 : index
    %c0_131 = arith.constant 0 : index
    %c0_132 = arith.constant 0 : index
    %167 = vector.load %arg19[%c2_130, %c0_131, %c0_132] : memref<3x112x48xf32, #tpu.memory_space<vmem>>, vector<1x112x48xf32>
    %168 = vector.shape_cast %167 : vector<1x112x48xf32> to vector<112x48xf32>
    %cst_133 = arith.constant dense<0.000000e+00> : vector<3x48xf32>
    %169 = tpu.matmul %166, %168, %cst_133 {dimension_numbers = #tpu.dot_dimension_numbers<[1], [0], [0], [1], [0, 0, 1, 1], [], []>} : vector<3x112xf32>, vector<112x48xf32>, vector<3x48xf32> -> vector<3x48xf32>
    %170 = arith.addf %163, %169 : vector<3x48xf32>
    %c0_134 = arith.constant 0 : index
    %c0_135 = arith.constant 0 : index
    %171 = vector.load %arg20[%c0_134, %c0_135] : memref<1x48xf32, #tpu.memory_space<vmem>>, vector<1x48xf32>
    %172 = vector.broadcast %171 : vector<1x48xf32> to vector<3x48xf32>
    %173 = arith.addf %170, %172 : vector<3x48xf32>
    %174 = vector.shape_cast %173 : vector<3x48xf32> to vector<1x3x48xf32>
    %cst_136 = arith.constant dense<0.000000e+00> : vector<1xf32>
    %175 = vector.multi_reduction <add>, %174, %cst_136 [1, 2] : vector<1x3x48xf32> to vector<1xf32>
    %176 = vector.shape_cast %175 : vector<1xf32> to vector<1x1x1xf32>
    %177 = vector.extract %176[0, 0, 0] : f32 from vector<1x1x1xf32>
    %cst_137 = arith.constant 1.440000e+02 : f32
    %178 = arith.divf %177, %cst_137 : f32
    %179 = vector.broadcast %178 : f32 to vector<3x48xf32>
    %180 = arith.subf %173, %179 : vector<3x48xf32>
    %181 = arith.mulf %180, %180 : vector<3x48xf32>
    %182 = vector.shape_cast %181 : vector<3x48xf32> to vector<1x3x48xf32>
    %cst_138 = arith.constant dense<0.000000e+00> : vector<1xf32>
    %183 = vector.multi_reduction <add>, %182, %cst_138 [1, 2] : vector<1x3x48xf32> to vector<1xf32>
    %184 = vector.shape_cast %183 : vector<1xf32> to vector<1x1x1xf32>
    %185 = vector.extract %184[0, 0, 0] : f32 from vector<1x1x1xf32>
    %cst_139 = arith.constant 1.440000e+02 : f32
    %186 = arith.divf %185, %cst_139 : f32
    %187 = vector.broadcast %178 : f32 to vector<3x48xf32>
    %188 = arith.subf %173, %187 : vector<3x48xf32>
    %cst_140 = arith.constant 9.99999974E-6 : f32
    %189 = arith.addf %186, %cst_140 : f32
    %190 = math.rsqrt %189 : f32
    %191 = vector.broadcast %190 : f32 to vector<3x48xf32>
    %192 = arith.mulf %188, %191 : vector<3x48xf32>
    %c0_141 = arith.constant 0 : index
    %c0_142 = arith.constant 0 : index
    %193 = vector.load %arg21[%c0_141, %c0_142] : memref<3x48xf32, #tpu.memory_space<vmem>>, vector<3x48xf32>
    %194 = arith.mulf %192, %193 : vector<3x48xf32>
    %c0_143 = arith.constant 0 : index
    %c0_144 = arith.constant 0 : index
    %195 = vector.load %arg22[%c0_143, %c0_144] : memref<3x48xf32, #tpu.memory_space<vmem>>, vector<3x48xf32>
    %196 = arith.addf %194, %195 : vector<3x48xf32>
    %cst_145 = arith.constant 0.000000e+00 : f32
    %197 = vector.broadcast %cst_145 : f32 to vector<3x48xf32>
    %198 = arith.maximumf %196, %197 : vector<3x48xf32>
    %c0_146 = arith.constant 0 : index
    %c0_147 = arith.constant 0 : index
    %199 = vector.load %arg24[%c0_146, %c0_147] : memref<1x32xf32, #tpu.memory_space<vmem>>, vector<1x32xf32>
    %200 = vector.extract_strided_slice %198 {offsets = [0, 0], sizes = [1, 48], strides = [1, 1]} : vector<3x48xf32> to vector<1x48xf32>
    %c0_148 = arith.constant 0 : index
    %c0_149 = arith.constant 0 : index
    %c0_150 = arith.constant 0 : index
    %201 = vector.load %arg23[%c0_148, %c0_149, %c0_150] : memref<3x48x32xf32, #tpu.memory_space<vmem>>, vector<1x48x32xf32>
    %202 = vector.shape_cast %201 : vector<1x48x32xf32> to vector<48x32xf32>
    %cst_151 = arith.constant dense<0.000000e+00> : vector<1x32xf32>
    %203 = tpu.matmul %200, %202, %cst_151 {dimension_numbers = #tpu.dot_dimension_numbers<[1], [0], [0], [1], [0, 0, 1, 1], [], []>} : vector<1x48xf32>, vector<48x32xf32>, vector<1x32xf32> -> vector<1x32xf32>
    %204 = arith.addf %199, %203 : vector<1x32xf32>
    %205 = vector.extract_strided_slice %198 {offsets = [1, 0], sizes = [1, 48], strides = [1, 1]} : vector<3x48xf32> to vector<1x48xf32>
    %c1_152 = arith.constant 1 : index
    %c0_153 = arith.constant 0 : index
    %c0_154 = arith.constant 0 : index
    %206 = vector.load %arg23[%c1_152, %c0_153, %c0_154] : memref<3x48x32xf32, #tpu.memory_space<vmem>>, vector<1x48x32xf32>
    %207 = vector.shape_cast %206 : vector<1x48x32xf32> to vector<48x32xf32>
    %cst_155 = arith.constant dense<0.000000e+00> : vector<1x32xf32>
    %208 = tpu.matmul %205, %207, %cst_155 {dimension_numbers = #tpu.dot_dimension_numbers<[1], [0], [0], [1], [0, 0, 1, 1], [], []>} : vector<1x48xf32>, vector<48x32xf32>, vector<1x32xf32> -> vector<1x32xf32>
    %209 = arith.addf %204, %208 : vector<1x32xf32>
    %210 = vector.extract_strided_slice %198 {offsets = [2, 0], sizes = [1, 48], strides = [1, 1]} : vector<3x48xf32> to vector<1x48xf32>
    %c2_156 = arith.constant 2 : index
    %c0_157 = arith.constant 0 : index
    %c0_158 = arith.constant 0 : index
    %211 = vector.load %arg23[%c2_156, %c0_157, %c0_158] : memref<3x48x32xf32, #tpu.memory_space<vmem>>, vector<1x48x32xf32>
    %212 = vector.shape_cast %211 : vector<1x48x32xf32> to vector<48x32xf32>
    %cst_159 = arith.constant dense<0.000000e+00> : vector<1x32xf32>
    %213 = tpu.matmul %210, %212, %cst_159 {dimension_numbers = #tpu.dot_dimension_numbers<[1], [0], [0], [1], [0, 0, 1, 1], [], []>} : vector<1x48xf32>, vector<48x32xf32>, vector<1x32xf32> -> vector<1x32xf32>
    %214 = arith.addf %209, %213 : vector<1x32xf32>
    %215 = vector.shape_cast %214 : vector<1x32xf32> to vector<1x1x32xf32>
    %cst_160 = arith.constant dense<0.000000e+00> : vector<1xf32>
    %216 = vector.multi_reduction <add>, %215, %cst_160 [1, 2] : vector<1x1x32xf32> to vector<1xf32>
    %217 = vector.shape_cast %216 : vector<1xf32> to vector<1x1x1xf32>
    %218 = vector.extract %217[0, 0, 0] : f32 from vector<1x1x1xf32>
    %cst_161 = arith.constant 3.200000e+01 : f32
    %219 = arith.divf %218, %cst_161 : f32
    %220 = vector.broadcast %219 : f32 to vector<1x32xf32>
    %221 = arith.subf %214, %220 : vector<1x32xf32>
    %222 = arith.mulf %221, %221 : vector<1x32xf32>
    %223 = vector.shape_cast %222 : vector<1x32xf32> to vector<1x1x32xf32>
    %cst_162 = arith.constant dense<0.000000e+00> : vector<1xf32>
    %224 = vector.multi_reduction <add>, %223, %cst_162 [1, 2] : vector<1x1x32xf32> to vector<1xf32>
    %225 = vector.shape_cast %224 : vector<1xf32> to vector<1x1x1xf32>
    %226 = vector.extract %225[0, 0, 0] : f32 from vector<1x1x1xf32>
    %cst_163 = arith.constant 3.200000e+01 : f32
    %227 = arith.divf %226, %cst_163 : f32
    %228 = vector.broadcast %219 : f32 to vector<1x32xf32>
    %229 = arith.subf %214, %228 : vector<1x32xf32>
    %cst_164 = arith.constant 9.99999974E-6 : f32
    %230 = arith.addf %227, %cst_164 : f32
    %231 = math.rsqrt %230 : f32
    %232 = vector.broadcast %231 : f32 to vector<1x32xf32>
    %233 = arith.mulf %229, %232 : vector<1x32xf32>
    %c0_165 = arith.constant 0 : index
    %c0_166 = arith.constant 0 : index
    %234 = vector.load %arg25[%c0_165, %c0_166] : memref<1x32xf32, #tpu.memory_space<vmem>>, vector<1x32xf32>
    %235 = arith.mulf %233, %234 : vector<1x32xf32>
    %c0_167 = arith.constant 0 : index
    %c0_168 = arith.constant 0 : index
    %236 = vector.load %arg26[%c0_167, %c0_168] : memref<1x32xf32, #tpu.memory_space<vmem>>, vector<1x32xf32>
    %237 = arith.addf %235, %236 : vector<1x32xf32>
    %238 = math.tanh %237 : vector<1x32xf32>
    %c0_169 = arith.constant 0 : index
    %c0_170 = arith.constant 0 : index
    %c0_171 = arith.constant 0 : index
    %239 = vector.load %arg27[%c0_169, %c0_170, %c0_171] : memref<1x1x32xf32, #tpu.memory_space<vmem>>, vector<1x1x32xf32>
    %240 = vector.shape_cast %239 : vector<1x1x32xf32> to vector<1x32xf32>
    %241 = vector.shape_cast %238 : vector<1x32xf32> to vector<1x1x32xf32>
    tpu.vector_store %arg27[%c0_169, %c0_170, %c0_171], %241 {strides = array<i32>} : memref<1x1x32xf32, #tpu.memory_space<vmem>>, vector<1x1x32xf32>,
    return
  }
  func.func @transform_0(%arg0: i32, %arg1: memref<1xi32, #tpu.memory_space<smem>>) -> (i32, i32, i32) {
    %c0_i32 = arith.constant 0 : i32
    %c0_i32_0 = arith.constant 0 : i32
    %c0_i32_1 = arith.constant 0 : i32
    return %arg0, %c0_i32, %c0_i32_0 : i32, i32, i32
  }
  func.func @transform_1(%arg0: i32, %arg1: memref<1xi32, #tpu.memory_space<smem>>) -> (i32, i32, i32) {
    %c0_i32 = arith.constant 0 : i32
    %c0_i32_0 = arith.constant 0 : i32
    %c0_i32_1 = arith.constant 0 : i32
    %c0_i32_2 = arith.constant 0 : i32
    return %c0_i32, %c0_i32_0, %c0_i32_1 : i32, i32, i32
  }
  func.func @transform_2(%arg0: i32, %arg1: memref<1xi32, #tpu.memory_space<smem>>) -> (i32, i32, i32) {
    %c0_i32 = arith.constant 0 : i32
    %c0_i32_0 = arith.constant 0 : i32
    %c0_i32_1 = arith.constant 0 : i32
    %c0_i32_2 = arith.constant 0 : i32
    return %c0_i32, %c0_i32_0, %c0_i32_1 : i32, i32, i32
  }
  func.func @transform_3(%arg0: i32, %arg1: memref<1xi32, #tpu.memory_space<smem>>) -> (i32, i32) {
    %c0_i32 = arith.constant 0 : i32
    %c0_i32_0 = arith.constant 0 : i32
    %c0_i32_1 = arith.constant 0 : i32
    return %c0_i32, %c0_i32_0 : i32, i32
  }
  func.func @transform_4(%arg0: i32, %arg1: memref<1xi32, #tpu.memory_space<smem>>) -> (i32, i32) {
    %c0_i32 = arith.constant 0 : i32
    %c0_i32_0 = arith.constant 0 : i32
    %c0_i32_1 = arith.constant 0 : i32
    return %c0_i32, %c0_i32_0 : i32, i32
  }
  func.func @transform_5(%arg0: i32, %arg1: memref<1xi32, #tpu.memory_space<smem>>) -> (i32, i32) {
    %c0_i32 = arith.constant 0 : i32
    %c0_i32_0 = arith.constant 0 : i32
    %c0_i32_1 = arith.constant 0 : i32
    return %c0_i32, %c0_i32_0 : i32, i32
  }
  func.func @transform_6(%arg0: i32, %arg1: memref<1xi32, #tpu.memory_space<smem>>) -> (i32, i32, i32) {
    %c0_i32 = arith.constant 0 : i32
    %c0_i32_0 = arith.constant 0 : i32
    %c0_i32_1 = arith.constant 0 : i32
    %c0_i32_2 = arith.constant 0 : i32
    return %c0_i32, %c0_i32_0, %c0_i32_1 : i32, i32, i32
  }
  func.func @transform_7(%arg0: i32, %arg1: memref<1xi32, #tpu.memory_space<smem>>) -> (i32, i32, i32) {
    %c0_i32 = arith.constant 0 : i32
    %c0_i32_0 = arith.constant 0 : i32
    %c0_i32_1 = arith.constant 0 : i32
    %c0_i32_2 = arith.constant 0 : i32
    return %c0_i32, %c0_i32_0, %c0_i32_1 : i32, i32, i32
  }
  func.func @transform_8(%arg0: i32, %arg1: memref<1xi32, #tpu.memory_space<smem>>) -> (i32, i32) {
    %c0_i32 = arith.constant 0 : i32
    %c0_i32_0 = arith.constant 0 : i32
    %c0_i32_1 = arith.constant 0 : i32
    return %c0_i32, %c0_i32_0 : i32, i32
  }
  func.func @transform_9(%arg0: i32, %arg1: memref<1xi32, #tpu.memory_space<smem>>) -> (i32, i32) {
    %c0_i32 = arith.constant 0 : i32
    %c0_i32_0 = arith.constant 0 : i32
    %c0_i32_1 = arith.constant 0 : i32
    return %c0_i32, %c0_i32_0 : i32, i32
  }
  func.func @transform_10(%arg0: i32, %arg1: memref<1xi32, #tpu.memory_space<smem>>) -> (i32, i32) {
    %c0_i32 = arith.constant 0 : i32
    %c0_i32_0 = arith.constant 0 : i32
    %c0_i32_1 = arith.constant 0 : i32
    return %c0_i32, %c0_i32_0 : i32, i32
  }
  func.func @transform_11(%arg0: i32, %arg1: memref<1xi32, #tpu.memory_space<smem>>) -> (i32, i32, i32) {
    %c0_i32 = arith.constant 0 : i32
    %c0_i32_0 = arith.constant 0 : i32
    %c0_i32_1 = arith.constant 0 : i32
    %c0_i32_2 = arith.constant 0 : i32
    return %c0_i32, %c0_i32_0, %c0_i32_1 : i32, i32, i32
  }
  func.func @transform_12(%arg0: i32, %arg1: memref<1xi32, #tpu.memory_space<smem>>) -> (i32, i32, i32) {
    %c0_i32 = arith.constant 0 : i32
    %c0_i32_0 = arith.constant 0 : i32
    %c0_i32_1 = arith.constant 0 : i32
    %c0_i32_2 = arith.constant 0 : i32
    return %c0_i32, %c0_i32_0, %c0_i32_1 : i32, i32, i32
  }
  func.func @transform_13(%arg0: i32, %arg1: memref<1xi32, #tpu.memory_space<smem>>) -> (i32, i32) {
    %c0_i32 = arith.constant 0 : i32
    %c0_i32_0 = arith.constant 0 : i32
    %c0_i32_1 = arith.constant 0 : i32
    return %c0_i32, %c0_i32_0 : i32, i32
  }
  func.func @transform_14(%arg0: i32, %arg1: memref<1xi32, #tpu.memory_space<smem>>) -> (i32, i32) {
    %c0_i32 = arith.constant 0 : i32
    %c0_i32_0 = arith.constant 0 : i32
    %c0_i32_1 = arith.constant 0 : i32
    return %c0_i32, %c0_i32_0 : i32, i32
  }
  func.func @transform_15(%arg0: i32, %arg1: memref<1xi32, #tpu.memory_space<smem>>) -> (i32, i32) {
    %c0_i32 = arith.constant 0 : i32
    %c0_i32_0 = arith.constant 0 : i32
    %c0_i32_1 = arith.constant 0 : i32
    return %c0_i32, %c0_i32_0 : i32, i32
  }
  func.func @transform_16(%arg0: i32, %arg1: memref<1xi32, #tpu.memory_space<smem>>) -> (i32, i32, i32) {
    %c0_i32 = arith.constant 0 : i32
    %c0_i32_0 = arith.constant 0 : i32
    %c0_i32_1 = arith.constant 0 : i32
    %c0_i32_2 = arith.constant 0 : i32
    return %c0_i32, %c0_i32_0, %c0_i32_1 : i32, i32, i32
  }
  func.func @transform_17(%arg0: i32, %arg1: memref<1xi32, #tpu.memory_space<smem>>) -> (i32, i32, i32) {
    %c0_i32 = arith.constant 0 : i32
    %c0_i32_0 = arith.constant 0 : i32
    %c0_i32_1 = arith.constant 0 : i32
    %c0_i32_2 = arith.constant 0 : i32
    return %c0_i32, %c0_i32_0, %c0_i32_1 : i32, i32, i32
  }
  func.func @transform_18(%arg0: i32, %arg1: memref<1xi32, #tpu.memory_space<smem>>) -> (i32, i32) {
    %c0_i32 = arith.constant 0 : i32
    %c0_i32_0 = arith.constant 0 : i32
    %c0_i32_1 = arith.constant 0 : i32
    return %c0_i32, %c0_i32_0 : i32, i32
  }
  func.func @transform_19(%arg0: i32, %arg1: memref<1xi32, #tpu.memory_space<smem>>) -> (i32, i32) {
    %c0_i32 = arith.constant 0 : i32
    %c0_i32_0 = arith.constant 0 : i32
    %c0_i32_1 = arith.constant 0 : i32
    return %c0_i32, %c0_i32_0 : i32, i32
  }
  func.func @transform_20(%arg0: i32, %arg1: memref<1xi32, #tpu.memory_space<smem>>) -> (i32, i32) {
    %c0_i32 = arith.constant 0 : i32
    %c0_i32_0 = arith.constant 0 : i32
    %c0_i32_1 = arith.constant 0 : i32
    return %c0_i32, %c0_i32_0 : i32, i32
  }
  func.func @transform_21(%arg0: i32, %arg1: memref<1xi32, #tpu.memory_space<smem>>) -> (i32, i32, i32) {
    %c0_i32 = arith.constant 0 : i32
    %c0_i32_0 = arith.constant 0 : i32
    %c0_i32_1 = arith.constant 0 : i32
    %c0_i32_2 = arith.constant 0 : i32
    return %c0_i32, %c0_i32_0, %c0_i32_1 : i32, i32, i32
  }
  func.func @transform_22(%arg0: i32, %arg1: memref<1xi32, #tpu.memory_space<smem>>) -> (i32, i32) {
    %c0_i32 = arith.constant 0 : i32
    %c0_i32_0 = arith.constant 0 : i32
    %c0_i32_1 = arith.constant 0 : i32
    return %c0_i32, %c0_i32_0 : i32, i32
  }
  func.func @transform_23(%arg0: i32, %arg1: memref<1xi32, #tpu.memory_space<smem>>) -> (i32, i32) {
    %c0_i32 = arith.constant 0 : i32
    %c0_i32_0 = arith.constant 0 : i32
    %c0_i32_1 = arith.constant 0 : i32
    return %c0_i32, %c0_i32_0 : i32, i32
  }
  func.func @transform_24(%arg0: i32, %arg1: memref<1xi32, #tpu.memory_space<smem>>) -> (i32, i32) {
    %c0_i32 = arith.constant 0 : i32
    %c0_i32_0 = arith.constant 0 : i32
    %c0_i32_1 = arith.constant 0 : i32
    return %c0_i32, %c0_i32_0 : i32, i32
  }
  func.func @transform_25(%arg0: i32, %arg1: memref<1xi32, #tpu.memory_space<smem>>) -> (i32, i32, i32) {
    %c0_i32 = arith.constant 0 : i32
    %c0_i32_0 = arith.constant 0 : i32
    %c0_i32_1 = arith.constant 0 : i32
    return %arg0, %c0_i32, %c0_i32_0 : i32, i32, i32
  }
}

</mosaic_0001>

<llo_original>
// kernel: pixel_encoder_forward.1
$region0: #{pixel_encoder_forward.1}
  #allocation0 [shape = 'u32[]', space=smem, size = 0x4, offset = 0x4, fixed_abs, tag = 'smem constant byte address 0x4 - core index']
  #allocation1 [shape = 'u32[144,128]{1,0:T(1,128)}', space=vmem, size = 0x12000, scoped, tag = 'internal scratch']
  #allocation2 [shape = 's32[1]{0}', space=sflag, size = 0x4, scoped, tag = 'scoped memory for pixel_encoder_forward.1']
  #allocation3 [shape = 's32[1]{0:T(128)S(6)}', space=smem, size = 0x200, scoped, tag = 'prefetched SMEM operand 0']
  %s0 = inlined_call_operand.<no memory space> [shape: s32[1], index: 0, kind: input, shape index: {}]
  %s1 = inlined_call_operand.vmem [shape: f32[2,64,192], index: 1, kind: input, shape index: {}]
  %s2 = inlined_call_operand.vmem [shape: f32[3,31,64], index: 2, kind: input, shape index: {}]
  %s3 = inlined_call_operand.vmem [shape: f32[3,192,496], index: 3, kind: input, shape index: {}]
  %s4 = inlined_call_operand.vmem [shape: f32[1,496], index: 4, kind: input, shape index: {}]
  %s5 = inlined_call_operand.vmem [shape: f32[31,496], index: 5, kind: input, shape index: {}]
  %s6 = inlined_call_operand.vmem [shape: f32[31,496], index: 6, kind: input, shape index: {}]
  %s7 = inlined_call_operand.vmem [shape: f32[3,15,31], index: 7, kind: input, shape index: {}]
  %s8 = inlined_call_operand.vmem [shape: f32[3,496,240], index: 8, kind: input, shape index: {}]
  %s9 = inlined_call_operand.vmem [shape: f32[1,240], index: 9, kind: input, shape index: {}]
  %s10 = inlined_call_operand.vmem [shape: f32[15,240], index: 10, kind: input, shape index: {}]
  %s11 = inlined_call_operand.vmem [shape: f32[15,240], index: 11, kind: input, shape index: {}]
  %s12 = inlined_call_operand.vmem [shape: f32[3,7,15], index: 12, kind: input, shape index: {}]
  %s13 = inlined_call_operand.vmem [shape: f32[3,240,112], index: 13, kind: input, shape index: {}]
  %s14 = inlined_call_operand.vmem [shape: f32[1,112], index: 14, kind: input, shape index: {}]
  %s15 = inlined_call_operand.vmem [shape: f32[7,112], index: 15, kind: input, shape index: {}]
  %s16 = inlined_call_operand.vmem [shape: f32[7,112], index: 16, kind: input, shape index: {}]
  %s17 = inlined_call_operand.vmem [shape: f32[3,3,7], index: 17, kind: input, shape index: {}]
  %s18 = inlined_call_operand.vmem [shape: f32[3,112,48], index: 18, kind: input, shape index: {}]
  %s19 = inlined_call_operand.vmem [shape: f32[1,48], index: 19, kind: input, shape index: {}]
  %s20 = inlined_call_operand.vmem [shape: f32[3,48], index: 20, kind: input, shape index: {}]
  %s21 = inlined_call_operand.vmem [shape: f32[3,48], index: 21, kind: input, shape index: {}]
  %s22 = inlined_call_operand.vmem [shape: f32[3,48,32], index: 22, kind: input, shape index: {}]
  %s23 = inlined_call_operand.vmem [shape: f32[1,32], index: 23, kind: input, shape index: {}]
  %s24 = inlined_call_operand.vmem [shape: f32[1,32], index: 24, kind: input, shape index: {}]
  %s25 = inlined_call_operand.vmem [shape: f32[1,32], index: 25, kind: input, shape index: {}]
  %s26 = inlined_call_operand.hbm [shape: f32[2,1,32], index: 26, kind: output, shape index: {}]
  %s27 = sld [smem:[#allocation0]]
  $region133: #{pixel_encoder_forward.1} parent=0
    _
  %s29 = ssub.s32 1, %s27
  %s30 = scalar_select 0, %s29, %s27
  %31 = sst [smem:[#allocation3]] %s0
  $region1: #{pixel_encoder_forward.1} parent=0
    #allocation4 [shape = 'u8[1024]{0}', space=vmem, size = 0x400, scoped, tag = 'output window, operand 0']
    #allocation5 [shape = 's32[2]{0}', space=sflag, size = 0x8, scoped, tag = 'scoped memory for pixel_encoder_forward.1']
    %32 = vsyncpa [#allocation5], 0
    %s33 = scalar_lea.sflag [#allocation5], 1
    %34 = vsyncpa %s33, 0
    loop: start=0, step=1, limit=4
    $region2: #{pixel_encoder_forward.1} parent=1 // loop_pre_header
      _
    $region3: #{pixel_encoder_forward.1} parent=1 // loop_header
      %s36 = sphi 0, %s40
      %p37 = scmp.ge.s32.totalorder %s36, 4
      %s46 = sphi 0, %s48
      %s49 = sphi 0, %s46
      %s50 = sphi 0, %s49
      %s66 = sphi 0, %s50
      %s70 = sphi 0, %s70
      %s72 = sphi 0, %s70
      %s73 = sphi 0, %s72
      %s87 = sphi 0, %s73
      %s91 = sphi 0, %s91
      %s93 = sphi 0, %s91
      %s94 = sphi 0, %s93
      %s108 = sphi 0, %s94
      %s112 = sphi 0, %s112
      %s114 = sphi 0, %s112
      %s115 = sphi 0, %s114
      %s129 = sphi 0, %s115
      %s133 = sphi 0, %s133
      %s135 = sphi 0, %s133
      %s136 = sphi 0, %s135
      %s150 = sphi 0, %s136
      %s154 = sphi 0, %s154
      %s156 = sphi 0, %s154
      %s157 = sphi 0, %s156
      %s171 = sphi 0, %s157
      %s175 = sphi 0, %s175
      %s177 = sphi 0, %s175
      %s178 = sphi 0, %s177
      %s192 = sphi 0, %s178
      %s196 = sphi 0, %s196
      %s198 = sphi 0, %s196
      %s199 = sphi 0, %s198
      %s213 = sphi 0, %s199
      %s217 = sphi 0, %s217
      %s219 = sphi 0, %s217
      %s220 = sphi 0, %s219
      %s234 = sphi 0, %s220
      %s238 = sphi 0, %s238
      %s240 = sphi 0, %s238
      %s241 = sphi 0, %s240
      %s255 = sphi 0, %s241
      %s259 = sphi 0, %s259
      %s261 = sphi 0, %s259
      %s262 = sphi 0, %s261
      %s276 = sphi 0, %s262
      %s280 = sphi 0, %s280
      %s282 = sphi 0, %s280
      %s283 = sphi 0, %s282
      %s297 = sphi 0, %s283
      %s301 = sphi 0, %s301
      %s303 = sphi 0, %s301
      %s304 = sphi 0, %s303
      %s318 = sphi 0, %s304
      %s322 = sphi 0, %s322
      %s324 = sphi 0, %s322
      %s325 = sphi 0, %s324
      %s339 = sphi 0, %s325
      %s343 = sphi 0, %s343
      %s345 = sphi 0, %s343
      %s346 = sphi 0, %s345
      %s360 = sphi 0, %s346
      %s364 = sphi 0, %s364
      %s366 = sphi 0, %s364
      %s367 = sphi 0, %s366
      %s381 = sphi 0, %s367
      %s385 = sphi 0, %s385
      %s387 = sphi 0, %s385
      %s388 = sphi 0, %s387
      %s402 = sphi 0, %s388
      %s406 = sphi 0, %s406
      %s408 = sphi 0, %s406
      %s409 = sphi 0, %s408
      %s423 = sphi 0, %s409
      %s427 = sphi 0, %s427
      %s429 = sphi 0, %s427
      %s430 = sphi 0, %s429
      %s444 = sphi 0, %s430
      %s448 = sphi 0, %s448
      %s450 = sphi 0, %s448
      %s451 = sphi 0, %s450
      %s465 = sphi 0, %s451
      %s469 = sphi 0, %s469
      %s471 = sphi 0, %s469
      %s472 = sphi 0, %s471
      %s486 = sphi 0, %s472
      %s490 = sphi 0, %s490
      %s492 = sphi 0, %s490
      %s493 = sphi 0, %s492
      %s507 = sphi 0, %s493
      %s511 = sphi 0, %s511
      %s513 = sphi 0, %s511
      %s514 = sphi 0, %s513
      %s528 = sphi 0, %s514
      %s532 = sphi 0, %s532
      %s534 = sphi 0, %s532
      %s535 = sphi 0, %s534
      %s549 = sphi 0, %s535
      %s553 = sphi 0, %s553
      %s555 = sphi 0, %s553
      %s556 = sphi 0, %s555
      %s570 = sphi 0, %s556
      %s576 = sphi 0, %s578
      %s579 = sphi 0, %s576
      %s580 = sphi 0, %s579
      %s596 = sphi 0, %s580
    $region4: #{pixel_encoder_forward.1} parent=1 // loop_header_branch
      %39 = sbr.rel (%p37) target = $region8
    $region5: #{pixel_encoder_forward.1} parent=1 // loop_body
      %s41 = ssub.s32 %s36, 1
      %s42 = ssub.s32 %s36, 2
      %s43 = sadd.s32 %s36, 1
      %s44 = ssub.s32 %s36, %s43
      %p45 = scmp.eq.s32.totalorder %s44, 0
      %s47 = sadd.s32 %s46, 1
      %s48 = scalar_select %p45, %s46, %s47
      %p51 = pneg %p45
      %p52 = scmp.eq.s32.totalorder %s36, 1
      %p53 = por %p51, %p52
      %p54 = scmp.ne.s32.totalorder %s46, %s49
      %p55 = scmp.eq.s32.totalorder %s36, 0
      %p56 = por %p54, %p55
      %p57 = scmp.ne.s32.totalorder %s46, %s49
      %p58 = scmp.eq.s32.totalorder %s41, 1
      %p59 = por %p57, %p58
      %p60 = scmp.ne.s32.totalorder %s49, %s50
      %p61 = scmp.eq.s32.totalorder %s41, 0
      %p62 = por %p60, %p61
      %p63 = scmp.ne.s32.totalorder %s49, %s50
      %p64 = scmp.eq.s32.totalorder %s42, 1
      %p65 = por %p63, %p64
      %p67 = scmp.ne.s32.totalorder %s50, %s66
      %p68 = scmp.eq.s32.totalorder %s42, 0
      %p69 = por %p67, %p68
      %s71 = sadd.s32 %s70, 1
      %p74 = scmp.eq.s32.totalorder %s36, 1
      %p75 = scmp.ne.s32.totalorder %s70, %s72
      %p76 = scmp.eq.s32.totalorder %s36, 0
      %p77 = por %p75, %p76
      %p78 = scmp.ne.s32.totalorder %s70, %s72
      %p79 = scmp.eq.s32.totalorder %s41, 1
      %p80 = por %p78, %p79
      %p81 = scmp.ne.s32.totalorder %s72, %s73
      %p82 = scmp.eq.s32.totalorder %s41, 0
      %p83 = por %p81, %p82
      %p84 = scmp.ne.s32.totalorder %s72, %s73
      %p85 = scmp.eq.s32.totalorder %s42, 1
      %p86 = por %p84, %p85
      %p88 = scmp.ne.s32.totalorder %s73, %s87
      %p89 = scmp.eq.s32.totalorder %s42, 0
      %p90 = por %p88, %p89
      %s92 = sadd.s32 %s91, 1
      %p95 = scmp.eq.s32.totalorder %s36, 1
      %p96 = scmp.ne.s32.totalorder %s91, %s93
      %p97 = scmp.eq.s32.totalorder %s36, 0
      %p98 = por %p96, %p97
      %p99 = scmp.ne.s32.totalorder %s91, %s93
      %p100 = scmp.eq.s32.totalorder %s41, 1
      %p101 = por %p99, %p100
      %p102 = scmp.ne.s32.totalorder %s93, %s94
      %p103 = scmp.eq.s32.totalorder %s41, 0
      %p104 = por %p102, %p103
      %p105 = scmp.ne.s32.totalorder %s93, %s94
      %p106 = scmp.eq.s32.totalorder %s42, 1
      %p107 = por %p105, %p106
      %p109 = scmp.ne.s32.totalorder %s94, %s108
      %p110 = scmp.eq.s32.totalorder %s42, 0
      %p111 = por %p109, %p110
      %s113 = sadd.s32 %s112, 1
      %p116 = scmp.eq.s32.totalorder %s36, 1
      %p117 = scmp.ne.s32.totalorder %s112, %s114
      %p118 = scmp.eq.s32.totalorder %s36, 0
      %p119 = por %p117, %p118
      %p120 = scmp.ne.s32.totalorder %s112, %s114
      %p121 = scmp.eq.s32.totalorder %s41, 1
      %p122 = por %p120, %p121
      %p123 = scmp.ne.s32.totalorder %s114, %s115
      %p124 = scmp.eq.s32.totalorder %s41, 0
      %p125 = por %p123, %p124
      %p126 = scmp.ne.s32.totalorder %s114, %s115
      %p127 = scmp.eq.s32.totalorder %s42, 1
      %p128 = por %p126, %p127
      %p130 = scmp.ne.s32.totalorder %s115, %s129
      %p131 = scmp.eq.s32.totalorder %s42, 0
      %p132 = por %p130, %p131
      %s134 = sadd.s32 %s133, 1
      %p137 = scmp.eq.s32.totalorder %s36, 1
      %p138 = scmp.ne.s32.totalorder %s133, %s135
      %p139 = scmp.eq.s32.totalorder %s36, 0
      %p140 = por %p138, %p139
      %p141 = scmp.ne.s32.totalorder %s133, %s135
      %p142 = scmp.eq.s32.totalorder %s41, 1
      %p143 = por %p141, %p142
      %p144 = scmp.ne.s32.totalorder %s135, %s136
      %p145 = scmp.eq.s32.totalorder %s41, 0
      %p146 = por %p144, %p145
      %p147 = scmp.ne.s32.totalorder %s135, %s136
      %p148 = scmp.eq.s32.totalorder %s42, 1
      %p149 = por %p147, %p148
      %p151 = scmp.ne.s32.totalorder %s136, %s150
      %p152 = scmp.eq.s32.totalorder %s42, 0
      %p153 = por %p151, %p152
      %s155 = sadd.s32 %s154, 1
      %p158 = scmp.eq.s32.totalorder %s36, 1
      %p159 = scmp.ne.s32.totalorder %s154, %s156
      %p160 = scmp.eq.s32.totalorder %s36, 0
      %p161 = por %p159, %p160
      %p162 = scmp.ne.s32.totalorder %s154, %s156
      %p163 = scmp.eq.s32.totalorder %s41, 1
      %p164 = por %p162, %p163
      %p165 = scmp.ne.s32.totalorder %s156, %s157
      %p166 = scmp.eq.s32.totalorder %s41, 0
      %p167 = por %p165, %p166
      %p168 = scmp.ne.s32.totalorder %s156, %s157
      %p169 = scmp.eq.s32.totalorder %s42, 1
      %p170 = por %p168, %p169
      %p172 = scmp.ne.s32.totalorder %s157, %s171
      %p173 = scmp.eq.s32.totalorder %s42, 0
      %p174 = por %p172, %p173
      %s176 = sadd.s32 %s175, 1
      %p179 = scmp.eq.s32.totalorder %s36, 1
      %p180 = scmp.ne.s32.totalorder %s175, %s177
      %p181 = scmp.eq.s32.totalorder %s36, 0
      %p182 = por %p180, %p181
      %p183 = scmp.ne.s32.totalorder %s175, %s177
      %p184 = scmp.eq.s32.totalorder %s41, 1
      %p185 = por %p183, %p184
      %p186 = scmp.ne.s32.totalorder %s177, %s178
      %p187 = scmp.eq.s32.totalorder %s41, 0
      %p188 = por %p186, %p187
      %p189 = scmp.ne.s32.totalorder %s177, %s178
      %p190 = scmp.eq.s32.totalorder %s42, 1
      %p191 = por %p189, %p190
      %p193 = scmp.ne.s32.totalorder %s178, %s192
      %p194 = scmp.eq.s32.totalorder %s42, 0
      %p195 = por %p193, %p194
      %s197 = sadd.s32 %s196, 1
      %p200 = scmp.eq.s32.totalorder %s36, 1
      %p201 = scmp.ne.s32.totalorder %s196, %s198
      %p202 = scmp.eq.s32.totalorder %s36, 0
      %p203 = por %p201, %p202
      %p204 = scmp.ne.s32.totalorder %s196, %s198
      %p205 = scmp.eq.s32.totalorder %s41, 1
      %p206 = por %p204, %p205
      %p207 = scmp.ne.s32.totalorder %s198, %s199
      %p208 = scmp.eq.s32.totalorder %s41, 0
      %p209 = por %p207, %p208
      %p210 = scmp.ne.s32.totalorder %s198, %s199
      %p211 = scmp.eq.s32.totalorder %s42, 1
      %p212 = por %p210, %p211
      %p214 = scmp.ne.s32.totalorder %s199, %s213
      %p215 = scmp.eq.s32.totalorder %s42, 0
      %p216 = por %p214, %p215
      %s218 = sadd.s32 %s217, 1
      %p221 = scmp.eq.s32.totalorder %s36, 1
      %p222 = scmp.ne.s32.totalorder %s217, %s219
      %p223 = scmp.eq.s32.totalorder %s36, 0
      %p224 = por %p222, %p223
      %p225 = scmp.ne.s32.totalorder %s217, %s219
      %p226 = scmp.eq.s32.totalorder %s41, 1
      %p227 = por %p225, %p226
      %p228 = scmp.ne.s32.totalorder %s219, %s220
      %p229 = scmp.eq.s32.totalorder %s41, 0
      %p230 = por %p228, %p229
      %p231 = scmp.ne.s32.totalorder %s219, %s220
      %p232 = scmp.eq.s32.totalorder %s42, 1
      %p233 = por %p231, %p232
      %p235 = scmp.ne.s32.totalorder %s220, %s234
      %p236 = scmp.eq.s32.totalorder %s42, 0
      %p237 = por %p235, %p236
      %s239 = sadd.s32 %s238, 1
      %p242 = scmp.eq.s32.totalorder %s36, 1
      %p243 = scmp.ne.s32.totalorder %s238, %s240
      %p244 = scmp.eq.s32.totalorder %s36, 0
      %p245 = por %p243, %p244
      %p246 = scmp.ne.s32.totalorder %s238, %s240
      %p247 = scmp.eq.s32.totalorder %s41, 1
      %p248 = por %p246, %p247
      %p249 = scmp.ne.s32.totalorder %s240, %s241
      %p250 = scmp.eq.s32.totalorder %s41, 0
      %p251 = por %p249, %p250
      %p252 = scmp.ne.s32.totalorder %s240, %s241
      %p253 = scmp.eq.s32.totalorder %s42, 1
      %p254 = por %p252, %p253
      %p256 = scmp.ne.s32.totalorder %s241, %s255
      %p257 = scmp.eq.s32.totalorder %s42, 0
      %p258 = por %p256, %p257
      %s260 = sadd.s32 %s259, 1
      %p263 = scmp.eq.s32.totalorder %s36, 1
      %p264 = scmp.ne.s32.totalorder %s259, %s261
      %p265 = scmp.eq.s32.totalorder %s36, 0
      %p266 = por %p264, %p265
      %p267 = scmp.ne.s32.totalorder %s259, %s261
      %p268 = scmp.eq.s32.totalorder %s41, 1
      %p269 = por %p267, %p268
      %p270 = scmp.ne.s32.totalorder %s261, %s262
      %p271 = scmp.eq.s32.totalorder %s41, 0
      %p272 = por %p270, %p271
      %p273 = scmp.ne.s32.totalorder %s261, %s262
      %p274 = scmp.eq.s32.totalorder %s42, 1
      %p275 = por %p273, %p274
      %p277 = scmp.ne.s32.totalorder %s262, %s276
      %p278 = scmp.eq.s32.totalorder %s42, 0
      %p279 = por %p277, %p278
      %s281 = sadd.s32 %s280, 1
      %p284 = scmp.eq.s32.totalorder %s36, 1
      %p285 = scmp.ne.s32.totalorder %s280, %s282
      %p286 = scmp.eq.s32.totalorder %s36, 0
      %p287 = por %p285, %p286
      %p288 = scmp.ne.s32.totalorder %s280, %s282
      %p289 = scmp.eq.s32.totalorder %s41, 1
      %p290 = por %p288, %p289
      %p291 = scmp.ne.s32.totalorder %s282, %s283
      %p292 = scmp.eq.s32.totalorder %s41, 0
      %p293 = por %p291, %p292
      %p294 = scmp.ne.s32.totalorder %s282, %s283
      %p295 = scmp.eq.s32.totalorder %s42, 1
      %p296 = por %p294, %p295
      %p298 = scmp.ne.s32.totalorder %s283, %s297
      %p299 = scmp.eq.s32.totalorder %s42, 0
      %p300 = por %p298, %p299
      %s302 = sadd.s32 %s301, 1
      %p305 = scmp.eq.s32.totalorder %s36, 1
      %p306 = scmp.ne.s32.totalorder %s301, %s303
      %p307 = scmp.eq.s32.totalorder %s36, 0
      %p308 = por %p306, %p307
      %p309 = scmp.ne.s32.totalorder %s301, %s303
      %p310 = scmp.eq.s32.totalorder %s41, 1
      %p311 = por %p309, %p310
      %p312 = scmp.ne.s32.totalorder %s303, %s304
      %p313 = scmp.eq.s32.totalorder %s41, 0
      %p314 = por %p312, %p313
      %p315 = scmp.ne.s32.totalorder %s303, %s304
      %p316 = scmp.eq.s32.totalorder %s42, 1
      %p317 = por %p315, %p316
      %p319 = scmp.ne.s32.totalorder %s304, %s318
      %p320 = scmp.eq.s32.totalorder %s42, 0
      %p321 = por %p319, %p320
      %s323 = sadd.s32 %s322, 1
      %p326 = scmp.eq.s32.totalorder %s36, 1
      %p327 = scmp.ne.s32.totalorder %s322, %s324
      %p328 = scmp.eq.s32.totalorder %s36, 0
      %p329 = por %p327, %p328
      %p330 = scmp.ne.s32.totalorder %s322, %s324
      %p331 = scmp.eq.s32.totalorder %s41, 1
      %p332 = por %p330, %p331
      %p333 = scmp.ne.s32.totalorder %s324, %s325
      %p334 = scmp.eq.s32.totalorder %s41, 0
      %p335 = por %p333, %p334
      %p336 = scmp.ne.s32.totalorder %s324, %s325
      %p337 = scmp.eq.s32.totalorder %s42, 1
      %p338 = por %p336, %p337
      %p340 = scmp.ne.s32.totalorder %s325, %s339
      %p341 = scmp.eq.s32.totalorder %s42, 0
      %p342 = por %p340, %p341
      %s344 = sadd.s32 %s343, 1
      %p347 = scmp.eq.s32.totalorder %s36, 1
      %p348 = scmp.ne.s32.totalorder %s343, %s345
      %p349 = scmp.eq.s32.totalorder %s36, 0
      %p350 = por %p348, %p349
      %p351 = scmp.ne.s32.totalorder %s343, %s345
      %p352 = scmp.eq.s32.totalorder %s41, 1
      %p353 = por %p351, %p352
      %p354 = scmp.ne.s32.totalorder %s345, %s346
      %p355 = scmp.eq.s32.totalorder %s41, 0
      %p356 = por %p354, %p355
      %p357 = scmp.ne.s32.totalorder %s345, %s346
      %p358 = scmp.eq.s32.totalorder %s42, 1
      %p359 = por %p357, %p358
      %p361 = scmp.ne.s32.totalorder %s346, %s360
      %p362 = scmp.eq.s32.totalorder %s42, 0
      %p363 = por %p361, %p362
      %s365 = sadd.s32 %s364, 1
      %p368 = scmp.eq.s32.totalorder %s36, 1
      %p369 = scmp.ne.s32.totalorder %s364, %s366
      %p370 = scmp.eq.s32.totalorder %s36, 0
      %p371 = por %p369, %p370
      %p372 = scmp.ne.s32.totalorder %s364, %s366
      %p373 = scmp.eq.s32.totalorder %s41, 1
      %p374 = por %p372, %p373
      %p375 = scmp.ne.s32.totalorder %s366, %s367
      %p376 = scmp.eq.s32.totalorder %s41, 0
      %p377 = por %p375, %p376
      %p378 = scmp.ne.s32.totalorder %s366, %s367
      %p379 = scmp.eq.s32.totalorder %s42, 1
      %p380 = por %p378, %p379
      %p382 = scmp.ne.s32.totalorder %s367, %s381
      %p383 = scmp.eq.s32.totalorder %s42, 0
      %p384 = por %p382, %p383
      %s386 = sadd.s32 %s385, 1
      %p389 = scmp.eq.s32.totalorder %s36, 1
      %p390 = scmp.ne.s32.totalorder %s385, %s387
      %p391 = scmp.eq.s32.totalorder %s36, 0
      %p392 = por %p390, %p391
      %p393 = scmp.ne.s32.totalorder %s385, %s387
      %p394 = scmp.eq.s32.totalorder %s41, 1
      %p395 = por %p393, %p394
      %p396 = scmp.ne.s32.totalorder %s387, %s388
      %p397 = scmp.eq.s32.totalorder %s41, 0
      %p398 = por %p396, %p397
      %p399 = scmp.ne.s32.totalorder %s387, %s388
      %p400 = scmp.eq.s32.totalorder %s42, 1
      %p401 = por %p399, %p400
      %p403 = scmp.ne.s32.totalorder %s388, %s402
      %p404 = scmp.eq.s32.totalorder %s42, 0
      %p405 = por %p403, %p404
      %s407 = sadd.s32 %s406, 1
      %p410 = scmp.eq.s32.totalorder %s36, 1
      %p411 = scmp.ne.s32.totalorder %s406, %s408
      %p412 = scmp.eq.s32.totalorder %s36, 0
      %p413 = por %p411, %p412
      %p414 = scmp.ne.s32.totalorder %s406, %s408
      %p415 = scmp.eq.s32.totalorder %s41, 1
      %p416 = por %p414, %p415
      %p417 = scmp.ne.s32.totalorder %s408, %s409
      %p418 = scmp.eq.s32.totalorder %s41, 0
      %p419 = por %p417, %p418
      %p420 = scmp.ne.s32.totalorder %s408, %s409
      %p421 = scmp.eq.s32.totalorder %s42, 1
      %p422 = por %p420, %p421
      %p424 = scmp.ne.s32.totalorder %s409, %s423
      %p425 = scmp.eq.s32.totalorder %s42, 0
      %p426 = por %p424, %p425
      %s428 = sadd.s32 %s427, 1
      %p431 = scmp.eq.s32.totalorder %s36, 1
      %p432 = scmp.ne.s32.totalorder %s427, %s429
      %p433 = scmp.eq.s32.totalorder %s36, 0
      %p434 = por %p432, %p433
      %p435 = scmp.ne.s32.totalorder %s427, %s429
      %p436 = scmp.eq.s32.totalorder %s41, 1
      %p437 = por %p435, %p436
      %p438 = scmp.ne.s32.totalorder %s429, %s430
      %p439 = scmp.eq.s32.totalorder %s41, 0
      %p440 = por %p438, %p439
      %p441 = scmp.ne.s32.totalorder %s429, %s430
      %p442 = scmp.eq.s32.totalorder %s42, 1
      %p443 = por %p441, %p442
      %p445 = scmp.ne.s32.totalorder %s430, %s444
      %p446 = scmp.eq.s32.totalorder %s42, 0
      %p447 = por %p445, %p446
      %s449 = sadd.s32 %s448, 1
      %p452 = scmp.eq.s32.totalorder %s36, 1
      %p453 = scmp.ne.s32.totalorder %s448, %s450
      %p454 = scmp.eq.s32.totalorder %s36, 0
      %p455 = por %p453, %p454
      %p456 = scmp.ne.s32.totalorder %s448, %s450
      %p457 = scmp.eq.s32.totalorder %s41, 1
      %p458 = por %p456, %p457
      %p459 = scmp.ne.s32.totalorder %s450, %s451
      %p460 = scmp.eq.s32.totalorder %s41, 0
      %p461 = por %p459, %p460
      %p462 = scmp.ne.s32.totalorder %s450, %s451
      %p463 = scmp.eq.s32.totalorder %s42, 1
      %p464 = por %p462, %p463
      %p466 = scmp.ne.s32.totalorder %s451, %s465
      %p467 = scmp.eq.s32.totalorder %s42, 0
      %p468 = por %p466, %p467
      %s470 = sadd.s32 %s469, 1
      %p473 = scmp.eq.s32.totalorder %s36, 1
      %p474 = scmp.ne.s32.totalorder %s469, %s471
      %p475 = scmp.eq.s32.totalorder %s36, 0
      %p476 = por %p474, %p475
      %p477 = scmp.ne.s32.totalorder %s469, %s471
      %p478 = scmp.eq.s32.totalorder %s41, 1
      %p479 = por %p477, %p478
      %p480 = scmp.ne.s32.totalorder %s471, %s472
      %p481 = scmp.eq.s32.totalorder %s41, 0
      %p482 = por %p480, %p481
      %p483 = scmp.ne.s32.totalorder %s471, %s472
      %p484 = scmp.eq.s32.totalorder %s42, 1
      %p485 = por %p483, %p484
      %p487 = scmp.ne.s32.totalorder %s472, %s486
      %p488 = scmp.eq.s32.totalorder %s42, 0
      %p489 = por %p487, %p488
      %s491 = sadd.s32 %s490, 1
      %p494 = scmp.eq.s32.totalorder %s36, 1
      %p495 = scmp.ne.s32.totalorder %s490, %s492
      %p496 = scmp.eq.s32.totalorder %s36, 0
      %p497 = por %p495, %p496
      %p498 = scmp.ne.s32.totalorder %s490, %s492
      %p499 = scmp.eq.s32.totalorder %s41, 1
      %p500 = por %p498, %p499
      %p501 = scmp.ne.s32.totalorder %s492, %s493
      %p502 = scmp.eq.s32.totalorder %s41, 0
      %p503 = por %p501, %p502
      %p504 = scmp.ne.s32.totalorder %s492, %s493
      %p505 = scmp.eq.s32.totalorder %s42, 1
      %p506 = por %p504, %p505
      %p508 = scmp.ne.s32.totalorder %s493, %s507
      %p509 = scmp.eq.s32.totalorder %s42, 0
      %p510 = por %p508, %p509
      %s512 = sadd.s32 %s511, 1
      %p515 = scmp.eq.s32.totalorder %s36, 1
      %p516 = scmp.ne.s32.totalorder %s511, %s513
      %p517 = scmp.eq.s32.totalorder %s36, 0
      %p518 = por %p516, %p517
      %p519 = scmp.ne.s32.totalorder %s511, %s513
      %p520 = scmp.eq.s32.totalorder %s41, 1
      %p521 = por %p519, %p520
      %p522 = scmp.ne.s32.totalorder %s513, %s514
      %p523 = scmp.eq.s32.totalorder %s41, 0
      %p524 = por %p522, %p523
      %p525 = scmp.ne.s32.totalorder %s513, %s514
      %p526 = scmp.eq.s32.totalorder %s42, 1
      %p527 = por %p525, %p526
      %p529 = scmp.ne.s32.totalorder %s514, %s528
      %p530 = scmp.eq.s32.totalorder %s42, 0
      %p531 = por %p529, %p530
      %s533 = sadd.s32 %s532, 1
      %p536 = scmp.eq.s32.totalorder %s36, 1
      %p537 = scmp.ne.s32.totalorder %s532, %s534
      %p538 = scmp.eq.s32.totalorder %s36, 0
      %p539 = por %p537, %p538
      %p540 = scmp.ne.s32.totalorder %s532, %s534
      %p541 = scmp.eq.s32.totalorder %s41, 1
      %p542 = por %p540, %p541
      %p543 = scmp.ne.s32.totalorder %s534, %s535
      %p544 = scmp.eq.s32.totalorder %s41, 0
      %p545 = por %p543, %p544
      %p546 = scmp.ne.s32.totalorder %s534, %s535
      %p547 = scmp.eq.s32.totalorder %s42, 1
      %p548 = por %p546, %p547
      %p550 = scmp.ne.s32.totalorder %s535, %s549
      %p551 = scmp.eq.s32.totalorder %s42, 0
      %p552 = por %p550, %p551
      %s554 = sadd.s32 %s553, 1
      %p557 = scmp.eq.s32.totalorder %s36, 1
      %p558 = scmp.ne.s32.totalorder %s553, %s555
      %p559 = scmp.eq.s32.totalorder %s36, 0
      %p560 = por %p558, %p559
      %p561 = scmp.ne.s32.totalorder %s553, %s555
      %p562 = scmp.eq.s32.totalorder %s41, 1
      %p563 = por %p561, %p562
      %p564 = scmp.ne.s32.totalorder %s555, %s556
      %p565 = scmp.eq.s32.totalorder %s41, 0
      %p566 = por %p564, %p565
      %p567 = scmp.ne.s32.totalorder %s555, %s556
      %p568 = scmp.eq.s32.totalorder %s42, 1
      %p569 = por %p567, %p568
      %p571 = scmp.ne.s32.totalorder %s556, %s570
      %p572 = scmp.eq.s32.totalorder %s42, 0
      %p573 = por %p571, %p572
      %s574 = ssub.s32 %s36, %s43
      %p575 = scmp.eq.s32.totalorder %s574, 0
      %s577 = sadd.s32 %s576, 1
      %s578 = scalar_select %p575, %s576, %s577
      %p581 = pneg %p575
      %p582 = scmp.eq.s32.totalorder %s36, 1
      %p583 = por %p581, %p582
      %p584 = scmp.ne.s32.totalorder %s576, %s579
      %p585 = scmp.eq.s32.totalorder %s36, 0
      %p586 = por %p584, %p585
      %p587 = scmp.ne.s32.totalorder %s576, %s579
      %p588 = scmp.eq.s32.totalorder %s41, 1
      %p589 = por %p587, %p588
      %p590 = scmp.ne.s32.totalorder %s579, %s580
      %p591 = scmp.eq.s32.totalorder %s41, 0
      %p592 = por %p590, %p591
      %p593 = scmp.ne.s32.totalorder %s579, %s580
      %p594 = scmp.eq.s32.totalorder %s42, 1
      %p595 = por %p593, %p594
      %p597 = scmp.ne.s32.totalorder %s580, %s596
      %p598 = scmp.eq.s32.totalorder %s42, 0
      %p599 = por %p597, %p598
      %p600 = scmp.le.s32.totalorder 1, %s36
      %p601 = scmp.lt.s32.totalorder %s36, 3
      %p602 = pnand %p600, %p601
      %p603 = pneg %p602
      // Predicated region
      $region9: #{pixel_encoder_forward.1} parent=5 // pred_check
        _
      $region10: #{pixel_encoder_forward.1} parent=5 // pred_check_branch
        %605 = sbr.rel (%p602) target = $region12
      $region11: #{pixel_encoder_forward.1} parent=5 // pred_region
        %s606 = ssub.s32 %s36, 1
        // Predicated region
        $region13: #{pixel_encoder_forward.1} parent=11 // pred_check
          %p607 = pneg %p83
        $region14: #{pixel_encoder_forward.1} parent=11 // pred_check_branch
          %609 = sbr.rel (%p607) target = $region16
        $region15: #{pixel_encoder_forward.1} parent=11 // pred_region
          _
        $region16: #{pixel_encoder_forward.1} parent=11 // pred_fallthru
          _
        // Predicated region
        $region17: #{pixel_encoder_forward.1} parent=11 // pred_check
          %p610 = pneg %p104
        $region18: #{pixel_encoder_forward.1} parent=11 // pred_check_branch
          %612 = sbr.rel (%p610) target = $region20
        $region19: #{pixel_encoder_forward.1} parent=11 // pred_region
          _
        $region20: #{pixel_encoder_forward.1} parent=11 // pred_fallthru
          _
        // Predicated region
        $region21: #{pixel_encoder_forward.1} parent=11 // pred_check
          %p613 = pneg %p125
        $region22: #{pixel_encoder_forward.1} parent=11 // pred_check_branch
          %615 = sbr.rel (%p613) target = $region24
        $region23: #{pixel_encoder_forward.1} parent=11 // pred_region
          _
        $region24: #{pixel_encoder_forward.1} parent=11 // pred_fallthru
          _
        // Predicated region
        $region25: #{pixel_encoder_forward.1} parent=11 // pred_check
          %p616 = pneg %p146
        $region26: #{pixel_encoder_forward.1} parent=11 // pred_check_branch
          %618 = sbr.rel (%p616) target = $region28
        $region27: #{pixel_encoder_forward.1} parent=11 // pred_region
          _
        $region28: #{pixel_encoder_forward.1} parent=11 // pred_fallthru
          _
        // Predicated region
        $region29: #{pixel_encoder_forward.1} parent=11 // pred_check
          %p619 = pneg %p167
        $region30: #{pixel_encoder_forward.1} parent=11 // pred_check_branch
          %621 = sbr.rel (%p619) target = $region32
        $region31: #{pixel_encoder_forward.1} parent=11 // pred_region
          _
        $region32: #{pixel_encoder_forward.1} parent=11 // pred_fallthru
          _
        // Predicated region
        $region33: #{pixel_encoder_forward.1} parent=11 // pred_check
          %p622 = pneg %p188
        $region34: #{pixel_encoder_forward.1} parent=11 // pred_check_branch
          %624 = sbr.rel (%p622) target = $region36
        $region35: #{pixel_encoder_forward.1} parent=11 // pred_region
          _
        $region36: #{pixel_encoder_forward.1} parent=11 // pred_fallthru
          _
        // Predicated region
        $region37: #{pixel_encoder_forward.1} parent=11 // pred_check
          %p625 = pneg %p209
        $region38: #{pixel_encoder_forward.1} parent=11 // pred_check_branch
          %627 = sbr.rel (%p625) target = $region40
        $region39: #{pixel_encoder_forward.1} parent=11 // pred_region
          _
        $region40: #{pixel_encoder_forward.1} parent=11 // pred_fallthru
          _
        // Predicated region
        $region41: #{pixel_encoder_forward.1} parent=11 // pred_check
          %p628 = pneg %p230
        $region42: #{pixel_encoder_forward.1} parent=11 // pred_check_branch
          %630 = sbr.rel (%p628) target = $region44
        $region43: #{pixel_encoder_forward.1} parent=11 // pred_region
          _
        $region44: #{pixel_encoder_forward.1} parent=11 // pred_fallthru
          _
        // Predicated region
        $region45: #{pixel_encoder_forward.1} parent=11 // pred_check
          %p631 = pneg %p251
        $region46: #{pixel_encoder_forward.1} parent=11 // pred_check_branch
          %633 = sbr.rel (%p631) target = $region48
        $region47: #{pixel_encoder_forward.1} parent=11 // pred_region
          _
        $region48: #{pixel_encoder_forward.1} parent=11 // pred_fallthru
          _
        // Predicated region
        $region49: #{pixel_encoder_forward.1} parent=11 // pred_check
          %p634 = pneg %p272
        $region50: #{pixel_encoder_forward.1} parent=11 // pred_check_branch
          %636 = sbr.rel (%p634) target = $region52
        $region51: #{pixel_encoder_forward.1} parent=11 // pred_region
          _
        $region52: #{pixel_encoder_forward.1} parent=11 // pred_fallthru
          _
        // Predicated region
        $region53: #{pixel_encoder_forward.1} parent=11 // pred_check
          %p637 = pneg %p293
        $region54: #{pixel_encoder_forward.1} parent=11 // pred_check_branch
          %639 = sbr.rel (%p637) target = $region56
        $region55: #{pixel_encoder_forward.1} parent=11 // pred_region
          _
        $region56: #{pixel_encoder_forward.1} parent=11 // pred_fallthru
          _
        // Predicated region
        $region57: #{pixel_encoder_forward.1} parent=11 // pred_check
          %p640 = pneg %p314
        $region58: #{pixel_encoder_forward.1} parent=11 // pred_check_branch
          %642 = sbr.rel (%p640) target = $region60
        $region59: #{pixel_encoder_forward.1} parent=11 // pred_region
          _
        $region60: #{pixel_encoder_forward.1} parent=11 // pred_fallthru
          _
        // Predicated region
        $region61: #{pixel_encoder_forward.1} parent=11 // pred_check
          %p643 = pneg %p335
        $region62: #{pixel_encoder_forward.1} parent=11 // pred_check_branch
          %645 = sbr.rel (%p643) target = $region64
        $region63: #{pixel_encoder_forward.1} parent=11 // pred_region
          _
        $region64: #{pixel_encoder_forward.1} parent=11 // pred_fallthru
          _
        // Predicated region
        $region65: #{pixel_encoder_forward.1} parent=11 // pred_check
          %p646 = pneg %p356
        $region66: #{pixel_encoder_forward.1} parent=11 // pred_check_branch
          %648 = sbr.rel (%p646) target = $region68
        $region67: #{pixel_encoder_forward.1} parent=11 // pred_region
          _
        $region68: #{pixel_encoder_forward.1} parent=11 // pred_fallthru
          _
        // Predicated region
        $region69: #{pixel_encoder_forward.1} parent=11 // pred_check
          %p649 = pneg %p377
        $region70: #{pixel_encoder_forward.1} parent=11 // pred_check_branch
          %651 = sbr.rel (%p649) target = $region72
        $region71: #{pixel_encoder_forward.1} parent=11 // pred_region
          _
        $region72: #{pixel_encoder_forward.1} parent=11 // pred_fallthru
          _
        // Predicated region
        $region73: #{pixel_encoder_forward.1} parent=11 // pred_check
          %p652 = pneg %p398
        $region74: #{pixel_encoder_forward.1} parent=11 // pred_check_branch
          %654 = sbr.rel (%p652) target = $region76
        $region75: #{pixel_encoder_forward.1} parent=11 // pred_region
          _
        $region76: #{pixel_encoder_forward.1} parent=11 // pred_fallthru
          _
        // Predicated region
        $region77: #{pixel_encoder_forward.1} parent=11 // pred_check
          %p655 = pneg %p419
        $region78: #{pixel_encoder_forward.1} parent=11 // pred_check_branch
          %657 = sbr.rel (%p655) target = $region80
        $region79: #{pixel_encoder_forward.1} parent=11 // pred_region
          _
        $region80: #{pixel_encoder_forward.1} parent=11 // pred_fallthru
          _
        // Predicated region
        $region81: #{pixel_encoder_forward.1} parent=11 // pred_check
          %p658 = pneg %p440
        $region82: #{pixel_encoder_forward.1} parent=11 // pred_check_branch
          %660 = sbr.rel (%p658) target = $region84
        $region83: #{pixel_encoder_forward.1} parent=11 // pred_region
          _
        $region84: #{pixel_encoder_forward.1} parent=11 // pred_fallthru
          _
        // Predicated region
        $region85: #{pixel_encoder_forward.1} parent=11 // pred_check
          %p661 = pneg %p461
        $region86: #{pixel_encoder_forward.1} parent=11 // pred_check_branch
          %663 = sbr.rel (%p661) target = $region88
        $region87: #{pixel_encoder_forward.1} parent=11 // pred_region
          _
        $region88: #{pixel_encoder_forward.1} parent=11 // pred_fallthru
          _
        // Predicated region
        $region89: #{pixel_encoder_forward.1} parent=11 // pred_check
          %p664 = pneg %p482
        $region90: #{pixel_encoder_forward.1} parent=11 // pred_check_branch
          %666 = sbr.rel (%p664) target = $region92
        $region91: #{pixel_encoder_forward.1} parent=11 // pred_region
          _
        $region92: #{pixel_encoder_forward.1} parent=11 // pred_fallthru
          _
        // Predicated region
        $region93: #{pixel_encoder_forward.1} parent=11 // pred_check
          %p667 = pneg %p503
        $region94: #{pixel_encoder_forward.1} parent=11 // pred_check_branch
          %669 = sbr.rel (%p667) target = $region96
        $region95: #{pixel_encoder_forward.1} parent=11 // pred_region
          _
        $region96: #{pixel_encoder_forward.1} parent=11 // pred_fallthru
          _
        // Predicated region
        $region97: #{pixel_encoder_forward.1} parent=11 // pred_check
          %p670 = pneg %p524
        $region98: #{pixel_encoder_forward.1} parent=11 // pred_check_branch
          %672 = sbr.rel (%p670) target = $region100
        $region99: #{pixel_encoder_forward.1} parent=11 // pred_region
          _
        $region100: #{pixel_encoder_forward.1} parent=11 // pred_fallthru
          _
        // Predicated region
        $region101: #{pixel_encoder_forward.1} parent=11 // pred_check
          %p673 = pneg %p545
        $region102: #{pixel_encoder_forward.1} parent=11 // pred_check_branch
          %675 = sbr.rel (%p673) target = $region104
        $region103: #{pixel_encoder_forward.1} parent=11 // pred_region
          _
        $region104: #{pixel_encoder_forward.1} parent=11 // pred_fallthru
          _
        // Predicated region
        $region105: #{pixel_encoder_forward.1} parent=11 // pred_check
          %p676 = pneg %p566
        $region106: #{pixel_encoder_forward.1} parent=11 // pred_check_branch
          %678 = sbr.rel (%p676) target = $region108
        $region107: #{pixel_encoder_forward.1} parent=11 // pred_region
          _
        $region108: #{pixel_encoder_forward.1} parent=11 // pred_fallthru
          _
      $region12: #{pixel_encoder_forward.1} parent=5 // pred_fallthru
        _
      %p679 = scmp.lt.s32.totalorder %s36, 2
      // Predicated region
      $region109: #{pixel_encoder_forward.1} parent=5 // pred_check
        %p680 = pneg %p679
      $region110: #{pixel_encoder_forward.1} parent=5 // pred_check_branch
        %682 = sbr.rel (%p680) target = $region112
      $region111: #{pixel_encoder_forward.1} parent=5 // pred_region
        // Predicated region
        $region113: #{pixel_encoder_forward.1} parent=111 // pred_check
          %p683 = pneg %p56
        $region114: #{pixel_encoder_forward.1} parent=111 // pred_check_branch
          %685 = sbr.rel (%p683) target = $region116
        $region115: #{pixel_encoder_forward.1} parent=111 // pred_region
          %p686 = scmp.lt.s32.totalorder %s36, 1
          %s687 = scalar_select %p686, %s36, 1
          %s688 = smul.addr %s687, 16
          %s689 = smul.addr %s688, 8
          %s690 = scalar_lea.vmem %s1, %s689
        $region116: #{pixel_encoder_forward.1} parent=111 // pred_fallthru
          _
      $region112: #{pixel_encoder_forward.1} parent=5 // pred_fallthru
        _
      %p691 = scmp.le.s32.totalorder 1, %s36
      %p692 = scmp.lt.s32.totalorder %s36, 3
      %p693 = pnand %p691, %p692
      %p694 = pneg %p693
      // Predicated region
      $region117: #{pixel_encoder_forward.1} parent=5 // pred_check
        _
      $region118: #{pixel_encoder_forward.1} parent=5 // pred_check_branch
        %696 = sbr.rel (%p693) target = $region120
      $region119: #{pixel_encoder_forward.1} parent=5 // pred_region
        %s697 = ssub.s32 %s36, 1
        %p698 = scmp.lt.s32.totalorder %s41, 1
        %s699 = scalar_select %p698, %s41, 1
        %s700 = smul.addr %s699, 16
        %s701 = smul.addr %s700, 8
        %s702 = scalar_lea.vmem %s1, %s701
        %p703 = pneg %p62
        %p704 = pneg %p59
        %p705 = pneg %p83
        %p706 = pneg %p80
        %p707 = pneg %p104
        %p708 = pneg %p101
        %p709 = pneg %p125
        %p710 = pneg %p122
        %p711 = pneg %p146
        %p712 = pneg %p143
        %p713 = pneg %p167
        %p714 = pneg %p164
        %p715 = pneg %p188
        %p716 = pneg %p185
        %p717 = pneg %p209
        %p718 = pneg %p206
        %p719 = pneg %p230
        %p720 = pneg %p227
        %p721 = pneg %p251
        %p722 = pneg %p248
        %p723 = pneg %p272
        %p724 = pneg %p269
        %p725 = pneg %p293
        %p726 = pneg %p290
        %p727 = pneg %p314
        %p728 = pneg %p311
        %p729 = pneg %p335
        %p730 = pneg %p332
        %p731 = pneg %p356
        %p732 = pneg %p353
        %p733 = pneg %p377
        %p734 = pneg %p374
        %p735 = pneg %p398
        %p736 = pneg %p395
        %p737 = pneg %p419
        %p738 = pneg %p416
        %p739 = pneg %p440
        %p740 = pneg %p437
        %p741 = pneg %p461
        %p742 = pneg %p458
        %p743 = pneg %p482
        %p744 = pneg %p479
        %p745 = pneg %p503
        %p746 = pneg %p500
        %p747 = pneg %p524
        %p748 = pneg %p521
        %p749 = pneg %p545
        %p750 = pneg %p542
        %p751 = pneg %p566
        %p752 = pneg %p563
        %p753 = pneg %p592
        %p754 = pneg %p589
        %s755 = sand.u32 %s579, 1
        %s756 = scalar_lea.sflag [#allocation5], %s755
        %s757 = sand.u32 %s579, 1
        %s758 = scalar_lea.vmem [#allocation4], %s757
        %p759 = scmp.lt.s32.totalorder %s41, 1
        %s760 = scalar_select %p759, %s41, 1
        %s761 = smul.addr %s760, 16
        %s762 = smul.addr %s761, 8
        %s763 = scalar_lea.vmem %s1, %s762
        %s764 = sld [smem:[#allocation3]]
        %p765 = scmp.gt.s32.totalorder %s764, 0
        %s766 = scalar_select %p765, 0.003921569, 1.0
        %v767 = vld [vmem:[%s763] sm:$0xff]
        %v768 = vld [vmem:[%s763 + $0x8] sm:$0xff]
        %v769 = vld [vmem:[%s763 + $0x10] sm:$0xff]
        %v770 = vld [vmem:[%s763 + $0x18] sm:$0xff]
        %v771 = vld [vmem:[%s763 + $0x20] sm:$0xff]
        %v772 = vld [vmem:[%s763 + $0x28] sm:$0xff]
        %v773 = vld [vmem:[%s763 + $0x30] sm:$0xff]
        %v774 = vld [vmem:[%s763 + $0x38] sm:$0xff]
        %v775 = vld [vmem:[%s763 + $0x40] sm:$0xff]
        %v776 = vld [vmem:[%s763 + $0x48] sm:$0xff]
        %v777 = vld [vmem:[%s763 + $0x50] sm:$0xff]
        %v778 = vld [vmem:[%s763 + $0x58] sm:$0xff]
        %v779 = vld [vmem:[%s763 + $0x60] sm:$0xff]
        %v780 = vld [vmem:[%s763 + $0x68] sm:$0xff]
        %v781 = vld [vmem:[%s763 + $0x70] sm:$0xff]
        %v782 = vld [vmem:[%s763 + $0x78] sm:$0xff]
        %v783 = vstv %s766
        %v784 = vmul.f32 %v767, %v783
        %v785 = vmul.f32 %v768, %v783
        %v786 = vmul.f32 %v769, %v783
        %v787 = vmul.f32 %v770, %v783
        %v788 = vmul.f32 %v771, %v783
        %v789 = vmul.f32 %v772, %v783
        %v790 = vmul.f32 %v773, %v783
        %v791 = vmul.f32 %v774, %v783
        %v792 = vmul.f32 %v775, %v783
        %v793 = vmul.f32 %v776, %v783
        %v794 = vmul.f32 %v777, %v783
        %v795 = vmul.f32 %v778, %v783
        %v796 = vmul.f32 %v779, %v783
        %v797 = vmul.f32 %v780, %v783
        %v798 = vmul.f32 %v781, %v783
        %v799 = vmul.f32 %v782, %v783
        %v800 = vld [vmem:[%s2] sm:$0xff]
        %v801 = vld [vmem:[%s2 + $0x8] sm:$0xff]
        %v802 = vld [vmem:[%s2 + $0x10] sm:$0xff]
        %v803 = vld [vmem:[%s2 + $0x18] sm:$0x7f]
        %vm804 = vcmask 523264
        %v806 = vsel %vm804, %v800, 0
        %v809 = vsel %vm804, %v801, 0
        %v812 = vsel %vm804, %v802, 0
        %v815 = vsel %vm804, %v803, 0
        %817 = vmatprep.subr.mxu0 0.0
        %818 = vmatpush1.msra.mxu0 0.0
        %819 = vmatprep.subr.mxu0 0.0
        %820 = vmatpush1.msra.mxu0 0.0
        %821 = vmatprep.subr.mxu0 0.0
        %822 = vmatpush1.msra.mxu0 0.0
        %823 = vmatprep.subr.mxu0 0.0
        %824 = vmatpush1.msra.mxu0 0.0
        %825 = vmatprep.subr.mxu0 0.0
        %826 = vmatpush1.msra.mxu0 0.0
        %827 = vmatprep.subr.mxu0 0.0
        %828 = vmatpush1.msra.mxu0 0.0
        %829 = vmatprep.subr.mxu0 0.0
        %830 = vmatpush1.msra.mxu0 0.0
        %831 = vmatprep.subr.mxu0 0.0
        %832 = vmatpush1.msra.mxu0 0.0
        %833 = vmatprep.subr.mxu0 %v799
        %834 = vmatpush1.msra.mxu0 %v798
        %835 = vmatprep.subr.mxu0 %v797
        %836 = vmatpush1.msra.mxu0 %v796
        %837 = vmatprep.subr.mxu0 %v795
        %838 = vmatpush1.msra.mxu0 %v794
        %839 = vmatprep.subr.mxu0 %v793
        %840 = vmatpush1.msra.mxu0 %v792
        %841 = vmatprep.subr.mxu0 %v791
        %842 = vmatpush1.msra.mxu0 %v790
        %843 = vmatprep.subr.mxu0 %v789
        %844 = vmatpush1.msra.mxu0 %v788
        %845 = vmatprep.subr.mxu0 %v787
        %846 = vmatpush1.msra.mxu0 %v786
        %847 = vmatprep.subr.mxu0 %v785
        %848 = vmatpush1.msra.mxu0 %v784
        %849 = vmatprep.subr.mxu0 0.0
        %850 = vmatpush2.msra.mxu0 0.0
        %851 = vmatprep.subr.mxu0 0.0
        %852 = vmatpush2.msra.mxu0 0.0
        %853 = vmatprep.subr.mxu0 0.0
        %854 = vmatpush2.msra.mxu0 0.0
        %855 = vmatprep.subr.mxu0 0.0
        %856 = vmatpush2.msra.mxu0 0.0
        %857 = vmatprep.subr.mxu0 0.0
        %858 = vmatpush2.msra.mxu0 0.0
        %859 = vmatprep.subr.mxu0 0.0
        %860 = vmatpush2.msra.mxu0 0.0
        %861 = vmatprep.subr.mxu0 0.0
        %862 = vmatpush2.msra.mxu0 0.0
        %863 = vmatprep.subr.mxu0 0.0
        %864 = vmatpush2.msra.mxu0 0.0
        %865 = vmatprep.subr.mxu0 0.0
        %866 = vmatpush2.msra.mxu0 0.0
        %867 = vmatprep.subr.mxu0 0.0
        %868 = vmatpush2.msra.mxu0 0.0
        %869 = vmatprep.subr.mxu0 0.0
        %870 = vmatpush2.msra.mxu0 0.0
        %871 = vmatprep.subr.mxu0 0.0
        %872 = vmatpush2.msra.mxu0 0.0
        %873 = vmatprep.subr.mxu0 0.0
        %874 = vmatpush2.msra.mxu0 0.0
        %875 = vmatprep.subr.mxu0 0.0
        %876 = vmatpush2.msra.mxu0 0.0
        %877 = vmatprep.subr.mxu0 0.0
        %878 = vmatpush2.msra.mxu0 0.0
        %879 = vmatprep.subr.mxu0 0.0
        %880 = vmatpush2.msra.mxu0 0.0
        %881 = vmatprep.mubr.f32.mxu0 0.0
        %882 = vmatmul.mubr.f32.gmra.mxu0 %v806
        %v883 = vpop.f32.mrf.mxu0
        %v884 = vadd.f32 0.0, %v883
        %v885 = vpop.f32.mrf.mxu0
        %v886 = vadd.f32 0.0, %v885
        %887 = vmatprep.mubr.f32.mxu0 0.0
        %888 = vmatmul.mubr.f32.gmra.mxu0 %v809
        %v889 = vpop.f32.mrf.mxu0
        %v890 = vadd.f32 0.0, %v889
        %v891 = vpop.f32.mrf.mxu0
        %v892 = vadd.f32 0.0, %v891
        %893 = vmatprep.mubr.f32.mxu0 0.0
        %894 = vmatmul.mubr.f32.gmra.mxu0 %v812
        %v895 = vpop.f32.mrf.mxu0
        %v896 = vadd.f32 0.0, %v895
        %v897 = vpop.f32.mrf.mxu0
        %v898 = vadd.f32 0.0, %v897
        %899 = vmatprep.mubr.f32.mxu0 0.0
        %900 = vmatmul.mubr.f32.gmra.mxu0 %v815
        %v901 = vpop.f32.mrf.mxu0
        %v902 = vadd.f32 0.0, %v901
        %v903 = vpop.f32.mrf.mxu0
        %v904 = vadd.f32 0.0, %v903
        %905 = vdwg.mxu0
        %v906 = vld [vmem:[%s3] sm:$0xff]
        %v907 = vld [vmem:[%s3 + $0x8] sm:$0xff]
        %v908 = vld [vmem:[%s3 + $0x10] sm:$0xff]
        %v909 = vld [vmem:[%s3 + $0x18] sm:$0xff]
        %v910 = vld [vmem:[%s3 + $0x20] sm:$0xff]
        %v911 = vld [vmem:[%s3 + $0x28] sm:$0xff]
        %v912 = vld [vmem:[%s3 + $0x30] sm:$0xff]
        %v913 = vld [vmem:[%s3 + $0x38] sm:$0xff]
        %v914 = vld [vmem:[%s3 + $0x40] sm:$0xff]
        %v915 = vld [vmem:[%s3 + $0x48] sm:$0xff]
        %v916 = vld [vmem:[%s3 + $0x50] sm:$0xff]
        %v917 = vld [vmem:[%s3 + $0x58] sm:$0xff]
        %v918 = vld [vmem:[%s3 + $0x60] sm:$0xff]
        %v919 = vld [vmem:[%s3 + $0x68] sm:$0xff]
        %v920 = vld [vmem:[%s3 + $0x70] sm:$0xff]
        %v921 = vld [vmem:[%s3 + $0x78] sm:$0xff]
        %v922 = vld [vmem:[%s3 + $0x80] sm:$0xff]
        %v923 = vld [vmem:[%s3 + $0x88] sm:$0xff]
        %v924 = vld [vmem:[%s3 + $0x90] sm:$0xff]
        %v925 = vld [vmem:[%s3 + $0x98] sm:$0xff]
        %v926 = vld [vmem:[%s3 + $0xa0] sm:$0xff]
        %v927 = vld [vmem:[%s3 + $0xa8] sm:$0xff]
        %v928 = vld [vmem:[%s3 + $0xb0] sm:$0xff]
        %v929 = vld [vmem:[%s3 + $0xb8] sm:$0xff]
        %v930 = vld [vmem:[%s3 + $0xc0] sm:$0xff]
        %v931 = vld [vmem:[%s3 + $0xc8] sm:$0xff]
        %v932 = vld [vmem:[%s3 + $0xd0] sm:$0xff]
        %v933 = vld [vmem:[%s3 + $0xd8] sm:$0xff]
        %v934 = vld [vmem:[%s3 + $0xe0] sm:$0xff]
        %v935 = vld [vmem:[%s3 + $0xe8] sm:$0xff]
        %v936 = vld [vmem:[%s3 + $0xf0] sm:$0xff]
        %v937 = vld [vmem:[%s3 + $0xf8] sm:$0xff]
        %v938 = vld [vmem:[%s3 + $0x100] sm:$0xff]
        %v939 = vld [vmem:[%s3 + $0x108] sm:$0xff]
        %v940 = vld [vmem:[%s3 + $0x110] sm:$0xff]
        %v941 = vld [vmem:[%s3 + $0x118] sm:$0xff]
        %v942 = vld [vmem:[%s3 + $0x120] sm:$0xff]
        %v943 = vld [vmem:[%s3 + $0x128] sm:$0xff]
        %v944 = vld [vmem:[%s3 + $0x130] sm:$0xff]
        %v945 = vld [vmem:[%s3 + $0x138] sm:$0xff]
        %v946 = vld [vmem:[%s3 + $0x140] sm:$0xff]
        %v947 = vld [vmem:[%s3 + $0x148] sm:$0xff]
        %v948 = vld [vmem:[%s3 + $0x150] sm:$0xff]
        %v949 = vld [vmem:[%s3 + $0x158] sm:$0xff]
        %v950 = vld [vmem:[%s3 + $0x160] sm:$0xff]
        %v951 = vld [vmem:[%s3 + $0x168] sm:$0xff]
        %v952 = vld [vmem:[%s3 + $0x170] sm:$0xff]
        %v953 = vld [vmem:[%s3 + $0x178] sm:$0xff]
        %v954 = vld [vmem:[%s3 + $0x180] sm:$0xff]
        %v955 = vld [vmem:[%s3 + $0x188] sm:$0xff]
        %v956 = vld [vmem:[%s3 + $0x190] sm:$0xff]
        %v957 = vld [vmem:[%s3 + $0x198] sm:$0xff]
        %v958 = vld [vmem:[%s3 + $0x1a0] sm:$0xff]
        %v959 = vld [vmem:[%s3 + $0x1a8] sm:$0xff]
        %v960 = vld [vmem:[%s3 + $0x1b0] sm:$0xff]
        %v961 = vld [vmem:[%s3 + $0x1b8] sm:$0xff]
        %v962 = vld [vmem:[%s3 + $0x1c0] sm:$0xff]
        %v963 = vld [vmem:[%s3 + $0x1c8] sm:$0xff]
        %v964 = vld [vmem:[%s3 + $0x1d0] sm:$0xff]
        %v965 = vld [vmem:[%s3 + $0x1d8] sm:$0xff]
        %v966 = vld [vmem:[%s3 + $0x1e0] sm:$0xff]
        %v967 = vld [vmem:[%s3 + $0x1e8] sm:$0xff]
        %v968 = vld [vmem:[%s3 + $0x1f0] sm:$0xff]
        %v969 = vld [vmem:[%s3 + $0x1f8] sm:$0xff]
        %v970 = vld [vmem:[%s3 + $0x200] sm:$0xff]
        %v971 = vld [vmem:[%s3 + $0x208] sm:$0xff]
        %v972 = vld [vmem:[%s3 + $0x210] sm:$0xff]
        %v973 = vld [vmem:[%s3 + $0x218] sm:$0xff]
        %v974 = vld [vmem:[%s3 + $0x220] sm:$0xff]
        %v975 = vld [vmem:[%s3 + $0x228] sm:$0xff]
        %v976 = vld [vmem:[%s3 + $0x230] sm:$0xff]
        %v977 = vld [vmem:[%s3 + $0x238] sm:$0xff]
        %v978 = vld [vmem:[%s3 + $0x240] sm:$0xff]
        %v979 = vld [vmem:[%s3 + $0x248] sm:$0xff]
        %v980 = vld [vmem:[%s3 + $0x250] sm:$0xff]
        %v981 = vld [vmem:[%s3 + $0x258] sm:$0xff]
        %v982 = vld [vmem:[%s3 + $0x260] sm:$0xff]
        %v983 = vld [vmem:[%s3 + $0x268] sm:$0xff]
        %v984 = vld [vmem:[%s3 + $0x270] sm:$0xff]
        %v985 = vld [vmem:[%s3 + $0x278] sm:$0xff]
        %v986 = vld [vmem:[%s3 + $0x280] sm:$0xff]
        %v987 = vld [vmem:[%s3 + $0x288] sm:$0xff]
        %v988 = vld [vmem:[%s3 + $0x290] sm:$0xff]
        %v989 = vld [vmem:[%s3 + $0x298] sm:$0xff]
        %v990 = vld [vmem:[%s3 + $0x2a0] sm:$0xff]
        %v991 = vld [vmem:[%s3 + $0x2a8] sm:$0xff]
        %v992 = vld [vmem:[%s3 + $0x2b0] sm:$0xff]
        %v993 = vld [vmem:[%s3 + $0x2b8] sm:$0xff]
        %v994 = vld [vmem:[%s3 + $0x2c0] sm:$0xff]
        %v995 = vld [vmem:[%s3 + $0x2c8] sm:$0xff]
        %v996 = vld [vmem:[%s3 + $0x2d0] sm:$0xff]
        %v997 = vld [vmem:[%s3 + $0x2d8] sm:$0xff]
        %v998 = vld [vmem:[%s3 + $0x2e0] sm:$0xff]
        %v999 = vld [vmem:[%s3 + $0x2e8] sm:$0xff]
        %v1000 = vld [vmem:[%s3 + $0x2f0] sm:$0xff]
        %v1001 = vld [vmem:[%s3 + $0x2f8] sm:$0xff]
        %s1002 = scalar_lea.vmem %s2, 32
        %v1003 = vld [vmem:[%s1002] sm:$0xff]
        %v1004 = vld [vmem:[%s1002 + $0x8] sm:$0xff]
        %v1005 = vld [vmem:[%s1002 + $0x10] sm:$0xff]
        %v1006 = vld [vmem:[%s1002 + $0x18] sm:$0x7f]
        %v1008 = vsel %vm804, %v1003, 0
        %v1011 = vsel %vm804, %v1004, 0
        %v1014 = vsel %vm804, %v1005, 0
        %v1017 = vsel %vm804, %v1006, 0
        %1019 = vmatprep.subr.mxu0 0.0
        %1020 = vmatpush1.msra.mxu0 0.0
        %1021 = vmatprep.subr.mxu0 0.0
        %1022 = vmatpush1.msra.mxu0 0.0
        %1023 = vmatprep.subr.mxu0 0.0
        %1024 = vmatpush1.msra.mxu0 0.0
        %1025 = vmatprep.subr.mxu0 0.0
        %1026 = vmatpush1.msra.mxu0 0.0
        %1027 = vmatprep.subr.mxu0 0.0
        %1028 = vmatpush1.msra.mxu0 0.0
        %1029 = vmatprep.subr.mxu0 0.0
        %1030 = vmatpush1.msra.mxu0 0.0
        %1031 = vmatprep.subr.mxu0 0.0
        %1032 = vmatpush1.msra.mxu0 0.0
        %1033 = vmatprep.subr.mxu0 0.0
        %1034 = vmatpush1.msra.mxu0 0.0
        %1035 = vmatprep.subr.mxu0 %v799
        %1036 = vmatpush1.msra.mxu0 %v798
        %1037 = vmatprep.subr.mxu0 %v797
        %1038 = vmatpush1.msra.mxu0 %v796
        %1039 = vmatprep.subr.mxu0 %v795
        %1040 = vmatpush1.msra.mxu0 %v794
        %1041 = vmatprep.subr.mxu0 %v793
        %1042 = vmatpush1.msra.mxu0 %v792
        %1043 = vmatprep.subr.mxu0 %v791
        %1044 = vmatpush1.msra.mxu0 %v790
        %1045 = vmatprep.subr.mxu0 %v789
        %1046 = vmatpush1.msra.mxu0 %v788
        %1047 = vmatprep.subr.mxu0 %v787
        %1048 = vmatpush1.msra.mxu0 %v786
        %1049 = vmatprep.subr.mxu0 %v785
        %1050 = vmatpush1.msra.mxu0 %v784
        %1051 = vmatprep.subr.mxu0 0.0
        %1052 = vmatpush2.msra.mxu0 0.0
        %1053 = vmatprep.subr.mxu0 0.0
        %1054 = vmatpush2.msra.mxu0 0.0
        %1055 = vmatprep.subr.mxu0 0.0
        %1056 = vmatpush2.msra.mxu0 0.0
        %1057 = vmatprep.subr.mxu0 0.0
        %1058 = vmatpush2.msra.mxu0 0.0
        %1059 = vmatprep.subr.mxu0 0.0
        %1060 = vmatpush2.msra.mxu0 0.0
        %1061 = vmatprep.subr.mxu0 0.0
        %1062 = vmatpush2.msra.mxu0 0.0
        %1063 = vmatprep.subr.mxu0 0.0
        %1064 = vmatpush2.msra.mxu0 0.0
        %1065 = vmatprep.subr.mxu0 0.0
        %1066 = vmatpush2.msra.mxu0 0.0
        %1067 = vmatprep.subr.mxu0 0.0
        %1068 = vmatpush2.msra.mxu0 0.0
        %1069 = vmatprep.subr.mxu0 0.0
        %1070 = vmatpush2.msra.mxu0 0.0
        %1071 = vmatprep.subr.mxu0 0.0
        %1072 = vmatpush2.msra.mxu0 0.0
        %1073 = vmatprep.subr.mxu0 0.0
        %1074 = vmatpush2.msra.mxu0 0.0
        %1075 = vmatprep.subr.mxu0 0.0
        %1076 = vmatpush2.msra.mxu0 0.0
        %1077 = vmatprep.subr.mxu0 0.0
        %1078 = vmatpush2.msra.mxu0 0.0
        %1079 = vmatprep.subr.mxu0 0.0
        %1080 = vmatpush2.msra.mxu0 0.0
        %1081 = vmatprep.subr.mxu0 0.0
        %1082 = vmatpush2.msra.mxu0 0.0
        %1083 = vmatprep.mubr.f32.mxu0 0.0
        %1084 = vmatmul.mubr.f32.gmra.mxu0 %v1008
        %v1085 = vpop.f32.mrf.mxu0
        %v1086 = vadd.f32 0.0, %v1085
        %v1087 = vpop.f32.mrf.mxu0
        %v1088 = vadd.f32 0.0, %v1087
        %1089 = vmatprep.mubr.f32.mxu0 0.0
        %1090 = vmatmul.mubr.f32.gmra.mxu0 %v1011
        %v1091 = vpop.f32.mrf.mxu0
        %v1092 = vadd.f32 0.0, %v1091
        %v1093 = vpop.f32.mrf.mxu0
        %v1094 = vadd.f32 0.0, %v1093
        %1095 = vmatprep.mubr.f32.mxu0 0.0
        %1096 = vmatmul.mubr.f32.gmra.mxu0 %v1014
        %v1097 = vpop.f32.mrf.mxu0
        %v1098 = vadd.f32 0.0, %v1097
        %v1099 = vpop.f32.mrf.mxu0
        %v1100 = vadd.f32 0.0, %v1099
        %1101 = vmatprep.mubr.f32.mxu0 0.0
        %1102 = vmatmul.mubr.f32.gmra.mxu0 %v1017
        %v1103 = vpop.f32.mrf.mxu0
        %v1104 = vadd.f32 0.0, %v1103
        %v1105 = vpop.f32.mrf.mxu0
        %v1106 = vadd.f32 0.0, %v1105
        %1107 = vdwg.mxu0
        %s1108 = scalar_lea.vmem %s3, 768
        %v1109 = vld [vmem:[%s1108] sm:$0xff]
        %v1110 = vld [vmem:[%s1108 + $0x8] sm:$0xff]
        %v1111 = vld [vmem:[%s1108 + $0x10] sm:$0xff]
        %v1112 = vld [vmem:[%s1108 + $0x18] sm:$0xff]
        %v1113 = vld [vmem:[%s1108 + $0x20] sm:$0xff]
        %v1114 = vld [vmem:[%s1108 + $0x28] sm:$0xff]
        %v1115 = vld [vmem:[%s1108 + $0x30] sm:$0xff]
        %v1116 = vld [vmem:[%s1108 + $0x38] sm:$0xff]
        %v1117 = vld [vmem:[%s1108 + $0x40] sm:$0xff]
        %v1118 = vld [vmem:[%s1108 + $0x48] sm:$0xff]
        %v1119 = vld [vmem:[%s1108 + $0x50] sm:$0xff]
        %v1120 = vld [vmem:[%s1108 + $0x58] sm:$0xff]
        %v1121 = vld [vmem:[%s1108 + $0x60] sm:$0xff]
        %v1122 = vld [vmem:[%s1108 + $0x68] sm:$0xff]
        %v1123 = vld [vmem:[%s1108 + $0x70] sm:$0xff]
        %v1124 = vld [vmem:[%s1108 + $0x78] sm:$0xff]
        %v1125 = vld [vmem:[%s1108 + $0x80] sm:$0xff]
        %v1126 = vld [vmem:[%s1108 + $0x88] sm:$0xff]
        %v1127 = vld [vmem:[%s1108 + $0x90] sm:$0xff]
        %v1128 = vld [vmem:[%s1108 + $0x98] sm:$0xff]
        %v1129 = vld [vmem:[%s1108 + $0xa0] sm:$0xff]
        %v1130 = vld [vmem:[%s1108 + $0xa8] sm:$0xff]
        %v1131 = vld [vmem:[%s1108 + $0xb0] sm:$0xff]
        %v1132 = vld [vmem:[%s1108 + $0xb8] sm:$0xff]
        %v1133 = vld [vmem:[%s1108 + $0xc0] sm:$0xff]
        %v1134 = vld [vmem:[%s1108 + $0xc8] sm:$0xff]
        %v1135 = vld [vmem:[%s1108 + $0xd0] sm:$0xff]
        %v1136 = vld [vmem:[%s1108 + $0xd8] sm:$0xff]
        %v1137 = vld [vmem:[%s1108 + $0xe0] sm:$0xff]
        %v1138 = vld [vmem:[%s1108 + $0xe8] sm:$0xff]
        %v1139 = vld [vmem:[%s1108 + $0xf0] sm:$0xff]
        %v1140 = vld [vmem:[%s1108 + $0xf8] sm:$0xff]
        %v1141 = vld [vmem:[%s1108 + $0x100] sm:$0xff]
        %v1142 = vld [vmem:[%s1108 + $0x108] sm:$0xff]
        %v1143 = vld [vmem:[%s1108 + $0x110] sm:$0xff]
        %v1144 = vld [vmem:[%s1108 + $0x118] sm:$0xff]
        %v1145 = vld [vmem:[%s1108 + $0x120] sm:$0xff]
        %v1146 = vld [vmem:[%s1108 + $0x128] sm:$0xff]
        %v1147 = vld [vmem:[%s1108 + $0x130] sm:$0xff]
        %v1148 = vld [vmem:[%s1108 + $0x138] sm:$0xff]
        %v1149 = vld [vmem:[%s1108 + $0x140] sm:$0xff]
        %v1150 = vld [vmem:[%s1108 + $0x148] sm:$0xff]
        %v1151 = vld [vmem:[%s1108 + $0x150] sm:$0xff]
        %v1152 = vld [vmem:[%s1108 + $0x158] sm:$0xff]
        %v1153 = vld [vmem:[%s1108 + $0x160] sm:$0xff]
        %v1154 = vld [vmem:[%s1108 + $0x168] sm:$0xff]
        %v1155 = vld [vmem:[%s1108 + $0x170] sm:$0xff]
        %v1156 = vld [vmem:[%s1108 + $0x178] sm:$0xff]
        %v1157 = vld [vmem:[%s1108 + $0x180] sm:$0xff]
        %v1158 = vld [vmem:[%s1108 + $0x188] sm:$0xff]
        %v1159 = vld [vmem:[%s1108 + $0x190] sm:$0xff]
        %v1160 = vld [vmem:[%s1108 + $0x198] sm:$0xff]
        %v1161 = vld [vmem:[%s1108 + $0x1a0] sm:$0xff]
        %v1162 = vld [vmem:[%s1108 + $0x1a8] sm:$0xff]
        %v1163 = vld [vmem:[%s1108 + $0x1b0] sm:$0xff]
        %v1164 = vld [vmem:[%s1108 + $0x1b8] sm:$0xff]
        %v1165 = vld [vmem:[%s1108 + $0x1c0] sm:$0xff]
        %v1166 = vld [vmem:[%s1108 + $0x1c8] sm:$0xff]
        %v1167 = vld [vmem:[%s1108 + $0x1d0] sm:$0xff]
        %v1168 = vld [vmem:[%s1108 + $0x1d8] sm:$0xff]
        %v1169 = vld [vmem:[%s1108 + $0x1e0] sm:$0xff]
        %v1170 = vld [vmem:[%s1108 + $0x1e8] sm:$0xff]
        %v1171 = vld [vmem:[%s1108 + $0x1f0] sm:$0xff]
        %v1172 = vld [vmem:[%s1108 + $0x1f8] sm:$0xff]
        %v1173 = vld [vmem:[%s1108 + $0x200] sm:$0xff]
        %v1174 = vld [vmem:[%s1108 + $0x208] sm:$0xff]
        %v1175 = vld [vmem:[%s1108 + $0x210] sm:$0xff]
        %v1176 = vld [vmem:[%s1108 + $0x218] sm:$0xff]
        %v1177 = vld [vmem:[%s1108 + $0x220] sm:$0xff]
        %v1178 = vld [vmem:[%s1108 + $0x228] sm:$0xff]
        %v1179 = vld [vmem:[%s1108 + $0x230] sm:$0xff]
        %v1180 = vld [vmem:[%s1108 + $0x238] sm:$0xff]
        %v1181 = vld [vmem:[%s1108 + $0x240] sm:$0xff]
        %v1182 = vld [vmem:[%s1108 + $0x248] sm:$0xff]
        %v1183 = vld [vmem:[%s1108 + $0x250] sm:$0xff]
        %v1184 = vld [vmem:[%s1108 + $0x258] sm:$0xff]
        %v1185 = vld [vmem:[%s1108 + $0x260] sm:$0xff]
        %v1186 = vld [vmem:[%s1108 + $0x268] sm:$0xff]
        %v1187 = vld [vmem:[%s1108 + $0x270] sm:$0xff]
        %v1188 = vld [vmem:[%s1108 + $0x278] sm:$0xff]
        %v1189 = vld [vmem:[%s1108 + $0x280] sm:$0xff]
        %v1190 = vld [vmem:[%s1108 + $0x288] sm:$0xff]
        %v1191 = vld [vmem:[%s1108 + $0x290] sm:$0xff]
        %v1192 = vld [vmem:[%s1108 + $0x298] sm:$0xff]
        %v1193 = vld [vmem:[%s1108 + $0x2a0] sm:$0xff]
        %v1194 = vld [vmem:[%s1108 + $0x2a8] sm:$0xff]
        %v1195 = vld [vmem:[%s1108 + $0x2b0] sm:$0xff]
        %v1196 = vld [vmem:[%s1108 + $0x2b8] sm:$0xff]
        %v1197 = vld [vmem:[%s1108 + $0x2c0] sm:$0xff]
        %v1198 = vld [vmem:[%s1108 + $0x2c8] sm:$0xff]
        %v1199 = vld [vmem:[%s1108 + $0x2d0] sm:$0xff]
        %v1200 = vld [vmem:[%s1108 + $0x2d8] sm:$0xff]
        %v1201 = vld [vmem:[%s1108 + $0x2e0] sm:$0xff]
        %v1202 = vld [vmem:[%s1108 + $0x2e8] sm:$0xff]
        %v1203 = vld [vmem:[%s1108 + $0x2f0] sm:$0xff]
        %v1204 = vld [vmem:[%s1108 + $0x2f8] sm:$0xff]
        %v1206 = vsel %vm804, %v1088, 0
        %v1209 = vsel %vm804, %v1094, 0
        %v1212 = vsel %vm804, %v1100, 0
        %v1215 = vsel %vm804, %v1106, 0
        %1217 = vmatprep.subr.mxu0 %v1170
        %1218 = vmatpush1.msra.mxu0 %v1169
        %1219 = vmatprep.subr.mxu0 %v1166
        %1220 = vmatpush1.msra.mxu0 %v1165
        %1221 = vmatprep.subr.mxu0 %v1162
        %1222 = vmatpush1.msra.mxu0 %v1161
        %1223 = vmatprep.subr.mxu0 %v1158
        %1224 = vmatpush1.msra.mxu0 %v1157
        %1225 = vmatprep.subr.mxu0 %v1154
        %1226 = vmatpush1.msra.mxu0 %v1153
        %1227 = vmatprep.subr.mxu0 %v1150
        %1228 = vmatpush1.msra.mxu0 %v1149
        %1229 = vmatprep.subr.mxu0 %v1146
        %1230 = vmatpush1.msra.mxu0 %v1145
        %1231 = vmatprep.subr.mxu0 %v1142
        %1232 = vmatpush1.msra.mxu0 %v1141
        %1233 = vmatprep.subr.mxu0 %v1138
        %1234 = vmatpush1.msra.mxu0 %v1137
        %1235 = vmatprep.subr.mxu0 %v1134
        %1236 = vmatpush1.msra.mxu0 %v1133
        %1237 = vmatprep.subr.mxu0 %v1130
        %1238 = vmatpush1.msra.mxu0 %v1129
        %1239 = vmatprep.subr.mxu0 %v1126
        %1240 = vmatpush1.msra.mxu0 %v1125
        %1241 = vmatprep.subr.mxu0 %v1122
        %1242 = vmatpush1.msra.mxu0 %v1121
        %1243 = vmatprep.subr.mxu0 %v1118
        %1244 = vmatpush1.msra.mxu0 %v1117
        %1245 = vmatprep.subr.mxu0 %v1114
        %1246 = vmatpush1.msra.mxu0 %v1113
        %1247 = vmatprep.subr.mxu0 %v1110
        %1248 = vmatpush1.msra.mxu0 %v1109
        %1249 = vmatprep.subr.mxu0 0.0
        %1250 = vmatpush2.msra.mxu0 0.0
        %1251 = vmatprep.subr.mxu0 0.0
        %1252 = vmatpush2.msra.mxu0 0.0
        %1253 = vmatprep.subr.mxu0 0.0
        %1254 = vmatpush2.msra.mxu0 0.0
        %1255 = vmatprep.subr.mxu0 0.0
        %1256 = vmatpush2.msra.mxu0 0.0
        %1257 = vmatprep.subr.mxu0 0.0
        %1258 = vmatpush2.msra.mxu0 0.0
        %1259 = vmatprep.subr.mxu0 0.0
        %1260 = vmatpush2.msra.mxu0 0.0
        %1261 = vmatprep.subr.mxu0 0.0
        %1262 = vmatpush2.msra.mxu0 0.0
        %1263 = vmatprep.subr.mxu0 0.0
        %1264 = vmatpush2.msra.mxu0 0.0
        %1265 = vmatprep.subr.mxu0 %v1202
        %1266 = vmatpush2.msra.mxu0 %v1201
        %1267 = vmatprep.subr.mxu0 %v1198
        %1268 = vmatpush2.msra.mxu0 %v1197
        %1269 = vmatprep.subr.mxu0 %v1194
        %1270 = vmatpush2.msra.mxu0 %v1193
        %1271 = vmatprep.subr.mxu0 %v1190
        %1272 = vmatpush2.msra.mxu0 %v1189
        %1273 = vmatprep.subr.mxu0 %v1186
        %1274 = vmatpush2.msra.mxu0 %v1185
        %1275 = vmatprep.subr.mxu0 %v1182
        %1276 = vmatpush2.msra.mxu0 %v1181
        %1277 = vmatprep.subr.mxu0 %v1178
        %1278 = vmatpush2.msra.mxu0 %v1177
        %1279 = vmatprep.subr.mxu0 %v1174
        %1280 = vmatpush2.msra.mxu0 %v1173
        %1281 = vmatprep.mubr.f32.mxu0 %v1206
        %1282 = vmatmul.mubr.f32.gmra.mxu0 %v1086
        %v1283 = vpop.f32.mrf.mxu0
        %v1284 = vadd.f32 0.0, %v1283
        %v1285 = vpop.f32.mrf.mxu0
        %v1286 = vadd.f32 0.0, %v1285
        %1287 = vmatprep.mubr.f32.mxu0 %v1209
        %1288 = vmatmul.mubr.f32.gmra.mxu0 %v1092
        %v1289 = vpop.f32.mrf.mxu0
        %v1290 = vadd.f32 0.0, %v1289
        %v1291 = vpop.f32.mrf.mxu0
        %v1292 = vadd.f32 0.0, %v1291
        %1293 = vmatprep.mubr.f32.mxu0 %v1212
        %1294 = vmatmul.mubr.f32.gmra.mxu0 %v1098
        %v1295 = vpop.f32.mrf.mxu0
        %v1296 = vadd.f32 0.0, %v1295
        %v1297 = vpop.f32.mrf.mxu0
        %v1298 = vadd.f32 0.0, %v1297
        %1299 = vmatprep.mubr.f32.mxu0 %v1215
        %1300 = vmatmul.mubr.f32.gmra.mxu0 %v1104
        %v1301 = vpop.f32.mrf.mxu0
        %v1302 = vadd.f32 0.0, %v1301
        %v1303 = vpop.f32.mrf.mxu0
        %v1304 = vadd.f32 0.0, %v1303
        %1305 = vdwg.mxu0
        %1306 = vmatprep.subr.mxu0 %v1172
        %1307 = vmatpush1.msra.mxu0 %v1171
        %1308 = vmatprep.subr.mxu0 %v1168
        %1309 = vmatpush1.msra.mxu0 %v1167
        %1310 = vmatprep.subr.mxu0 %v1164
        %1311 = vmatpush1.msra.mxu0 %v1163
        %1312 = vmatprep.subr.mxu0 %v1160
        %1313 = vmatpush1.msra.mxu0 %v1159
        %1314 = vmatprep.subr.mxu0 %v1156
        %1315 = vmatpush1.msra.mxu0 %v1155
        %1316 = vmatprep.subr.mxu0 %v1152
        %1317 = vmatpush1.msra.mxu0 %v1151
        %1318 = vmatprep.subr.mxu0 %v1148
        %1319 = vmatpush1.msra.mxu0 %v1147
        %1320 = vmatprep.subr.mxu0 %v1144
        %1321 = vmatpush1.msra.mxu0 %v1143
        %1322 = vmatprep.subr.mxu0 %v1140
        %1323 = vmatpush1.msra.mxu0 %v1139
        %1324 = vmatprep.subr.mxu0 %v1136
        %1325 = vmatpush1.msra.mxu0 %v1135
        %1326 = vmatprep.subr.mxu0 %v1132
        %1327 = vmatpush1.msra.mxu0 %v1131
        %1328 = vmatprep.subr.mxu0 %v1128
        %1329 = vmatpush1.msra.mxu0 %v1127
        %1330 = vmatprep.subr.mxu0 %v1124
        %1331 = vmatpush1.msra.mxu0 %v1123
        %1332 = vmatprep.subr.mxu0 %v1120
        %1333 = vmatpush1.msra.mxu0 %v1119
        %1334 = vmatprep.subr.mxu0 %v1116
        %1335 = vmatpush1.msra.mxu0 %v1115
        %1336 = vmatprep.subr.mxu0 %v1112
        %1337 = vmatpush1.msra.mxu0 %v1111
        %1338 = vmatprep.subr.mxu0 0.0
        %1339 = vmatpush2.msra.mxu0 0.0
        %1340 = vmatprep.subr.mxu0 0.0
        %1341 = vmatpush2.msra.mxu0 0.0
        %1342 = vmatprep.subr.mxu0 0.0
        %1343 = vmatpush2.msra.mxu0 0.0
        %1344 = vmatprep.subr.mxu0 0.0
        %1345 = vmatpush2.msra.mxu0 0.0
        %1346 = vmatprep.subr.mxu0 0.0
        %1347 = vmatpush2.msra.mxu0 0.0
        %1348 = vmatprep.subr.mxu0 0.0
        %1349 = vmatpush2.msra.mxu0 0.0
        %1350 = vmatprep.subr.mxu0 0.0
        %1351 = vmatpush2.msra.mxu0 0.0
        %1352 = vmatprep.subr.mxu0 0.0
        %1353 = vmatpush2.msra.mxu0 0.0
        %1354 = vmatprep.subr.mxu0 %v1204
        %1355 = vmatpush2.msra.mxu0 %v1203
        %1356 = vmatprep.subr.mxu0 %v1200
        %1357 = vmatpush2.msra.mxu0 %v1199
        %1358 = vmatprep.subr.mxu0 %v1196
        %1359 = vmatpush2.msra.mxu0 %v1195
        %1360 = vmatprep.subr.mxu0 %v1192
        %1361 = vmatpush2.msra.mxu0 %v1191
        %1362 = vmatprep.subr.mxu0 %v1188
        %1363 = vmatpush2.msra.mxu0 %v1187
        %1364 = vmatprep.subr.mxu0 %v1184
        %1365 = vmatpush2.msra.mxu0 %v1183
        %1366 = vmatprep.subr.mxu0 %v1180
        %1367 = vmatpush2.msra.mxu0 %v1179
        %1368 = vmatprep.subr.mxu0 %v1176
        %1369 = vmatpush2.msra.mxu0 %v1175
        %1370 = vmatprep.mubr.f32.mxu0 %v1206
        %1371 = vmatmul.mubr.f32.gmra.mxu0 %v1086
        %v1372 = vpop.f32.mrf.mxu0
        %v1373 = vadd.f32 0.0, %v1372
        %v1374 = vpop.f32.mrf.mxu0
        %v1375 = vadd.f32 0.0, %v1374
        %1376 = vmatprep.mubr.f32.mxu0 %v1209
        %1377 = vmatmul.mubr.f32.gmra.mxu0 %v1092
        %v1378 = vpop.f32.mrf.mxu0
        %v1379 = vadd.f32 0.0, %v1378
        %v1380 = vpop.f32.mrf.mxu0
        %v1381 = vadd.f32 0.0, %v1380
        %1382 = vmatprep.mubr.f32.mxu0 %v1212
        %1383 = vmatmul.mubr.f32.gmra.mxu0 %v1098
        %v1384 = vpop.f32.mrf.mxu0
        %v1385 = vadd.f32 0.0, %v1384
        %v1386 = vpop.f32.mrf.mxu0
        %v1387 = vadd.f32 0.0, %v1386
        %1388 = vmatprep.mubr.f32.mxu0 %v1215
        %1389 = vmatmul.mubr.f32.gmra.mxu0 %v1104
        %v1390 = vpop.f32.mrf.mxu0
        %v1391 = vadd.f32 0.0, %v1390
        %v1392 = vpop.f32.mrf.mxu0
        %v1393 = vadd.f32 0.0, %v1392
        %1394 = vdwg.mxu0
        %v1396 = vsel %vm804, %v886, 0
        %v1399 = vsel %vm804, %v892, 0
        %v1402 = vsel %vm804, %v898, 0
        %v1405 = vsel %vm804, %v904, 0
        %1407 = vmatprep.subr.mxu0 %v967
        %1408 = vmatpush1.msra.mxu0 %v966
        %1409 = vmatprep.subr.mxu0 %v963
        %1410 = vmatpush1.msra.mxu0 %v962
        %1411 = vmatprep.subr.mxu0 %v959
        %1412 = vmatpush1.msra.mxu0 %v958
        %1413 = vmatprep.subr.mxu0 %v955
        %1414 = vmatpush1.msra.mxu0 %v954
        %1415 = vmatprep.subr.mxu0 %v951
        %1416 = vmatpush1.msra.mxu0 %v950
        %1417 = vmatprep.subr.mxu0 %v947
        %1418 = vmatpush1.msra.mxu0 %v946
        %1419 = vmatprep.subr.mxu0 %v943
        %1420 = vmatpush1.msra.mxu0 %v942
        %1421 = vmatprep.subr.mxu0 %v939
        %1422 = vmatpush1.msra.mxu0 %v938
        %1423 = vmatprep.subr.mxu0 %v935
        %1424 = vmatpush1.msra.mxu0 %v934
        %1425 = vmatprep.subr.mxu0 %v931
        %1426 = vmatpush1.msra.mxu0 %v930
        %1427 = vmatprep.subr.mxu0 %v927
        %1428 = vmatpush1.msra.mxu0 %v926
        %1429 = vmatprep.subr.mxu0 %v923
        %1430 = vmatpush1.msra.mxu0 %v922
        %1431 = vmatprep.subr.mxu0 %v919
        %1432 = vmatpush1.msra.mxu0 %v918
        %1433 = vmatprep.subr.mxu0 %v915
        %1434 = vmatpush1.msra.mxu0 %v914
        %1435 = vmatprep.subr.mxu0 %v911
        %1436 = vmatpush1.msra.mxu0 %v910
        %1437 = vmatprep.subr.mxu0 %v907
        %1438 = vmatpush1.msra.mxu0 %v906
        %1439 = vmatprep.subr.mxu0 0.0
        %1440 = vmatpush2.msra.mxu0 0.0
        %1441 = vmatprep.subr.mxu0 0.0
        %1442 = vmatpush2.msra.mxu0 0.0
        %1443 = vmatprep.subr.mxu0 0.0
        %1444 = vmatpush2.msra.mxu0 0.0
        %1445 = vmatprep.subr.mxu0 0.0
        %1446 = vmatpush2.msra.mxu0 0.0
        %1447 = vmatprep.subr.mxu0 0.0
        %1448 = vmatpush2.msra.mxu0 0.0
        %1449 = vmatprep.subr.mxu0 0.0
        %1450 = vmatpush2.msra.mxu0 0.0
        %1451 = vmatprep.subr.mxu0 0.0
        %1452 = vmatpush2.msra.mxu0 0.0
        %1453 = vmatprep.subr.mxu0 0.0
        %1454 = vmatpush2.msra.mxu0 0.0
        %1455 = vmatprep.subr.mxu0 %v999
        %1456 = vmatpush2.msra.mxu0 %v998
        %1457 = vmatprep.subr.mxu0 %v995
        %1458 = vmatpush2.msra.mxu0 %v994
        %1459 = vmatprep.subr.mxu0 %v991
        %1460 = vmatpush2.msra.mxu0 %v990
        %1461 = vmatprep.subr.mxu0 %v987
        %1462 = vmatpush2.msra.mxu0 %v986
        %1463 = vmatprep.subr.mxu0 %v983
        %1464 = vmatpush2.msra.mxu0 %v982
        %1465 = vmatprep.subr.mxu0 %v979
        %1466 = vmatpush2.msra.mxu0 %v978
        %1467 = vmatprep.subr.mxu0 %v975
        %1468 = vmatpush2.msra.mxu0 %v974
        %1469 = vmatprep.subr.mxu0 %v971
        %1470 = vmatpush2.msra.mxu0 %v970
        %1471 = vmatprep.mubr.f32.mxu0 %v1396
        %1472 = vmatmul.mubr.f32.gmra.mxu0 %v884
        %v1473 = vpop.f32.mrf.mxu0
        %v1474 = vadd.f32 %v1284, %v1473
        %v1475 = vpop.f32.mrf.mxu0
        %v1476 = vadd.f32 %v1286, %v1475
        %1477 = vmatprep.mubr.f32.mxu0 %v1399
        %1478 = vmatmul.mubr.f32.gmra.mxu0 %v890
        %v1479 = vpop.f32.mrf.mxu0
        %v1480 = vadd.f32 %v1290, %v1479
        %v1481 = vpop.f32.mrf.mxu0
        %v1482 = vadd.f32 %v1292, %v1481
        %1483 = vmatprep.mubr.f32.mxu0 %v1402
        %1484 = vmatmul.mubr.f32.gmra.mxu0 %v896
        %v1485 = vpop.f32.mrf.mxu0
        %v1486 = vadd.f32 %v1296, %v1485
        %v1487 = vpop.f32.mrf.mxu0
        %v1488 = vadd.f32 %v1298, %v1487
        %1489 = vmatprep.mubr.f32.mxu0 %v1405
        %1490 = vmatmul.mubr.f32.gmra.mxu0 %v902
        %v1491 = vpop.f32.mrf.mxu0
        %v1492 = vadd.f32 %v1302, %v1491
        %v1493 = vpop.f32.mrf.mxu0
        %v1494 = vadd.f32 %v1304, %v1493
        %1495 = vdwg.mxu0
        %1496 = vmatprep.subr.mxu0 %v969
        %1497 = vmatpush1.msra.mxu0 %v968
        %1498 = vmatprep.subr.mxu0 %v965
        %1499 = vmatpush1.msra.mxu0 %v964
        %1500 = vmatprep.subr.mxu0 %v961
        %1501 = vmatpush1.msra.mxu0 %v960
        %1502 = vmatprep.subr.mxu0 %v957
        %1503 = vmatpush1.msra.mxu0 %v956
        %1504 = vmatprep.subr.mxu0 %v953
        %1505 = vmatpush1.msra.mxu0 %v952
        %1506 = vmatprep.subr.mxu0 %v949
        %1507 = vmatpush1.msra.mxu0 %v948
        %1508 = vmatprep.subr.mxu0 %v945
        %1509 = vmatpush1.msra.mxu0 %v944
        %1510 = vmatprep.subr.mxu0 %v941
        %1511 = vmatpush1.msra.mxu0 %v940
        %1512 = vmatprep.subr.mxu0 %v937
        %1513 = vmatpush1.msra.mxu0 %v936
        %1514 = vmatprep.subr.mxu0 %v933
        %1515 = vmatpush1.msra.mxu0 %v932
        %1516 = vmatprep.subr.mxu0 %v929
        %1517 = vmatpush1.msra.mxu0 %v928
        %1518 = vmatprep.subr.mxu0 %v925
        %1519 = vmatpush1.msra.mxu0 %v924
        %1520 = vmatprep.subr.mxu0 %v921
        %1521 = vmatpush1.msra.mxu0 %v920
        %1522 = vmatprep.subr.mxu0 %v917
        %1523 = vmatpush1.msra.mxu0 %v916
        %1524 = vmatprep.subr.mxu0 %v913
        %1525 = vmatpush1.msra.mxu0 %v912
        %1526 = vmatprep.subr.mxu0 %v909
        %1527 = vmatpush1.msra.mxu0 %v908
        %1528 = vmatprep.subr.mxu0 0.0
        %1529 = vmatpush2.msra.mxu0 0.0
        %1530 = vmatprep.subr.mxu0 0.0
        %1531 = vmatpush2.msra.mxu0 0.0
        %1532 = vmatprep.subr.mxu0 0.0
        %1533 = vmatpush2.msra.mxu0 0.0
        %1534 = vmatprep.subr.mxu0 0.0
        %1535 = vmatpush2.msra.mxu0 0.0
        %1536 = vmatprep.subr.mxu0 0.0
        %1537 = vmatpush2.msra.mxu0 0.0
        %1538 = vmatprep.subr.mxu0 0.0
        %1539 = vmatpush2.msra.mxu0 0.0
        %1540 = vmatprep.subr.mxu0 0.0
        %1541 = vmatpush2.msra.mxu0 0.0
        %1542 = vmatprep.subr.mxu0 0.0
        %1543 = vmatpush2.msra.mxu0 0.0
        %1544 = vmatprep.subr.mxu0 %v1001
        %1545 = vmatpush2.msra.mxu0 %v1000
        %1546 = vmatprep.subr.mxu0 %v997
        %1547 = vmatpush2.msra.mxu0 %v996
        %1548 = vmatprep.subr.mxu0 %v993
        %1549 = vmatpush2.msra.mxu0 %v992
        %1550 = vmatprep.subr.mxu0 %v989
        %1551 = vmatpush2.msra.mxu0 %v988
        %1552 = vmatprep.subr.mxu0 %v985
        %1553 = vmatpush2.msra.mxu0 %v984
        %1554 = vmatprep.subr.mxu0 %v981
        %1555 = vmatpush2.msra.mxu0 %v980
        %1556 = vmatprep.subr.mxu0 %v977
        %1557 = vmatpush2.msra.mxu0 %v976
        %1558 = vmatprep.subr.mxu0 %v973
        %1559 = vmatpush2.msra.mxu0 %v972
        %1560 = vmatprep.mubr.f32.mxu0 %v1396
        %1561 = vmatmul.mubr.f32.gmra.mxu0 %v884
        %v1562 = vpop.f32.mrf.mxu0
        %v1563 = vadd.f32 %v1373, %v1562
        %v1564 = vpop.f32.mrf.mxu0
        %v1565 = vadd.f32 %v1375, %v1564
        %1566 = vmatprep.mubr.f32.mxu0 %v1399
        %1567 = vmatmul.mubr.f32.gmra.mxu0 %v890
        %v1568 = vpop.f32.mrf.mxu0
        %v1569 = vadd.f32 %v1379, %v1568
        %v1570 = vpop.f32.mrf.mxu0
        %v1571 = vadd.f32 %v1381, %v1570
        %1572 = vmatprep.mubr.f32.mxu0 %v1402
        %1573 = vmatmul.mubr.f32.gmra.mxu0 %v896
        %v1574 = vpop.f32.mrf.mxu0
        %v1575 = vadd.f32 %v1385, %v1574
        %v1576 = vpop.f32.mrf.mxu0
        %v1577 = vadd.f32 %v1387, %v1576
        %1578 = vmatprep.mubr.f32.mxu0 %v1405
        %1579 = vmatmul.mubr.f32.gmra.mxu0 %v902
        %v1580 = vpop.f32.mrf.mxu0
        %v1581 = vadd.f32 %v1391, %v1580
        %v1582 = vpop.f32.mrf.mxu0
        %v1583 = vadd.f32 %v1393, %v1582
        %1584 = vdwg.mxu0
        %s1585 = scalar_lea.vmem %s2, 64
        %v1586 = vld [vmem:[%s1585] sm:$0xff]
        %v1587 = vld [vmem:[%s1585 + $0x8] sm:$0xff]
        %v1588 = vld [vmem:[%s1585 + $0x10] sm:$0xff]
        %v1589 = vld [vmem:[%s1585 + $0x18] sm:$0x7f]
        %v1591 = vsel %vm804, %v1586, 0
        %v1594 = vsel %vm804, %v1587, 0
        %v1597 = vsel %vm804, %v1588, 0
        %v1600 = vsel %vm804, %v1589, 0
        %1602 = vmatprep.subr.mxu0 0.0
        %1603 = vmatpush1.msra.mxu0 0.0
        %1604 = vmatprep.subr.mxu0 0.0
        %1605 = vmatpush1.msra.mxu0 0.0
        %1606 = vmatprep.subr.mxu0 0.0
        %1607 = vmatpush1.msra.mxu0 0.0
        %1608 = vmatprep.subr.mxu0 0.0
        %1609 = vmatpush1.msra.mxu0 0.0
        %1610 = vmatprep.subr.mxu0 0.0
        %1611 = vmatpush1.msra.mxu0 0.0
        %1612 = vmatprep.subr.mxu0 0.0
        %1613 = vmatpush1.msra.mxu0 0.0
        %1614 = vmatprep.subr.mxu0 0.0
        %1615 = vmatpush1.msra.mxu0 0.0
        %1616 = vmatprep.subr.mxu0 0.0
        %1617 = vmatpush1.msra.mxu0 0.0
        %1618 = vmatprep.subr.mxu0 %v799
        %1619 = vmatpush1.msra.mxu0 %v798
        %1620 = vmatprep.subr.mxu0 %v797
        %1621 = vmatpush1.msra.mxu0 %v796
        %1622 = vmatprep.subr.mxu0 %v795
        %1623 = vmatpush1.msra.mxu0 %v794
        %1624 = vmatprep.subr.mxu0 %v793
        %1625 = vmatpush1.msra.mxu0 %v792
        %1626 = vmatprep.subr.mxu0 %v791
        %1627 = vmatpush1.msra.mxu0 %v790
        %1628 = vmatprep.subr.mxu0 %v789
        %1629 = vmatpush1.msra.mxu0 %v788
        %1630 = vmatprep.subr.mxu0 %v787
        %1631 = vmatpush1.msra.mxu0 %v786
        %1632 = vmatprep.subr.mxu0 %v785
        %1633 = vmatpush1.msra.mxu0 %v784
        %1634 = vmatprep.subr.mxu0 0.0
        %1635 = vmatpush2.msra.mxu0 0.0
        %1636 = vmatprep.subr.mxu0 0.0
        %1637 = vmatpush2.msra.mxu0 0.0
        %1638 = vmatprep.subr.mxu0 0.0
        %1639 = vmatpush2.msra.mxu0 0.0
        %1640 = vmatprep.subr.mxu0 0.0
        %1641 = vmatpush2.msra.mxu0 0.0
        %1642 = vmatprep.subr.mxu0 0.0
        %1643 = vmatpush2.msra.mxu0 0.0
        %1644 = vmatprep.subr.mxu0 0.0
        %1645 = vmatpush2.msra.mxu0 0.0
        %1646 = vmatprep.subr.mxu0 0.0
        %1647 = vmatpush2.msra.mxu0 0.0
        %1648 = vmatprep.subr.mxu0 0.0
        %1649 = vmatpush2.msra.mxu0 0.0
        %1650 = vmatprep.subr.mxu0 0.0
        %1651 = vmatpush2.msra.mxu0 0.0
        %1652 = vmatprep.subr.mxu0 0.0
        %1653 = vmatpush2.msra.mxu0 0.0
        %1654 = vmatprep.subr.mxu0 0.0
        %1655 = vmatpush2.msra.mxu0 0.0
        %1656 = vmatprep.subr.mxu0 0.0
        %1657 = vmatpush2.msra.mxu0 0.0
        %1658 = vmatprep.subr.mxu0 0.0
        %1659 = vmatpush2.msra.mxu0 0.0
        %1660 = vmatprep.subr.mxu0 0.0
        %1661 = vmatpush2.msra.mxu0 0.0
        %1662 = vmatprep.subr.mxu0 0.0
        %1663 = vmatpush2.msra.mxu0 0.0
        %1664 = vmatprep.subr.mxu0 0.0
        %1665 = vmatpush2.msra.mxu0 0.0
        %1666 = vmatprep.mubr.f32.mxu0 0.0
        %1667 = vmatmul.mubr.f32.gmra.mxu0 %v1591
        %v1668 = vpop.f32.mrf.mxu0
        %v1669 = vadd.f32 0.0, %v1668
        %v1670 = vpop.f32.mrf.mxu0
        %v1671 = vadd.f32 0.0, %v1670
        %1672 = vmatprep.mubr.f32.mxu0 0.0
        %1673 = vmatmul.mubr.f32.gmra.mxu0 %v1594
        %v1674 = vpop.f32.mrf.mxu0
        %v1675 = vadd.f32 0.0, %v1674
        %v1676 = vpop.f32.mrf.mxu0
        %v1677 = vadd.f32 0.0, %v1676
        %1678 = vmatprep.mubr.f32.mxu0 0.0
        %1679 = vmatmul.mubr.f32.gmra.mxu0 %v1597
        %v1680 = vpop.f32.mrf.mxu0
        %v1681 = vadd.f32 0.0, %v1680
        %v1682 = vpop.f32.mrf.mxu0
        %v1683 = vadd.f32 0.0, %v1682
        %1684 = vmatprep.mubr.f32.mxu0 0.0
        %1685 = vmatmul.mubr.f32.gmra.mxu0 %v1600
        %v1686 = vpop.f32.mrf.mxu0
        %v1687 = vadd.f32 0.0, %v1686
        %v1688 = vpop.f32.mrf.mxu0
        %v1689 = vadd.f32 0.0, %v1688
        %1690 = vdwg.mxu0
        %s1691 = scalar_lea.vmem %s3, 1536
        %v1692 = vld [vmem:[%s1691] sm:$0xff]
        %v1693 = vld [vmem:[%s1691 + $0x8] sm:$0xff]
        %v1694 = vld [vmem:[%s1691 + $0x10] sm:$0xff]
        %v1695 = vld [vmem:[%s1691 + $0x18] sm:$0xff]
        %v1696 = vld [vmem:[%s1691 + $0x20] sm:$0xff]
        %v1697 = vld [vmem:[%s1691 + $0x28] sm:$0xff]
        %v1698 = vld [vmem:[%s1691 + $0x30] sm:$0xff]
        %v1699 = vld [vmem:[%s1691 + $0x38] sm:$0xff]
        %v1700 = vld [vmem:[%s1691 + $0x40] sm:$0xff]
        %v1701 = vld [vmem:[%s1691 + $0x48] sm:$0xff]
        %v1702 = vld [vmem:[%s1691 + $0x50] sm:$0xff]
        %v1703 = vld [vmem:[%s1691 + $0x58] sm:$0xff]
        %v1704 = vld [vmem:[%s1691 + $0x60] sm:$0xff]
        %v1705 = vld [vmem:[%s1691 + $0x68] sm:$0xff]
        %v1706 = vld [vmem:[%s1691 + $0x70] sm:$0xff]
        %v1707 = vld [vmem:[%s1691 + $0x78] sm:$0xff]
        %v1708 = vld [vmem:[%s1691 + $0x80] sm:$0xff]
        %v1709 = vld [vmem:[%s1691 + $0x88] sm:$0xff]
        %v1710 = vld [vmem:[%s1691 + $0x90] sm:$0xff]
        %v1711 = vld [vmem:[%s1691 + $0x98] sm:$0xff]
        %v1712 = vld [vmem:[%s1691 + $0xa0] sm:$0xff]
        %v1713 = vld [vmem:[%s1691 + $0xa8] sm:$0xff]
        %v1714 = vld [vmem:[%s1691 + $0xb0] sm:$0xff]
        %v1715 = vld [vmem:[%s1691 + $0xb8] sm:$0xff]
        %v1716 = vld [vmem:[%s1691 + $0xc0] sm:$0xff]
        %v1717 = vld [vmem:[%s1691 + $0xc8] sm:$0xff]
        %v1718 = vld [vmem:[%s1691 + $0xd0] sm:$0xff]
        %v1719 = vld [vmem:[%s1691 + $0xd8] sm:$0xff]
        %v1720 = vld [vmem:[%s1691 + $0xe0] sm:$0xff]
        %v1721 = vld [vmem:[%s1691 + $0xe8] sm:$0xff]
        %v1722 = vld [vmem:[%s1691 + $0xf0] sm:$0xff]
        %v1723 = vld [vmem:[%s1691 + $0xf8] sm:$0xff]
        %v1724 = vld [vmem:[%s1691 + $0x100] sm:$0xff]
        %v1725 = vld [vmem:[%s1691 + $0x108] sm:$0xff]
        %v1726 = vld [vmem:[%s1691 + $0x110] sm:$0xff]
        %v1727 = vld [vmem:[%s1691 + $0x118] sm:$0xff]
        %v1728 = vld [vmem:[%s1691 + $0x120] sm:$0xff]
        %v1729 = vld [vmem:[%s1691 + $0x128] sm:$0xff]
        %v1730 = vld [vmem:[%s1691 + $0x130] sm:$0xff]
        %v1731 = vld [vmem:[%s1691 + $0x138] sm:$0xff]
        %v1732 = vld [vmem:[%s1691 + $0x140] sm:$0xff]
        %v1733 = vld [vmem:[%s1691 + $0x148] sm:$0xff]
        %v1734 = vld [vmem:[%s1691 + $0x150] sm:$0xff]
        %v1735 = vld [vmem:[%s1691 + $0x158] sm:$0xff]
        %v1736 = vld [vmem:[%s1691 + $0x160] sm:$0xff]
        %v1737 = vld [vmem:[%s1691 + $0x168] sm:$0xff]
        %v1738 = vld [vmem:[%s1691 + $0x170] sm:$0xff]
        %v1739 = vld [vmem:[%s1691 + $0x178] sm:$0xff]
        %v1740 = vld [vmem:[%s1691 + $0x180] sm:$0xff]
        %v1741 = vld [vmem:[%s1691 + $0x188] sm:$0xff]
        %v1742 = vld [vmem:[%s1691 + $0x190] sm:$0xff]
        %v1743 = vld [vmem:[%s1691 + $0x198] sm:$0xff]
        %v1744 = vld [vmem:[%s1691 + $0x1a0] sm:$0xff]
        %v1745 = vld [vmem:[%s1691 + $0x1a8] sm:$0xff]
        %v1746 = vld [vmem:[%s1691 + $0x1b0] sm:$0xff]
        %v1747 = vld [vmem:[%s1691 + $0x1b8] sm:$0xff]
        %v1748 = vld [vmem:[%s1691 + $0x1c0] sm:$0xff]
        %v1749 = vld [vmem:[%s1691 + $0x1c8] sm:$0xff]
        %v1750 = vld [vmem:[%s1691 + $0x1d0] sm:$0xff]
        %v1751 = vld [vmem:[%s1691 + $0x1d8] sm:$0xff]
        %v1752 = vld [vmem:[%s1691 + $0x1e0] sm:$0xff]
        %v1753 = vld [vmem:[%s1691 + $0x1e8] sm:$0xff]
        %v1754 = vld [vmem:[%s1691 + $0x1f0] sm:$0xff]
        %v1755 = vld [vmem:[%s1691 + $0x1f8] sm:$0xff]
        %v1756 = vld [vmem:[%s1691 + $0x200] sm:$0xff]
        %v1757 = vld [vmem:[%s1691 + $0x208] sm:$0xff]
        %v1758 = vld [vmem:[%s1691 + $0x210] sm:$0xff]
        %v1759 = vld [vmem:[%s1691 + $0x218] sm:$0xff]
        %v1760 = vld [vmem:[%s1691 + $0x220] sm:$0xff]
        %v1761 = vld [vmem:[%s1691 + $0x228] sm:$0xff]
        %v1762 = vld [vmem:[%s1691 + $0x230] sm:$0xff]
        %v1763 = vld [vmem:[%s1691 + $0x238] sm:$0xff]
        %v1764 = vld [vmem:[%s1691 + $0x240] sm:$0xff]
        %v1765 = vld [vmem:[%s1691 + $0x248] sm:$0xff]
        %v1766 = vld [vmem:[%s1691 + $0x250] sm:$0xff]
        %v1767 = vld [vmem:[%s1691 + $0x258] sm:$0xff]
        %v1768 = vld [vmem:[%s1691 + $0x260] sm:$0xff]
        %v1769 = vld [vmem:[%s1691 + $0x268] sm:$0xff]
        %v1770 = vld [vmem:[%s1691 + $0x270] sm:$0xff]
        %v1771 = vld [vmem:[%s1691 + $0x278] sm:$0xff]
        %v1772 = vld [vmem:[%s1691 + $0x280] sm:$0xff]
        %v1773 = vld [vmem:[%s1691 + $0x288] sm:$0xff]
        %v1774 = vld [vmem:[%s1691 + $0x290] sm:$0xff]
        %v1775 = vld [vmem:[%s1691 + $0x298] sm:$0xff]
        %v1776 = vld [vmem:[%s1691 + $0x2a0] sm:$0xff]
        %v1777 = vld [vmem:[%s1691 + $0x2a8] sm:$0xff]
        %v1778 = vld [vmem:[%s1691 + $0x2b0] sm:$0xff]
        %v1779 = vld [vmem:[%s1691 + $0x2b8] sm:$0xff]
        %v1780 = vld [vmem:[%s1691 + $0x2c0] sm:$0xff]
        %v1781 = vld [vmem:[%s1691 + $0x2c8] sm:$0xff]
        %v1782 = vld [vmem:[%s1691 + $0x2d0] sm:$0xff]
        %v1783 = vld [vmem:[%s1691 + $0x2d8] sm:$0xff]
        %v1784 = vld [vmem:[%s1691 + $0x2e0] sm:$0xff]
        %v1785 = vld [vmem:[%s1691 + $0x2e8] sm:$0xff]
        %v1786 = vld [vmem:[%s1691 + $0x2f0] sm:$0xff]
        %v1787 = vld [vmem:[%s1691 + $0x2f8] sm:$0xff]
        %v1789 = vsel %vm804, %v1671, 0
        %v1792 = vsel %vm804, %v1677, 0
        %v1795 = vsel %vm804, %v1683, 0
        %v1798 = vsel %vm804, %v1689, 0
        %1800 = vmatprep.subr.mxu0 %v1753
        %1801 = vmatpush1.msra.mxu0 %v1752
        %1802 = vmatprep.subr.mxu0 %v1749
        %1803 = vmatpush1.msra.mxu0 %v1748
        %1804 = vmatprep.subr.mxu0 %v1745
        %1805 = vmatpush1.msra.mxu0 %v1744
        %1806 = vmatprep.subr.mxu0 %v1741
        %1807 = vmatpush1.msra.mxu0 %v1740
        %1808 = vmatprep.subr.mxu0 %v1737
        %1809 = vmatpush1.msra.mxu0 %v1736
        %1810 = vmatprep.subr.mxu0 %v1733
        %1811 = vmatpush1.msra.mxu0 %v1732
        %1812 = vmatprep.subr.mxu0 %v1729
        %1813 = vmatpush1.msra.mxu0 %v1728
        %1814 = vmatprep.subr.mxu0 %v1725
        %1815 = vmatpush1.msra.mxu0 %v1724
        %1816 = vmatprep.subr.mxu0 %v1721
        %1817 = vmatpush1.msra.mxu0 %v1720
        %1818 = vmatprep.subr.mxu0 %v1717
        %1819 = vmatpush1.msra.mxu0 %v1716
        %1820 = vmatprep.subr.mxu0 %v1713
        %1821 = vmatpush1.msra.mxu0 %v1712
        %1822 = vmatprep.subr.mxu0 %v1709
        %1823 = vmatpush1.msra.mxu0 %v1708
        %1824 = vmatprep.subr.mxu0 %v1705
        %1825 = vmatpush1.msra.mxu0 %v1704
        %1826 = vmatprep.subr.mxu0 %v1701
        %1827 = vmatpush1.msra.mxu0 %v1700
        %1828 = vmatprep.subr.mxu0 %v1697
        %1829 = vmatpush1.msra.mxu0 %v1696
        %1830 = vmatprep.subr.mxu0 %v1693
        %1831 = vmatpush1.msra.mxu0 %v1692
        %1832 = vmatprep.subr.mxu0 0.0
        %1833 = vmatpush2.msra.mxu0 0.0
        %1834 = vmatprep.subr.mxu0 0.0
        %1835 = vmatpush2.msra.mxu0 0.0
        %1836 = vmatprep.subr.mxu0 0.0
        %1837 = vmatpush2.msra.mxu0 0.0
        %1838 = vmatprep.subr.mxu0 0.0
        %1839 = vmatpush2.msra.mxu0 0.0
        %1840 = vmatprep.subr.mxu0 0.0
        %1841 = vmatpush2.msra.mxu0 0.0
        %1842 = vmatprep.subr.mxu0 0.0
        %1843 = vmatpush2.msra.mxu0 0.0
        %1844 = vmatprep.subr.mxu0 0.0
        %1845 = vmatpush2.msra.mxu0 0.0
        %1846 = vmatprep.subr.mxu0 0.0
        %1847 = vmatpush2.msra.mxu0 0.0
        %1848 = vmatprep.subr.mxu0 %v1785
        %1849 = vmatpush2.msra.mxu0 %v1784
        %1850 = vmatprep.subr.mxu0 %v1781
        %1851 = vmatpush2.msra.mxu0 %v1780
        %1852 = vmatprep.subr.mxu0 %v1777
        %1853 = vmatpush2.msra.mxu0 %v1776
        %1854 = vmatprep.subr.mxu0 %v1773
        %1855 = vmatpush2.msra.mxu0 %v1772
        %1856 = vmatprep.subr.mxu0 %v1769
        %1857 = vmatpush2.msra.mxu0 %v1768
        %1858 = vmatprep.subr.mxu0 %v1765
        %1859 = vmatpush2.msra.mxu0 %v1764
        %1860 = vmatprep.subr.mxu0 %v1761
        %1861 = vmatpush2.msra.mxu0 %v1760
        %1862 = vmatprep.subr.mxu0 %v1757
        %1863 = vmatpush2.msra.mxu0 %v1756
        %1864 = vmatprep.mubr.f32.mxu0 %v1789
        %1865 = vmatmul.mubr.f32.gmra.mxu0 %v1669
        %v1866 = vpop.f32.mrf.mxu0
        %v1867 = vadd.f32 0.0, %v1866
        %v1868 = vpop.f32.mrf.mxu0
        %v1869 = vadd.f32 0.0, %v1868
        %1870 = vmatprep.mubr.f32.mxu0 %v1792
        %1871 = vmatmul.mubr.f32.gmra.mxu0 %v1675
        %v1872 = vpop.f32.mrf.mxu0
        %v1873 = vadd.f32 0.0, %v1872
        %v1874 = vpop.f32.mrf.mxu0
        %v1875 = vadd.f32 0.0, %v1874
        %1876 = vmatprep.mubr.f32.mxu0 %v1795
        %1877 = vmatmul.mubr.f32.gmra.mxu0 %v1681
        %v1878 = vpop.f32.mrf.mxu0
        %v1879 = vadd.f32 0.0, %v1878
        %v1880 = vpop.f32.mrf.mxu0
        %v1881 = vadd.f32 0.0, %v1880
        %1882 = vmatprep.mubr.f32.mxu0 %v1798
        %1883 = vmatmul.mubr.f32.gmra.mxu0 %v1687
        %v1884 = vpop.f32.mrf.mxu0
        %v1885 = vadd.f32 0.0, %v1884
        %v1886 = vpop.f32.mrf.mxu0
        %v1887 = vadd.f32 0.0, %v1886
        %1888 = vdwg.mxu0
        %1889 = vmatprep.subr.mxu0 %v1755
        %1890 = vmatpush1.msra.mxu0 %v1754
        %1891 = vmatprep.subr.mxu0 %v1751
        %1892 = vmatpush1.msra.mxu0 %v1750
        %1893 = vmatprep.subr.mxu0 %v1747
        %1894 = vmatpush1.msra.mxu0 %v1746
        %1895 = vmatprep.subr.mxu0 %v1743
        %1896 = vmatpush1.msra.mxu0 %v1742
        %1897 = vmatprep.subr.mxu0 %v1739
        %1898 = vmatpush1.msra.mxu0 %v1738
        %1899 = vmatprep.subr.mxu0 %v1735
        %1900 = vmatpush1.msra.mxu0 %v1734
        %1901 = vmatprep.subr.mxu0 %v1731
        %1902 = vmatpush1.msra.mxu0 %v1730
        %1903 = vmatprep.subr.mxu0 %v1727
        %1904 = vmatpush1.msra.mxu0 %v1726
        %1905 = vmatprep.subr.mxu0 %v1723
        %1906 = vmatpush1.msra.mxu0 %v1722
        %1907 = vmatprep.subr.mxu0 %v1719
        %1908 = vmatpush1.msra.mxu0 %v1718
        %1909 = vmatprep.subr.mxu0 %v1715
        %1910 = vmatpush1.msra.mxu0 %v1714
        %1911 = vmatprep.subr.mxu0 %v1711
        %1912 = vmatpush1.msra.mxu0 %v1710
        %1913 = vmatprep.subr.mxu0 %v1707
        %1914 = vmatpush1.msra.mxu0 %v1706
        %1915 = vmatprep.subr.mxu0 %v1703
        %1916 = vmatpush1.msra.mxu0 %v1702
        %1917 = vmatprep.subr.mxu0 %v1699
        %1918 = vmatpush1.msra.mxu0 %v1698
        %1919 = vmatprep.subr.mxu0 %v1695
        %1920 = vmatpush1.msra.mxu0 %v1694
        %1921 = vmatprep.subr.mxu0 0.0
        %1922 = vmatpush2.msra.mxu0 0.0
        %1923 = vmatprep.subr.mxu0 0.0
        %1924 = vmatpush2.msra.mxu0 0.0
        %1925 = vmatprep.subr.mxu0 0.0
        %1926 = vmatpush2.msra.mxu0 0.0
        %1927 = vmatprep.subr.mxu0 0.0
        %1928 = vmatpush2.msra.mxu0 0.0
        %1929 = vmatprep.subr.mxu0 0.0
        %1930 = vmatpush2.msra.mxu0 0.0
        %1931 = vmatprep.subr.mxu0 0.0
        %1932 = vmatpush2.msra.mxu0 0.0
        %1933 = vmatprep.subr.mxu0 0.0
        %1934 = vmatpush2.msra.mxu0 0.0
        %1935 = vmatprep.subr.mxu0 0.0
        %1936 = vmatpush2.msra.mxu0 0.0
        %1937 = vmatprep.subr.mxu0 %v1787
        %1938 = vmatpush2.msra.mxu0 %v1786
        %1939 = vmatprep.subr.mxu0 %v1783
        %1940 = vmatpush2.msra.mxu0 %v1782
        %1941 = vmatprep.subr.mxu0 %v1779
        %1942 = vmatpush2.msra.mxu0 %v1778
        %1943 = vmatprep.subr.mxu0 %v1775
        %1944 = vmatpush2.msra.mxu0 %v1774
        %1945 = vmatprep.subr.mxu0 %v1771
        %1946 = vmatpush2.msra.mxu0 %v1770
        %1947 = vmatprep.subr.mxu0 %v1767
        %1948 = vmatpush2.msra.mxu0 %v1766
        %1949 = vmatprep.subr.mxu0 %v1763
        %1950 = vmatpush2.msra.mxu0 %v1762
        %1951 = vmatprep.subr.mxu0 %v1759
        %1952 = vmatpush2.msra.mxu0 %v1758
        %1953 = vmatprep.mubr.f32.mxu0 %v1789
        %1954 = vmatmul.mubr.f32.gmra.mxu0 %v1669
        %v1955 = vpop.f32.mrf.mxu0
        %v1956 = vadd.f32 0.0, %v1955
        %v1957 = vpop.f32.mrf.mxu0
        %v1958 = vadd.f32 0.0, %v1957
        %1959 = vmatprep.mubr.f32.mxu0 %v1792
        %1960 = vmatmul.mubr.f32.gmra.mxu0 %v1675
        %v1961 = vpop.f32.mrf.mxu0
        %v1962 = vadd.f32 0.0, %v1961
        %v1963 = vpop.f32.mrf.mxu0
        %v1964 = vadd.f32 0.0, %v1963
        %1965 = vmatprep.mubr.f32.mxu0 %v1795
        %1966 = vmatmul.mubr.f32.gmra.mxu0 %v1681
        %v1967 = vpop.f32.mrf.mxu0
        %v1968 = vadd.f32 0.0, %v1967
        %v1969 = vpop.f32.mrf.mxu0
        %v1970 = vadd.f32 0.0, %v1969
        %1971 = vmatprep.mubr.f32.mxu0 %v1798
        %1972 = vmatmul.mubr.f32.gmra.mxu0 %v1687
        %v1973 = vpop.f32.mrf.mxu0
        %v1974 = vadd.f32 0.0, %v1973
        %v1975 = vpop.f32.mrf.mxu0
        %v1976 = vadd.f32 0.0, %v1975
        %1977 = vdwg.mxu0
        %v1978 = vadd.f32 %v1474, %v1867
        %v1979 = vadd.f32 %v1476, %v1869
        %v1980 = vadd.f32 %v1563, %v1956
        %v1981 = vadd.f32 %v1565, %v1958
        %v1982 = vadd.f32 %v1480, %v1873
        %v1983 = vadd.f32 %v1482, %v1875
        %v1984 = vadd.f32 %v1569, %v1962
        %v1985 = vadd.f32 %v1571, %v1964
        %v1986 = vadd.f32 %v1486, %v1879
        %v1987 = vadd.f32 %v1488, %v1881
        %v1988 = vadd.f32 %v1575, %v1968
        %v1989 = vadd.f32 %v1577, %v1970
        %v1990 = vadd.f32 %v1492, %v1885
        %v1991 = vadd.f32 %v1494, %v1887
        %v1992 = vadd.f32 %v1581, %v1974
        %v1993 = vadd.f32 %v1583, %v1976
        %v1994 = vld [vmem:[%s4] sm:$0xf]
        %v1996 = vlaneseq
        %v1997 = vshrl.u32 %v1996, 7
        %v1998 = vsub.s32 0, %v1997
        %v1999 = vrot.slane %v1994, %v1998
        %v2000 = vlaneseq
        %v2001 = vshrl.u32 %v2000, 7
        %v2002 = vsub.s32 1, %v2001
        %v2003 = vrot.slane %v1994, %v2002
        %v2004 = vlaneseq
        %v2005 = vshrl.u32 %v2004, 7
        %v2006 = vsub.s32 2, %v2005
        %v2007 = vrot.slane %v1994, %v2006
        %v2008 = vlaneseq
        %v2009 = vshrl.u32 %v2008, 7
        %v2010 = vsub.s32 3, %v2009
        %v2011 = vrot.slane %v1994, %v2010
        %v2016 = vadd.f32 %v1978, %v1999
        %v2017 = vadd.f32 %v1979, %v2003
        %v2018 = vadd.f32 %v1980, %v2007
        %v2019 = vadd.f32 %v1981, %v2011
        %v2020 = vadd.f32 %v1982, %v1999
        %v2021 = vadd.f32 %v1983, %v2003
        %v2022 = vadd.f32 %v1984, %v2007
        %v2023 = vadd.f32 %v1985, %v2011
        %v2024 = vadd.f32 %v1986, %v1999
        %v2025 = vadd.f32 %v1987, %v2003
        %v2026 = vadd.f32 %v1988, %v2007
        %v2027 = vadd.f32 %v1989, %v2011
        %v2028 = vadd.f32 %v1990, %v1999
        %v2029 = vadd.f32 %v1991, %v2003
        %v2030 = vadd.f32 %v1992, %v2007
        %v2031 = vadd.f32 %v1993, %v2011
        %v2032 = vadd.f32 %v2016, %v2017
        %v2033 = vadd.f32 %v2032, %v2018
        %vm2034 = vcmask 916480
        %v2035 = vsel %vm2034, %v2019, 0.0
        %v2036 = vadd.f32 %v2033, %v2035
        %v2037 = vadd.f32 %v2036, %v2020
        %v2038 = vadd.f32 %v2037, %v2021
        %v2039 = vadd.f32 %v2038, %v2022
        %v2040 = vsel %vm2034, %v2023, 0.0
        %v2041 = vadd.f32 %v2039, %v2040
        %v2042 = vadd.f32 %v2041, %v2024
        %v2043 = vadd.f32 %v2042, %v2025
        %v2044 = vadd.f32 %v2043, %v2026
        %v2045 = vsel %vm2034, %v2027, 0.0
        %v2046 = vadd.f32 %v2044, %v2045
        %vm2047 = vcmask 1046528
        %v2048 = vsel %vm2047, %v2028, 0.0
        %v2049 = vadd.f32 %v2046, %v2048
        %v2050 = vsel %vm2047, %v2029, 0.0
        %v2051 = vadd.f32 %v2049, %v2050
        %v2052 = vsel %vm2047, %v2030, 0.0
        %v2053 = vadd.f32 %v2051, %v2052
        %vm2054 = vcmask 915456
        %v2055 = vsel %vm2054, %v2031, 0.0
        %v2056 = vadd.f32 %v2053, %v2055
        %2057 = vadd.xlane.f32.xlu0 %v2056
        %v2058 = vpop.xlane.xlu0 %2057
        %v2059 = vrot.slane %v2058, 4
        %v2060 = vadd.f32 %v2058, %v2059
        %v2061 = vrot.slane %v2060, 2
        %v2062 = vadd.f32 %v2060, %v2061
        %v2063 = vrot.slane %v2062, 1
        %v2064 = vadd.f32 %v2062, %v2063
        %s2065 = vtos %v2064
        %v2066 = vrcp.pop 15376.0
        %s2067 = vtos %v2066
        %s2068 = smul.f32 %s2065, %s2067
        %v2069 = vstv %s2068
        %v2070 = vsub.f32 %v2016, %v2069
        %v2071 = vsub.f32 %v2017, %v2069
        %v2072 = vsub.f32 %v2018, %v2069
        %v2073 = vsub.f32 %v2019, %v2069
        %v2074 = vsub.f32 %v2020, %v2069
        %v2075 = vsub.f32 %v2021, %v2069
        %v2076 = vsub.f32 %v2022, %v2069
        %v2077 = vsub.f32 %v2023, %v2069
        %v2078 = vsub.f32 %v2024, %v2069
        %v2079 = vsub.f32 %v2025, %v2069
        %v2080 = vsub.f32 %v2026, %v2069
        %v2081 = vsub.f32 %v2027, %v2069
        %v2082 = vsub.f32 %v2028, %v2069
        %v2083 = vsub.f32 %v2029, %v2069
        %v2084 = vsub.f32 %v2030, %v2069
        %v2085 = vsub.f32 %v2031, %v2069
        %v2086 = vmul.f32 %v2070, %v2070
        %v2087 = vmul.f32 %v2071, %v2071
        %v2088 = vmul.f32 %v2072, %v2072
        %v2089 = vmul.f32 %v2073, %v2073
        %v2090 = vmul.f32 %v2074, %v2074
        %v2091 = vmul.f32 %v2075, %v2075
        %v2092 = vmul.f32 %v2076, %v2076
        %v2093 = vmul.f32 %v2077, %v2077
        %v2094 = vmul.f32 %v2078, %v2078
        %v2095 = vmul.f32 %v2079, %v2079
        %v2096 = vmul.f32 %v2080, %v2080
        %v2097 = vmul.f32 %v2081, %v2081
        %v2098 = vmul.f32 %v2082, %v2082
        %v2099 = vmul.f32 %v2083, %v2083
        %v2100 = vmul.f32 %v2084, %v2084
        %v2101 = vmul.f32 %v2085, %v2085
        %v2102 = vadd.f32 %v2086, %v2087
        %v2103 = vadd.f32 %v2102, %v2088
        %v2104 = vsel %vm2034, %v2089, 0.0
        %v2105 = vadd.f32 %v2103, %v2104
        %v2106 = vadd.f32 %v2105, %v2090
        %v2107 = vadd.f32 %v2106, %v2091
        %v2108 = vadd.f32 %v2107, %v2092
        %v2109 = vsel %vm2034, %v2093, 0.0
        %v2110 = vadd.f32 %v2108, %v2109
        %v2111 = vadd.f32 %v2110, %v2094
        %v2112 = vadd.f32 %v2111, %v2095
        %v2113 = vadd.f32 %v2112, %v2096
        %v2114 = vsel %vm2034, %v2097, 0.0
        %v2115 = vadd.f32 %v2113, %v2114
        %v2116 = vsel %vm2047, %v2098, 0.0
        %v2117 = vadd.f32 %v2115, %v2116
        %v2118 = vsel %vm2047, %v2099, 0.0
        %v2119 = vadd.f32 %v2117, %v2118
        %v2120 = vsel %vm2047, %v2100, 0.0
        %v2121 = vadd.f32 %v2119, %v2120
        %v2122 = vsel %vm2054, %v2101, 0.0
        %v2123 = vadd.f32 %v2121, %v2122
        %2124 = vadd.xlane.f32.xlu0 %v2123
        %v2125 = vpop.xlane.xlu0 %2124
        %v2126 = vrot.slane %v2125, 4
        %v2127 = vadd.f32 %v2125, %v2126
        %v2128 = vrot.slane %v2127, 2
        %v2129 = vadd.f32 %v2127, %v2128
        %v2130 = vrot.slane %v2129, 1
        %v2131 = vadd.f32 %v2129, %v2130
        %s2132 = vtos %v2131
        %v2133 = vrcp.pop 15376.0
        %s2134 = vtos %v2133
        %s2135 = smul.f32 %s2132, %s2134
        %s2136 = sadd.f32 %s2135, 1e-05
        %v2137 = vstv %s2136
        %v2138 = vrsqrt.pop %v2137
        %s2139 = vtos %v2138
        %v2140 = vstv %s2139
        %v2141 = vmul.f32 %v2070, %v2140
        %v2142 = vmul.f32 %v2071, %v2140
        %v2143 = vmul.f32 %v2072, %v2140
        %v2144 = vmul.f32 %v2073, %v2140
        %v2145 = vmul.f32 %v2074, %v2140
        %v2146 = vmul.f32 %v2075, %v2140
        %v2147 = vmul.f32 %v2076, %v2140
        %v2148 = vmul.f32 %v2077, %v2140
        %v2149 = vmul.f32 %v2078, %v2140
        %v2150 = vmul.f32 %v2079, %v2140
        %v2151 = vmul.f32 %v2080, %v2140
        %v2152 = vmul.f32 %v2081, %v2140
        %v2153 = vmul.f32 %v2082, %v2140
        %v2154 = vmul.f32 %v2083, %v2140
        %v2155 = vmul.f32 %v2084, %v2140
        %v2156 = vmul.f32 %v2085, %v2140
        %v2157 = vld [vmem:[%s5] sm:$0xff]
        %v2158 = vld [vmem:[%s5 + $0x8] sm:$0xff]
        %v2159 = vld [vmem:[%s5 + $0x10] sm:$0xff]
        %v2160 = vld [vmem:[%s5 + $0x18] sm:$0xff]
        %v2161 = vld [vmem:[%s5 + $0x20] sm:$0xff]
        %v2162 = vld [vmem:[%s5 + $0x28] sm:$0xff]
        %v2163 = vld [vmem:[%s5 + $0x30] sm:$0xff]
        %v2164 = vld [vmem:[%s5 + $0x38] sm:$0xff]
        %v2165 = vld [vmem:[%s5 + $0x40] sm:$0xff]
        %v2166 = vld [vmem:[%s5 + $0x48] sm:$0xff]
        %v2167 = vld [vmem:[%s5 + $0x50] sm:$0xff]
        %v2168 = vld [vmem:[%s5 + $0x58] sm:$0xff]
        %v2169 = vld [vmem:[%s5 + $0x60] sm:$0x7f]
        %v2170 = vld [vmem:[%s5 + $0x68] sm:$0x7f]
        %v2171 = vld [vmem:[%s5 + $0x70] sm:$0x7f]
        %v2172 = vld [vmem:[%s5 + $0x78] sm:$0x7f]
        %v2173 = vmul.f32 %v2141, %v2157
        %v2174 = vmul.f32 %v2142, %v2158
        %v2175 = vmul.f32 %v2143, %v2159
        %v2176 = vmul.f32 %v2144, %v2160
        %v2177 = vmul.f32 %v2145, %v2161
        %v2178 = vmul.f32 %v2146, %v2162
        %v2179 = vmul.f32 %v2147, %v2163
        %v2180 = vmul.f32 %v2148, %v2164
        %v2181 = vmul.f32 %v2149, %v2165
        %v2182 = vmul.f32 %v2150, %v2166
        %v2183 = vmul.f32 %v2151, %v2167
        %v2184 = vmul.f32 %v2152, %v2168
        %v2185 = vmul.f32 %v2153, %v2169
        %v2186 = vmul.f32 %v2154, %v2170
        %v2187 = vmul.f32 %v2155, %v2171
        %v2188 = vmul.f32 %v2156, %v2172
        %v2189 = vld [vmem:[%s6] sm:$0xff]
        %v2190 = vld [vmem:[%s6 + $0x8] sm:$0xff]
        %v2191 = vld [vmem:[%s6 + $0x10] sm:$0xff]
        %v2192 = vld [vmem:[%s6 + $0x18] sm:$0xff]
        %v2193 = vld [vmem:[%s6 + $0x20] sm:$0xff]
        %v2194 = vld [vmem:[%s6 + $0x28] sm:$0xff]
        %v2195 = vld [vmem:[%s6 + $0x30] sm:$0xff]
        %v2196 = vld [vmem:[%s6 + $0x38] sm:$0xff]
        %v2197 = vld [vmem:[%s6 + $0x40] sm:$0xff]
        %v2198 = vld [vmem:[%s6 + $0x48] sm:$0xff]
        %v2199 = vld [vmem:[%s6 + $0x50] sm:$0xff]
        %v2200 = vld [vmem:[%s6 + $0x58] sm:$0xff]
        %v2201 = vld [vmem:[%s6 + $0x60] sm:$0x7f]
        %v2202 = vld [vmem:[%s6 + $0x68] sm:$0x7f]
        %v2203 = vld [vmem:[%s6 + $0x70] sm:$0x7f]
        %v2204 = vld [vmem:[%s6 + $0x78] sm:$0x7f]
        %v2205 = vadd.f32 %v2173, %v2189
        %v2206 = vadd.f32 %v2174, %v2190
        %v2207 = vadd.f32 %v2175, %v2191
        %v2208 = vadd.f32 %v2176, %v2192
        %v2209 = vadd.f32 %v2177, %v2193
        %v2210 = vadd.f32 %v2178, %v2194
        %v2211 = vadd.f32 %v2179, %v2195
        %v2212 = vadd.f32 %v2180, %v2196
        %v2213 = vadd.f32 %v2181, %v2197
        %v2214 = vadd.f32 %v2182, %v2198
        %v2215 = vadd.f32 %v2183, %v2199
        %v2216 = vadd.f32 %v2184, %v2200
        %v2217 = vadd.f32 %v2185, %v2201
        %v2218 = vadd.f32 %v2186, %v2202
        %v2219 = vadd.f32 %v2187, %v2203
        %v2220 = vadd.f32 %v2188, %v2204
        %v2221 = vmax.f32 %v2205, 0.0
        %v2222 = vmax.f32 %v2206, 0.0
        %v2223 = vmax.f32 %v2207, 0.0
        %v2224 = vmax.f32 %v2208, 0.0
        %v2225 = vmax.f32 %v2209, 0.0
        %v2226 = vmax.f32 %v2210, 0.0
        %v2227 = vmax.f32 %v2211, 0.0
        %v2228 = vmax.f32 %v2212, 0.0
        %v2229 = vmax.f32 %v2213, 0.0
        %v2230 = vmax.f32 %v2214, 0.0
        %v2231 = vmax.f32 %v2215, 0.0
        %v2232 = vmax.f32 %v2216, 0.0
        %v2233 = vmax.f32 %v2217, 0.0
        %v2234 = vmax.f32 %v2218, 0.0
        %v2235 = vmax.f32 %v2219, 0.0
        %v2236 = vmax.f32 %v2220, 0.0
        %v2237 = vld [vmem:[%s7] sm:$0xff]
        %v2238 = vld [vmem:[%s7 + $0x8] sm:$0x7f]
        %vm2239 = vcmask 252928
        %v2241 = vsel %vm2239, %v2237, 0
        %v2244 = vsel %vm2239, %v2238, 0
        %v2247 = vsel %vm2047, %v2233, 0
        %v2250 = vsel %vm2047, %v2234, 0
        %v2253 = vsel %vm2047, %v2235, 0
        %v2256 = vsel %vm2047, %v2236, 0
        %2258 = vmatprep.subr.mxu0 0.0
        %2259 = vmatpush1.msra.mxu0 0.0
        %2260 = vmatprep.subr.mxu0 0.0
        %2261 = vmatpush1.msra.mxu0 0.0
        %2262 = vmatprep.subr.mxu0 0.0
        %2263 = vmatpush1.msra.mxu0 0.0
        %2264 = vmatprep.subr.mxu0 0.0
        %2265 = vmatpush1.msra.mxu0 0.0
        %2266 = vmatprep.subr.mxu0 0.0
        %2267 = vmatpush1.msra.mxu0 0.0
        %2268 = vmatprep.subr.mxu0 0.0
        %2269 = vmatpush1.msra.mxu0 0.0
        %2270 = vmatprep.subr.mxu0 0.0
        %2271 = vmatpush1.msra.mxu0 0.0
        %2272 = vmatprep.subr.mxu0 0.0
        %2273 = vmatpush1.msra.mxu0 0.0
        %2274 = vmatprep.subr.mxu0 0.0
        %2275 = vmatpush1.msra.mxu0 0.0
        %2276 = vmatprep.subr.mxu0 0.0
        %2277 = vmatpush1.msra.mxu0 0.0
        %2278 = vmatprep.subr.mxu0 0.0
        %2279 = vmatpush1.msra.mxu0 0.0
        %2280 = vmatprep.subr.mxu0 0.0
        %2281 = vmatpush1.msra.mxu0 0.0
        %2282 = vmatprep.subr.mxu0 %v2250
        %2283 = vmatpush1.msra.mxu0 %v2247
        %2284 = vmatprep.subr.mxu0 %v2230
        %2285 = vmatpush1.msra.mxu0 %v2229
        %2286 = vmatprep.subr.mxu0 %v2226
        %2287 = vmatpush1.msra.mxu0 %v2225
        %2288 = vmatprep.subr.mxu0 %v2222
        %2289 = vmatpush1.msra.mxu0 %v2221
        %2290 = vmatprep.subr.mxu0 0.0
        %2291 = vmatpush2.msra.mxu0 0.0
        %2292 = vmatprep.subr.mxu0 0.0
        %2293 = vmatpush2.msra.mxu0 0.0
        %2294 = vmatprep.subr.mxu0 0.0
        %2295 = vmatpush2.msra.mxu0 0.0
        %2296 = vmatprep.subr.mxu0 0.0
        %2297 = vmatpush2.msra.mxu0 0.0
        %2298 = vmatprep.subr.mxu0 0.0
        %2299 = vmatpush2.msra.mxu0 0.0
        %2300 = vmatprep.subr.mxu0 0.0
        %2301 = vmatpush2.msra.mxu0 0.0
        %2302 = vmatprep.subr.mxu0 0.0
        %2303 = vmatpush2.msra.mxu0 0.0
        %2304 = vmatprep.subr.mxu0 0.0
        %2305 = vmatpush2.msra.mxu0 0.0
        %2306 = vmatprep.subr.mxu0 0.0
        %2307 = vmatpush2.msra.mxu0 0.0
        %2308 = vmatprep.subr.mxu0 0.0
        %2309 = vmatpush2.msra.mxu0 0.0
        %2310 = vmatprep.subr.mxu0 0.0
        %2311 = vmatpush2.msra.mxu0 0.0
        %2312 = vmatprep.subr.mxu0 0.0
        %2313 = vmatpush2.msra.mxu0 0.0
        %2314 = vmatprep.subr.mxu0 0.0
        %2315 = vmatpush2.msra.mxu0 0.0
        %2316 = vmatprep.subr.mxu0 0.0
        %2317 = vmatpush2.msra.mxu0 0.0
        %2318 = vmatprep.subr.mxu0 0.0
        %2319 = vmatpush2.msra.mxu0 0.0
        %2320 = vmatprep.subr.mxu0 0.0
        %2321 = vmatpush2.msra.mxu0 0.0
        %2322 = vmatprep.mubr.f32.mxu0 0.0
        %2323 = vmatmul.mubr.f32.gmra.mxu0 %v2241
        %v2324 = vpop.f32.mrf.mxu0
        %v2325 = vadd.f32 0.0, %v2324
        %v2326 = vpop.f32.mrf.mxu0
        %v2327 = vadd.f32 0.0, %v2326
        %2328 = vmatprep.mubr.f32.mxu0 0.0
        %2329 = vmatmul.mubr.f32.gmra.mxu0 %v2244
        %v2330 = vpop.f32.mrf.mxu0
        %v2331 = vadd.f32 0.0, %v2330
        %v2332 = vpop.f32.mrf.mxu0
        %v2333 = vadd.f32 0.0, %v2332
        %2334 = vdwg.mxu0
        %2335 = vmatprep.subr.mxu0 0.0
        %2336 = vmatpush1.msra.mxu0 0.0
        %2337 = vmatprep.subr.mxu0 0.0
        %2338 = vmatpush1.msra.mxu0 0.0
        %2339 = vmatprep.subr.mxu0 0.0
        %2340 = vmatpush1.msra.mxu0 0.0
        %2341 = vmatprep.subr.mxu0 0.0
        %2342 = vmatpush1.msra.mxu0 0.0
        %2343 = vmatprep.subr.mxu0 0.0
        %2344 = vmatpush1.msra.mxu0 0.0
        %2345 = vmatprep.subr.mxu0 0.0
        %2346 = vmatpush1.msra.mxu0 0.0
        %2347 = vmatprep.subr.mxu0 0.0
        %2348 = vmatpush1.msra.mxu0 0.0
        %2349 = vmatprep.subr.mxu0 0.0
        %2350 = vmatpush1.msra.mxu0 0.0
        %2351 = vmatprep.subr.mxu0 0.0
        %2352 = vmatpush1.msra.mxu0 0.0
        %2353 = vmatprep.subr.mxu0 0.0
        %2354 = vmatpush1.msra.mxu0 0.0
        %2355 = vmatprep.subr.mxu0 0.0
        %2356 = vmatpush1.msra.mxu0 0.0
        %2357 = vmatprep.subr.mxu0 0.0
        %2358 = vmatpush1.msra.mxu0 0.0
        %2359 = vmatprep.subr.mxu0 %v2256
        %2360 = vmatpush1.msra.mxu0 %v2253
        %2361 = vmatprep.subr.mxu0 %v2232
        %2362 = vmatpush1.msra.mxu0 %v2231
        %2363 = vmatprep.subr.mxu0 %v2228
        %2364 = vmatpush1.msra.mxu0 %v2227
        %2365 = vmatprep.subr.mxu0 %v2224
        %2366 = vmatpush1.msra.mxu0 %v2223
        %2367 = vmatprep.subr.mxu0 0.0
        %2368 = vmatpush2.msra.mxu0 0.0
        %2369 = vmatprep.subr.mxu0 0.0
        %2370 = vmatpush2.msra.mxu0 0.0
        %2371 = vmatprep.subr.mxu0 0.0
        %2372 = vmatpush2.msra.mxu0 0.0
        %2373 = vmatprep.subr.mxu0 0.0
        %2374 = vmatpush2.msra.mxu0 0.0
        %2375 = vmatprep.subr.mxu0 0.0
        %2376 = vmatpush2.msra.mxu0 0.0
        %2377 = vmatprep.subr.mxu0 0.0
        %2378 = vmatpush2.msra.mxu0 0.0
        %2379 = vmatprep.subr.mxu0 0.0
        %2380 = vmatpush2.msra.mxu0 0.0
        %2381 = vmatprep.subr.mxu0 0.0
        %2382 = vmatpush2.msra.mxu0 0.0
        %2383 = vmatprep.subr.mxu0 0.0
        %2384 = vmatpush2.msra.mxu0 0.0
        %2385 = vmatprep.subr.mxu0 0.0
        %2386 = vmatpush2.msra.mxu0 0.0
        %2387 = vmatprep.subr.mxu0 0.0
        %2388 = vmatpush2.msra.mxu0 0.0
        %2389 = vmatprep.subr.mxu0 0.0
        %2390 = vmatpush2.msra.mxu0 0.0
        %2391 = vmatprep.subr.mxu0 0.0
        %2392 = vmatpush2.msra.mxu0 0.0
        %2393 = vmatprep.subr.mxu0 0.0
        %2394 = vmatpush2.msra.mxu0 0.0
        %2395 = vmatprep.subr.mxu0 0.0
        %2396 = vmatpush2.msra.mxu0 0.0
        %2397 = vmatprep.subr.mxu0 0.0
        %2398 = vmatpush2.msra.mxu0 0.0
        %2399 = vmatprep.mubr.f32.mxu0 0.0
        %2400 = vmatmul.mubr.f32.gmra.mxu0 %v2241
        %v2401 = vpop.f32.mrf.mxu0
        %v2402 = vadd.f32 0.0, %v2401
        %v2403 = vpop.f32.mrf.mxu0
        %v2404 = vadd.f32 0.0, %v2403
        %2405 = vmatprep.mubr.f32.mxu0 0.0
        %2406 = vmatmul.mubr.f32.gmra.mxu0 %v2244
        %v2407 = vpop.f32.mrf.mxu0
        %v2408 = vadd.f32 0.0, %v2407
        %v2409 = vpop.f32.mrf.mxu0
        %v2410 = vadd.f32 0.0, %v2409
        %2411 = vdwg.mxu0
        %v2412 = vld [vmem:[%s8] sm:$0xff]
        %v2413 = vld [vmem:[%s8 + $0x8] sm:$0xff]
        %v2414 = vld [vmem:[%s8 + $0x10] sm:$0xff]
        %v2415 = vld [vmem:[%s8 + $0x18] sm:$0xff]
        %v2416 = vld [vmem:[%s8 + $0x20] sm:$0xff]
        %v2417 = vld [vmem:[%s8 + $0x28] sm:$0xff]
        %v2418 = vld [vmem:[%s8 + $0x30] sm:$0xff]
        %v2419 = vld [vmem:[%s8 + $0x38] sm:$0xff]
        %v2420 = vld [vmem:[%s8 + $0x40] sm:$0xff]
        %v2421 = vld [vmem:[%s8 + $0x48] sm:$0xff]
        %v2422 = vld [vmem:[%s8 + $0x50] sm:$0xff]
        %v2423 = vld [vmem:[%s8 + $0x58] sm:$0xff]
        %v2424 = vld [vmem:[%s8 + $0x60] sm:$0xff]
        %v2425 = vld [vmem:[%s8 + $0x68] sm:$0xff]
        %v2426 = vld [vmem:[%s8 + $0x70] sm:$0xff]
        %v2427 = vld [vmem:[%s8 + $0x78] sm:$0xff]
        %v2428 = vld [vmem:[%s8 + $0x80] sm:$0xff]
        %v2429 = vld [vmem:[%s8 + $0x88] sm:$0xff]
        %v2430 = vld [vmem:[%s8 + $0x90] sm:$0xff]
        %v2431 = vld [vmem:[%s8 + $0x98] sm:$0xff]
        %v2432 = vld [vmem:[%s8 + $0xa0] sm:$0xff]
        %v2433 = vld [vmem:[%s8 + $0xa8] sm:$0xff]
        %v2434 = vld [vmem:[%s8 + $0xb0] sm:$0xff]
        %v2435 = vld [vmem:[%s8 + $0xb8] sm:$0xff]
        %v2436 = vld [vmem:[%s8 + $0xc0] sm:$0xff]
        %v2437 = vld [vmem:[%s8 + $0xc8] sm:$0xff]
        %v2438 = vld [vmem:[%s8 + $0xd0] sm:$0xff]
        %v2439 = vld [vmem:[%s8 + $0xd8] sm:$0xff]
        %v2440 = vld [vmem:[%s8 + $0xe0] sm:$0xff]
        %v2441 = vld [vmem:[%s8 + $0xe8] sm:$0xff]
        %v2442 = vld [vmem:[%s8 + $0xf0] sm:$0xff]
        %v2443 = vld [vmem:[%s8 + $0xf8] sm:$0xff]
        %v2444 = vld [vmem:[%s8 + $0x100] sm:$0xff]
        %v2445 = vld [vmem:[%s8 + $0x108] sm:$0xff]
        %v2446 = vld [vmem:[%s8 + $0x110] sm:$0xff]
        %v2447 = vld [vmem:[%s8 + $0x118] sm:$0xff]
        %v2448 = vld [vmem:[%s8 + $0x120] sm:$0xff]
        %v2449 = vld [vmem:[%s8 + $0x128] sm:$0xff]
        %v2450 = vld [vmem:[%s8 + $0x130] sm:$0xff]
        %v2451 = vld [vmem:[%s8 + $0x138] sm:$0xff]
        %v2452 = vld [vmem:[%s8 + $0x140] sm:$0xff]
        %v2453 = vld [vmem:[%s8 + $0x148] sm:$0xff]
        %v2454 = vld [vmem:[%s8 + $0x150] sm:$0xff]
        %v2455 = vld [vmem:[%s8 + $0x158] sm:$0xff]
        %v2456 = vld [vmem:[%s8 + $0x160] sm:$0xff]
        %v2457 = vld [vmem:[%s8 + $0x168] sm:$0xff]
        %v2458 = vld [vmem:[%s8 + $0x170] sm:$0xff]
        %v2459 = vld [vmem:[%s8 + $0x178] sm:$0xff]
        %v2460 = vld [vmem:[%s8 + $0x180] sm:$0xff]
        %v2461 = vld [vmem:[%s8 + $0x188] sm:$0xff]
        %v2462 = vld [vmem:[%s8 + $0x190] sm:$0xff]
        %v2463 = vld [vmem:[%s8 + $0x198] sm:$0xff]
        %v2464 = vld [vmem:[%s8 + $0x1a0] sm:$0xff]
        %v2465 = vld [vmem:[%s8 + $0x1a8] sm:$0xff]
        %v2466 = vld [vmem:[%s8 + $0x1b0] sm:$0xff]
        %v2467 = vld [vmem:[%s8 + $0x1b8] sm:$0xff]
        %v2468 = vld [vmem:[%s8 + $0x1c0] sm:$0xff]
        %v2469 = vld [vmem:[%s8 + $0x1c8] sm:$0xff]
        %v2470 = vld [vmem:[%s8 + $0x1d0] sm:$0xff]
        %v2471 = vld [vmem:[%s8 + $0x1d8] sm:$0xff]
        %v2472 = vld [vmem:[%s8 + $0x1e0] sm:$0xff]
        %v2473 = vld [vmem:[%s8 + $0x1e8] sm:$0xff]
        %v2474 = vld [vmem:[%s8 + $0x1f0] sm:$0xff]
        %v2475 = vld [vmem:[%s8 + $0x1f8] sm:$0xff]
        %v2476 = vld [vmem:[%s8 + $0x200] sm:$0xff]
        %v2477 = vld [vmem:[%s8 + $0x208] sm:$0xff]
        %v2478 = vld [vmem:[%s8 + $0x210] sm:$0xff]
        %v2479 = vld [vmem:[%s8 + $0x218] sm:$0xff]
        %v2480 = vld [vmem:[%s8 + $0x220] sm:$0xff]
        %v2481 = vld [vmem:[%s8 + $0x228] sm:$0xff]
        %v2482 = vld [vmem:[%s8 + $0x230] sm:$0xff]
        %v2483 = vld [vmem:[%s8 + $0x238] sm:$0xff]
        %v2484 = vld [vmem:[%s8 + $0x240] sm:$0xff]
        %v2485 = vld [vmem:[%s8 + $0x248] sm:$0xff]
        %v2486 = vld [vmem:[%s8 + $0x250] sm:$0xff]
        %v2487 = vld [vmem:[%s8 + $0x258] sm:$0xff]
        %v2488 = vld [vmem:[%s8 + $0x260] sm:$0xff]
        %v2489 = vld [vmem:[%s8 + $0x268] sm:$0xff]
        %v2490 = vld [vmem:[%s8 + $0x270] sm:$0xff]
        %v2491 = vld [vmem:[%s8 + $0x278] sm:$0xff]
        %v2492 = vld [vmem:[%s8 + $0x280] sm:$0xff]
        %v2493 = vld [vmem:[%s8 + $0x288] sm:$0xff]
        %v2494 = vld [vmem:[%s8 + $0x290] sm:$0xff]
        %v2495 = vld [vmem:[%s8 + $0x298] sm:$0xff]
        %v2496 = vld [vmem:[%s8 + $0x2a0] sm:$0xff]
        %v2497 = vld [vmem:[%s8 + $0x2a8] sm:$0xff]
        %v2498 = vld [vmem:[%s8 + $0x2b0] sm:$0xff]
        %v2499 = vld [vmem:[%s8 + $0x2b8] sm:$0xff]
        %v2500 = vld [vmem:[%s8 + $0x2c0] sm:$0xff]
        %v2501 = vld [vmem:[%s8 + $0x2c8] sm:$0xff]
        %v2502 = vld [vmem:[%s8 + $0x2d0] sm:$0xff]
        %v2503 = vld [vmem:[%s8 + $0x2d8] sm:$0xff]
        %v2504 = vld [vmem:[%s8 + $0x2e0] sm:$0xff]
        %v2505 = vld [vmem:[%s8 + $0x2e8] sm:$0xff]
        %v2506 = vld [vmem:[%s8 + $0x2f0] sm:$0xff]
        %v2507 = vld [vmem:[%s8 + $0x2f8] sm:$0xff]
        %v2508 = vld [vmem:[%s8 + $0x300] sm:$0xff]
        %v2509 = vld [vmem:[%s8 + $0x308] sm:$0xff]
        %v2510 = vld [vmem:[%s8 + $0x310] sm:$0xff]
        %v2511 = vld [vmem:[%s8 + $0x318] sm:$0xff]
        %v2512 = vld [vmem:[%s8 + $0x320] sm:$0xff]
        %v2513 = vld [vmem:[%s8 + $0x328] sm:$0xff]
        %v2514 = vld [vmem:[%s8 + $0x330] sm:$0xff]
        %v2515 = vld [vmem:[%s8 + $0x338] sm:$0xff]
        %v2516 = vld [vmem:[%s8 + $0x340] sm:$0xff]
        %v2517 = vld [vmem:[%s8 + $0x348] sm:$0xff]
        %v2518 = vld [vmem:[%s8 + $0x350] sm:$0xff]
        %v2519 = vld [vmem:[%s8 + $0x358] sm:$0xff]
        %v2520 = vld [vmem:[%s8 + $0x360] sm:$0xff]
        %v2521 = vld [vmem:[%s8 + $0x368] sm:$0xff]
        %v2522 = vld [vmem:[%s8 + $0x370] sm:$0xff]
        %v2523 = vld [vmem:[%s8 + $0x378] sm:$0xff]
        %v2524 = vld [vmem:[%s8 + $0x380] sm:$0xff]
        %v2525 = vld [vmem:[%s8 + $0x388] sm:$0xff]
        %v2526 = vld [vmem:[%s8 + $0x390] sm:$0xff]
        %v2527 = vld [vmem:[%s8 + $0x398] sm:$0xff]
        %v2528 = vld [vmem:[%s8 + $0x3a0] sm:$0xff]
        %v2529 = vld [vmem:[%s8 + $0x3a8] sm:$0xff]
        %v2530 = vld [vmem:[%s8 + $0x3b0] sm:$0xff]
        %v2531 = vld [vmem:[%s8 + $0x3b8] sm:$0xff]
        %v2532 = vld [vmem:[%s8 + $0x3c0] sm:$0xff]
        %v2533 = vld [vmem:[%s8 + $0x3c8] sm:$0xff]
        %v2534 = vld [vmem:[%s8 + $0x3d0] sm:$0xff]
        %v2535 = vld [vmem:[%s8 + $0x3d8] sm:$0xff]
        %s2536 = scalar_lea.vmem %s7, 16
        %v2537 = vld [vmem:[%s2536] sm:$0xff]
        %v2538 = vld [vmem:[%s2536 + $0x8] sm:$0x7f]
        %v2540 = vsel %vm2239, %v2537, 0
        %v2543 = vsel %vm2239, %v2538, 0
        %2545 = vmatprep.subr.mxu0 0.0
        %2546 = vmatpush1.msra.mxu0 0.0
        %2547 = vmatprep.subr.mxu0 0.0
        %2548 = vmatpush1.msra.mxu0 0.0
        %2549 = vmatprep.subr.mxu0 0.0
        %2550 = vmatpush1.msra.mxu0 0.0
        %2551 = vmatprep.subr.mxu0 0.0
        %2552 = vmatpush1.msra.mxu0 0.0
        %2553 = vmatprep.subr.mxu0 0.0
        %2554 = vmatpush1.msra.mxu0 0.0
        %2555 = vmatprep.subr.mxu0 0.0
        %2556 = vmatpush1.msra.mxu0 0.0
        %2557 = vmatprep.subr.mxu0 0.0
        %2558 = vmatpush1.msra.mxu0 0.0
        %2559 = vmatprep.subr.mxu0 0.0
        %2560 = vmatpush1.msra.mxu0 0.0
        %2561 = vmatprep.subr.mxu0 0.0
        %2562 = vmatpush1.msra.mxu0 0.0
        %2563 = vmatprep.subr.mxu0 0.0
        %2564 = vmatpush1.msra.mxu0 0.0
        %2565 = vmatprep.subr.mxu0 0.0
        %2566 = vmatpush1.msra.mxu0 0.0
        %2567 = vmatprep.subr.mxu0 0.0
        %2568 = vmatpush1.msra.mxu0 0.0
        %2569 = vmatprep.subr.mxu0 %v2250
        %2570 = vmatpush1.msra.mxu0 %v2247
        %2571 = vmatprep.subr.mxu0 %v2230
        %2572 = vmatpush1.msra.mxu0 %v2229
        %2573 = vmatprep.subr.mxu0 %v2226
        %2574 = vmatpush1.msra.mxu0 %v2225
        %2575 = vmatprep.subr.mxu0 %v2222
        %2576 = vmatpush1.msra.mxu0 %v2221
        %2577 = vmatprep.subr.mxu0 0.0
        %2578 = vmatpush2.msra.mxu0 0.0
        %2579 = vmatprep.subr.mxu0 0.0
        %2580 = vmatpush2.msra.mxu0 0.0
        %2581 = vmatprep.subr.mxu0 0.0
        %2582 = vmatpush2.msra.mxu0 0.0
        %2583 = vmatprep.subr.mxu0 0.0
        %2584 = vmatpush2.msra.mxu0 0.0
        %2585 = vmatprep.subr.mxu0 0.0
        %2586 = vmatpush2.msra.mxu0 0.0
        %2587 = vmatprep.subr.mxu0 0.0
        %2588 = vmatpush2.msra.mxu0 0.0
        %2589 = vmatprep.subr.mxu0 0.0
        %2590 = vmatpush2.msra.mxu0 0.0
        %2591 = vmatprep.subr.mxu0 0.0
        %2592 = vmatpush2.msra.mxu0 0.0
        %2593 = vmatprep.subr.mxu0 0.0
        %2594 = vmatpush2.msra.mxu0 0.0
        %2595 = vmatprep.subr.mxu0 0.0
        %2596 = vmatpush2.msra.mxu0 0.0
        %2597 = vmatprep.subr.mxu0 0.0
        %2598 = vmatpush2.msra.mxu0 0.0
        %2599 = vmatprep.subr.mxu0 0.0
        %2600 = vmatpush2.msra.mxu0 0.0
        %2601 = vmatprep.subr.mxu0 0.0
        %2602 = vmatpush2.msra.mxu0 0.0
        %2603 = vmatprep.subr.mxu0 0.0
        %2604 = vmatpush2.msra.mxu0 0.0
        %2605 = vmatprep.subr.mxu0 0.0
        %2606 = vmatpush2.msra.mxu0 0.0
        %2607 = vmatprep.subr.mxu0 0.0
        %2608 = vmatpush2.msra.mxu0 0.0
        %2609 = vmatprep.mubr.f32.mxu0 0.0
        %2610 = vmatmul.mubr.f32.gmra.mxu0 %v2540
        %v2611 = vpop.f32.mrf.mxu0
        %v2612 = vadd.f32 0.0, %v2611
        %v2613 = vpop.f32.mrf.mxu0
        %v2614 = vadd.f32 0.0, %v2613
        %2615 = vmatprep.mubr.f32.mxu0 0.0
        %2616 = vmatmul.mubr.f32.gmra.mxu0 %v2543
        %v2617 = vpop.f32.mrf.mxu0
        %v2618 = vadd.f32 0.0, %v2617
        %v2619 = vpop.f32.mrf.mxu0
        %v2620 = vadd.f32 0.0, %v2619
        %2621 = vdwg.mxu0
        %2622 = vmatprep.subr.mxu0 0.0
        %2623 = vmatpush1.msra.mxu0 0.0
        %2624 = vmatprep.subr.mxu0 0.0
        %2625 = vmatpush1.msra.mxu0 0.0
        %2626 = vmatprep.subr.mxu0 0.0
        %2627 = vmatpush1.msra.mxu0 0.0
        %2628 = vmatprep.subr.mxu0 0.0
        %2629 = vmatpush1.msra.mxu0 0.0
        %2630 = vmatprep.subr.mxu0 0.0
        %2631 = vmatpush1.msra.mxu0 0.0
        %2632 = vmatprep.subr.mxu0 0.0
        %2633 = vmatpush1.msra.mxu0 0.0
        %2634 = vmatprep.subr.mxu0 0.0
        %2635 = vmatpush1.msra.mxu0 0.0
        %2636 = vmatprep.subr.mxu0 0.0
        %2637 = vmatpush1.msra.mxu0 0.0
        %2638 = vmatprep.subr.mxu0 0.0
        %2639 = vmatpush1.msra.mxu0 0.0
        %2640 = vmatprep.subr.mxu0 0.0
        %2641 = vmatpush1.msra.mxu0 0.0
        %2642 = vmatprep.subr.mxu0 0.0
        %2643 = vmatpush1.msra.mxu0 0.0
        %2644 = vmatprep.subr.mxu0 0.0
        %2645 = vmatpush1.msra.mxu0 0.0
        %2646 = vmatprep.subr.mxu0 %v2256
        %2647 = vmatpush1.msra.mxu0 %v2253
        %2648 = vmatprep.subr.mxu0 %v2232
        %2649 = vmatpush1.msra.mxu0 %v2231
        %2650 = vmatprep.subr.mxu0 %v2228
        %2651 = vmatpush1.msra.mxu0 %v2227
        %2652 = vmatprep.subr.mxu0 %v2224
        %2653 = vmatpush1.msra.mxu0 %v2223
        %2654 = vmatprep.subr.mxu0 0.0
        %2655 = vmatpush2.msra.mxu0 0.0
        %2656 = vmatprep.subr.mxu0 0.0
        %2657 = vmatpush2.msra.mxu0 0.0
        %2658 = vmatprep.subr.mxu0 0.0
        %2659 = vmatpush2.msra.mxu0 0.0
        %2660 = vmatprep.subr.mxu0 0.0
        %2661 = vmatpush2.msra.mxu0 0.0
        %2662 = vmatprep.subr.mxu0 0.0
        %2663 = vmatpush2.msra.mxu0 0.0
        %2664 = vmatprep.subr.mxu0 0.0
        %2665 = vmatpush2.msra.mxu0 0.0
        %2666 = vmatprep.subr.mxu0 0.0
        %2667 = vmatpush2.msra.mxu0 0.0
        %2668 = vmatprep.subr.mxu0 0.0
        %2669 = vmatpush2.msra.mxu0 0.0
        %2670 = vmatprep.subr.mxu0 0.0
        %2671 = vmatpush2.msra.mxu0 0.0
        %2672 = vmatprep.subr.mxu0 0.0
        %2673 = vmatpush2.msra.mxu0 0.0
        %2674 = vmatprep.subr.mxu0 0.0
        %2675 = vmatpush2.msra.mxu0 0.0
        %2676 = vmatprep.subr.mxu0 0.0
        %2677 = vmatpush2.msra.mxu0 0.0
        %2678 = vmatprep.subr.mxu0 0.0
        %2679 = vmatpush2.msra.mxu0 0.0
        %2680 = vmatprep.subr.mxu0 0.0
        %2681 = vmatpush2.msra.mxu0 0.0
        %2682 = vmatprep.subr.mxu0 0.0
        %2683 = vmatpush2.msra.mxu0 0.0
        %2684 = vmatprep.subr.mxu0 0.0
        %2685 = vmatpush2.msra.mxu0 0.0
        %2686 = vmatprep.mubr.f32.mxu0 0.0
        %2687 = vmatmul.mubr.f32.gmra.mxu0 %v2540
        %v2688 = vpop.f32.mrf.mxu0
        %v2689 = vadd.f32 0.0, %v2688
        %v2690 = vpop.f32.mrf.mxu0
        %v2691 = vadd.f32 0.0, %v2690
        %2692 = vmatprep.mubr.f32.mxu0 0.0
        %2693 = vmatmul.mubr.f32.gmra.mxu0 %v2543
        %v2694 = vpop.f32.mrf.mxu0
        %v2695 = vadd.f32 0.0, %v2694
        %v2696 = vpop.f32.mrf.mxu0
        %v2697 = vadd.f32 0.0, %v2696
        %2698 = vdwg.mxu0
        %s2699 = scalar_lea.vmem %s8, 992
        %v2700 = vld [vmem:[%s2699] sm:$0xff]
        %v2701 = vld [vmem:[%s2699 + $0x8] sm:$0xff]
        %v2702 = vld [vmem:[%s2699 + $0x10] sm:$0xff]
        %v2703 = vld [vmem:[%s2699 + $0x18] sm:$0xff]
        %v2704 = vld [vmem:[%s2699 + $0x20] sm:$0xff]
        %v2705 = vld [vmem:[%s2699 + $0x28] sm:$0xff]
        %v2706 = vld [vmem:[%s2699 + $0x30] sm:$0xff]
        %v2707 = vld [vmem:[%s2699 + $0x38] sm:$0xff]
        %v2708 = vld [vmem:[%s2699 + $0x40] sm:$0xff]
        %v2709 = vld [vmem:[%s2699 + $0x48] sm:$0xff]
        %v2710 = vld [vmem:[%s2699 + $0x50] sm:$0xff]
        %v2711 = vld [vmem:[%s2699 + $0x58] sm:$0xff]
        %v2712 = vld [vmem:[%s2699 + $0x60] sm:$0xff]
        %v2713 = vld [vmem:[%s2699 + $0x68] sm:$0xff]
        %v2714 = vld [vmem:[%s2699 + $0x70] sm:$0xff]
        %v2715 = vld [vmem:[%s2699 + $0x78] sm:$0xff]
        %v2716 = vld [vmem:[%s2699 + $0x80] sm:$0xff]
        %v2717 = vld [vmem:[%s2699 + $0x88] sm:$0xff]
        %v2718 = vld [vmem:[%s2699 + $0x90] sm:$0xff]
        %v2719 = vld [vmem:[%s2699 + $0x98] sm:$0xff]
        %v2720 = vld [vmem:[%s2699 + $0xa0] sm:$0xff]
        %v2721 = vld [vmem:[%s2699 + $0xa8] sm:$0xff]
        %v2722 = vld [vmem:[%s2699 + $0xb0] sm:$0xff]
        %v2723 = vld [vmem:[%s2699 + $0xb8] sm:$0xff]
        %v2724 = vld [vmem:[%s2699 + $0xc0] sm:$0xff]
        %v2725 = vld [vmem:[%s2699 + $0xc8] sm:$0xff]
        %v2726 = vld [vmem:[%s2699 + $0xd0] sm:$0xff]
        %v2727 = vld [vmem:[%s2699 + $0xd8] sm:$0xff]
        %v2728 = vld [vmem:[%s2699 + $0xe0] sm:$0xff]
        %v2729 = vld [vmem:[%s2699 + $0xe8] sm:$0xff]
        %v2730 = vld [vmem:[%s2699 + $0xf0] sm:$0xff]
        %v2731 = vld [vmem:[%s2699 + $0xf8] sm:$0xff]
        %v2732 = vld [vmem:[%s2699 + $0x100] sm:$0xff]
        %v2733 = vld [vmem:[%s2699 + $0x108] sm:$0xff]
        %v2734 = vld [vmem:[%s2699 + $0x110] sm:$0xff]
        %v2735 = vld [vmem:[%s2699 + $0x118] sm:$0xff]
        %v2736 = vld [vmem:[%s2699 + $0x120] sm:$0xff]
        %v2737 = vld [vmem:[%s2699 + $0x128] sm:$0xff]
        %v2738 = vld [vmem:[%s2699 + $0x130] sm:$0xff]
        %v2739 = vld [vmem:[%s2699 + $0x138] sm:$0xff]
        %v2740 = vld [vmem:[%s2699 + $0x140] sm:$0xff]
        %v2741 = vld [vmem:[%s2699 + $0x148] sm:$0xff]
        %v2742 = vld [vmem:[%s2699 + $0x150] sm:$0xff]
        %v2743 = vld [vmem:[%s2699 + $0x158] sm:$0xff]
        %v2744 = vld [vmem:[%s2699 + $0x160] sm:$0xff]
        %v2745 = vld [vmem:[%s2699 + $0x168] sm:$0xff]
        %v2746 = vld [vmem:[%s2699 + $0x170] sm:$0xff]
        %v2747 = vld [vmem:[%s2699 + $0x178] sm:$0xff]
        %v2748 = vld [vmem:[%s2699 + $0x180] sm:$0xff]
        %v2749 = vld [vmem:[%s2699 + $0x188] sm:$0xff]
        %v2750 = vld [vmem:[%s2699 + $0x190] sm:$0xff]
        %v2751 = vld [vmem:[%s2699 + $0x198] sm:$0xff]
        %v2752 = vld [vmem:[%s2699 + $0x1a0] sm:$0xff]
        %v2753 = vld [vmem:[%s2699 + $0x1a8] sm:$0xff]
        %v2754 = vld [vmem:[%s2699 + $0x1b0] sm:$0xff]
        %v2755 = vld [vmem:[%s2699 + $0x1b8] sm:$0xff]
        %v2756 = vld [vmem:[%s2699 + $0x1c0] sm:$0xff]
        %v2757 = vld [vmem:[%s2699 + $0x1c8] sm:$0xff]
        %v2758 = vld [vmem:[%s2699 + $0x1d0] sm:$0xff]
        %v2759 = vld [vmem:[%s2699 + $0x1d8] sm:$0xff]
        %v2760 = vld [vmem:[%s2699 + $0x1e0] sm:$0xff]
        %v2761 = vld [vmem:[%s2699 + $0x1e8] sm:$0xff]
        %v2762 = vld [vmem:[%s2699 + $0x1f0] sm:$0xff]
        %v2763 = vld [vmem:[%s2699 + $0x1f8] sm:$0xff]
        %v2764 = vld [vmem:[%s2699 + $0x200] sm:$0xff]
        %v2765 = vld [vmem:[%s2699 + $0x208] sm:$0xff]
        %v2766 = vld [vmem:[%s2699 + $0x210] sm:$0xff]
        %v2767 = vld [vmem:[%s2699 + $0x218] sm:$0xff]
        %v2768 = vld [vmem:[%s2699 + $0x220] sm:$0xff]
        %v2769 = vld [vmem:[%s2699 + $0x228] sm:$0xff]
        %v2770 = vld [vmem:[%s2699 + $0x230] sm:$0xff]
        %v2771 = vld [vmem:[%s2699 + $0x238] sm:$0xff]
        %v2772 = vld [vmem:[%s2699 + $0x240] sm:$0xff]
        %v2773 = vld [vmem:[%s2699 + $0x248] sm:$0xff]
        %v2774 = vld [vmem:[%s2699 + $0x250] sm:$0xff]
        %v2775 = vld [vmem:[%s2699 + $0x258] sm:$0xff]
        %v2776 = vld [vmem:[%s2699 + $0x260] sm:$0xff]
        %v2777 = vld [vmem:[%s2699 + $0x268] sm:$0xff]
        %v2778 = vld [vmem:[%s2699 + $0x270] sm:$0xff]
        %v2779 = vld [vmem:[%s2699 + $0x278] sm:$0xff]
        %v2780 = vld [vmem:[%s2699 + $0x280] sm:$0xff]
        %v2781 = vld [vmem:[%s2699 + $0x288] sm:$0xff]
        %v2782 = vld [vmem:[%s2699 + $0x290] sm:$0xff]
        %v2783 = vld [vmem:[%s2699 + $0x298] sm:$0xff]
        %v2784 = vld [vmem:[%s2699 + $0x2a0] sm:$0xff]
        %v2785 = vld [vmem:[%s2699 + $0x2a8] sm:$0xff]
        %v2786 = vld [vmem:[%s2699 + $0x2b0] sm:$0xff]
        %v2787 = vld [vmem:[%s2699 + $0x2b8] sm:$0xff]
        %v2788 = vld [vmem:[%s2699 + $0x2c0] sm:$0xff]
        %v2789 = vld [vmem:[%s2699 + $0x2c8] sm:$0xff]
        %v2790 = vld [vmem:[%s2699 + $0x2d0] sm:$0xff]
        %v2791 = vld [vmem:[%s2699 + $0x2d8] sm:$0xff]
        %v2792 = vld [vmem:[%s2699 + $0x2e0] sm:$0xff]
        %v2793 = vld [vmem:[%s2699 + $0x2e8] sm:$0xff]
        %v2794 = vld [vmem:[%s2699 + $0x2f0] sm:$0xff]
        %v2795 = vld [vmem:[%s2699 + $0x2f8] sm:$0xff]
        %v2796 = vld [vmem:[%s2699 + $0x300] sm:$0xff]
        %v2797 = vld [vmem:[%s2699 + $0x308] sm:$0xff]
        %v2798 = vld [vmem:[%s2699 + $0x310] sm:$0xff]
        %v2799 = vld [vmem:[%s2699 + $0x318] sm:$0xff]
        %v2800 = vld [vmem:[%s2699 + $0x320] sm:$0xff]
        %v2801 = vld [vmem:[%s2699 + $0x328] sm:$0xff]
        %v2802 = vld [vmem:[%s2699 + $0x330] sm:$0xff]
        %v2803 = vld [vmem:[%s2699 + $0x338] sm:$0xff]
        %v2804 = vld [vmem:[%s2699 + $0x340] sm:$0xff]
        %v2805 = vld [vmem:[%s2699 + $0x348] sm:$0xff]
        %v2806 = vld [vmem:[%s2699 + $0x350] sm:$0xff]
        %v2807 = vld [vmem:[%s2699 + $0x358] sm:$0xff]
        %v2808 = vld [vmem:[%s2699 + $0x360] sm:$0xff]
        %v2809 = vld [vmem:[%s2699 + $0x368] sm:$0xff]
        %v2810 = vld [vmem:[%s2699 + $0x370] sm:$0xff]
        %v2811 = vld [vmem:[%s2699 + $0x378] sm:$0xff]
        %v2812 = vld [vmem:[%s2699 + $0x380] sm:$0xff]
        %v2813 = vld [vmem:[%s2699 + $0x388] sm:$0xff]
        %v2814 = vld [vmem:[%s2699 + $0x390] sm:$0xff]
        %v2815 = vld [vmem:[%s2699 + $0x398] sm:$0xff]
        %v2816 = vld [vmem:[%s2699 + $0x3a0] sm:$0xff]
        %v2817 = vld [vmem:[%s2699 + $0x3a8] sm:$0xff]
        %v2818 = vld [vmem:[%s2699 + $0x3b0] sm:$0xff]
        %v2819 = vld [vmem:[%s2699 + $0x3b8] sm:$0xff]
        %v2820 = vld [vmem:[%s2699 + $0x3c0] sm:$0xff]
        %v2821 = vld [vmem:[%s2699 + $0x3c8] sm:$0xff]
        %v2822 = vld [vmem:[%s2699 + $0x3d0] sm:$0xff]
        %v2823 = vld [vmem:[%s2699 + $0x3d8] sm:$0xff]
        %v2825 = vsel %vm2034, %v2691, 0
        %v2828 = vsel %vm2034, %v2697, 0
        %2830 = vmatprep.subr.mxu0 %v2731
        %2831 = vmatpush1.msra.mxu0 %v2730
        %2832 = vmatprep.subr.mxu0 %v2729
        %2833 = vmatpush1.msra.mxu0 %v2728
        %2834 = vmatprep.subr.mxu0 %v2727
        %2835 = vmatpush1.msra.mxu0 %v2726
        %2836 = vmatprep.subr.mxu0 %v2725
        %2837 = vmatpush1.msra.mxu0 %v2724
        %2838 = vmatprep.subr.mxu0 %v2723
        %2839 = vmatpush1.msra.mxu0 %v2722
        %2840 = vmatprep.subr.mxu0 %v2721
        %2841 = vmatpush1.msra.mxu0 %v2720
        %2842 = vmatprep.subr.mxu0 %v2719
        %2843 = vmatpush1.msra.mxu0 %v2718
        %2844 = vmatprep.subr.mxu0 %v2717
        %2845 = vmatpush1.msra.mxu0 %v2716
        %2846 = vmatprep.subr.mxu0 %v2715
        %2847 = vmatpush1.msra.mxu0 %v2714
        %2848 = vmatprep.subr.mxu0 %v2713
        %2849 = vmatpush1.msra.mxu0 %v2712
        %2850 = vmatprep.subr.mxu0 %v2711
        %2851 = vmatpush1.msra.mxu0 %v2710
        %2852 = vmatprep.subr.mxu0 %v2709
        %2853 = vmatpush1.msra.mxu0 %v2708
        %2854 = vmatprep.subr.mxu0 %v2707
        %2855 = vmatpush1.msra.mxu0 %v2706
        %2856 = vmatprep.subr.mxu0 %v2705
        %2857 = vmatpush1.msra.mxu0 %v2704
        %2858 = vmatprep.subr.mxu0 %v2703
        %2859 = vmatpush1.msra.mxu0 %v2702
        %2860 = vmatprep.subr.mxu0 %v2701
        %2861 = vmatpush1.msra.mxu0 %v2700
        %2862 = vmatprep.subr.mxu0 %v2763
        %2863 = vmatpush2.msra.mxu0 %v2762
        %2864 = vmatprep.subr.mxu0 %v2761
        %2865 = vmatpush2.msra.mxu0 %v2760
        %2866 = vmatprep.subr.mxu0 %v2759
        %2867 = vmatpush2.msra.mxu0 %v2758
        %2868 = vmatprep.subr.mxu0 %v2757
        %2869 = vmatpush2.msra.mxu0 %v2756
        %2870 = vmatprep.subr.mxu0 %v2755
        %2871 = vmatpush2.msra.mxu0 %v2754
        %2872 = vmatprep.subr.mxu0 %v2753
        %2873 = vmatpush2.msra.mxu0 %v2752
        %2874 = vmatprep.subr.mxu0 %v2751
        %2875 = vmatpush2.msra.mxu0 %v2750
        %2876 = vmatprep.subr.mxu0 %v2749
        %2877 = vmatpush2.msra.mxu0 %v2748
        %2878 = vmatprep.subr.mxu0 %v2747
        %2879 = vmatpush2.msra.mxu0 %v2746
        %2880 = vmatprep.subr.mxu0 %v2745
        %2881 = vmatpush2.msra.mxu0 %v2744
        %2882 = vmatprep.subr.mxu0 %v2743
        %2883 = vmatpush2.msra.mxu0 %v2742
        %2884 = vmatprep.subr.mxu0 %v2741
        %2885 = vmatpush2.msra.mxu0 %v2740
        %2886 = vmatprep.subr.mxu0 %v2739
        %2887 = vmatpush2.msra.mxu0 %v2738
        %2888 = vmatprep.subr.mxu0 %v2737
        %2889 = vmatpush2.msra.mxu0 %v2736
        %2890 = vmatprep.subr.mxu0 %v2735
        %2891 = vmatpush2.msra.mxu0 %v2734
        %2892 = vmatprep.subr.mxu0 %v2733
        %2893 = vmatpush2.msra.mxu0 %v2732
        %2894 = vmatprep.mubr.f32.mxu0 %v2614
        %2895 = vmatmul.mubr.f32.gmra.mxu0 %v2612
        %v2896 = vpop.f32.mrf.mxu0
        %v2897 = vadd.f32 0.0, %v2896
        %v2898 = vpop.f32.mrf.mxu0
        %v2899 = vadd.f32 0.0, %v2898
        %2900 = vmatprep.mubr.f32.mxu0 %v2620
        %2901 = vmatmul.mubr.f32.gmra.mxu0 %v2618
        %v2902 = vpop.f32.mrf.mxu0
        %v2903 = vadd.f32 0.0, %v2902
        %v2904 = vpop.f32.mrf.mxu0
        %v2905 = vadd.f32 0.0, %v2904
        %2906 = vdwg.mxu0
        %2907 = vmatprep.subr.mxu0 %v2795
        %2908 = vmatpush1.msra.mxu0 %v2794
        %2909 = vmatprep.subr.mxu0 %v2793
        %2910 = vmatpush1.msra.mxu0 %v2792
        %2911 = vmatprep.subr.mxu0 %v2791
        %2912 = vmatpush1.msra.mxu0 %v2790
        %2913 = vmatprep.subr.mxu0 %v2789
        %2914 = vmatpush1.msra.mxu0 %v2788
        %2915 = vmatprep.subr.mxu0 %v2787
        %2916 = vmatpush1.msra.mxu0 %v2786
        %2917 = vmatprep.subr.mxu0 %v2785
        %2918 = vmatpush1.msra.mxu0 %v2784
        %2919 = vmatprep.subr.mxu0 %v2783
        %2920 = vmatpush1.msra.mxu0 %v2782
        %2921 = vmatprep.subr.mxu0 %v2781
        %2922 = vmatpush1.msra.mxu0 %v2780
        %2923 = vmatprep.subr.mxu0 %v2779
        %2924 = vmatpush1.msra.mxu0 %v2778
        %2925 = vmatprep.subr.mxu0 %v2777
        %2926 = vmatpush1.msra.mxu0 %v2776
        %2927 = vmatprep.subr.mxu0 %v2775
        %2928 = vmatpush1.msra.mxu0 %v2774
        %2929 = vmatprep.subr.mxu0 %v2773
        %2930 = vmatpush1.msra.mxu0 %v2772
        %2931 = vmatprep.subr.mxu0 %v2771
        %2932 = vmatpush1.msra.mxu0 %v2770
        %2933 = vmatprep.subr.mxu0 %v2769
        %2934 = vmatpush1.msra.mxu0 %v2768
        %2935 = vmatprep.subr.mxu0 %v2767
        %2936 = vmatpush1.msra.mxu0 %v2766
        %2937 = vmatprep.subr.mxu0 %v2765
        %2938 = vmatpush1.msra.mxu0 %v2764
        %2939 = vmatprep.subr.mxu0 0.0
        %2940 = vmatpush2.msra.mxu0 0.0
        %2941 = vmatprep.subr.mxu0 0.0
        %2942 = vmatpush2.msra.mxu0 0.0
        %2943 = vmatprep.subr.mxu0 %v2823
        %2944 = vmatpush2.msra.mxu0 %v2822
        %2945 = vmatprep.subr.mxu0 %v2821
        %2946 = vmatpush2.msra.mxu0 %v2820
        %2947 = vmatprep.subr.mxu0 %v2819
        %2948 = vmatpush2.msra.mxu0 %v2818
        %2949 = vmatprep.subr.mxu0 %v2817
        %2950 = vmatpush2.msra.mxu0 %v2816
        %2951 = vmatprep.subr.mxu0 %v2815
        %2952 = vmatpush2.msra.mxu0 %v2814
        %2953 = vmatprep.subr.mxu0 %v2813
        %2954 = vmatpush2.msra.mxu0 %v2812
        %2955 = vmatprep.subr.mxu0 %v2811
        %2956 = vmatpush2.msra.mxu0 %v2810
        %2957 = vmatprep.subr.mxu0 %v2809
        %2958 = vmatpush2.msra.mxu0 %v2808
        %2959 = vmatprep.subr.mxu0 %v2807
        %2960 = vmatpush2.msra.mxu0 %v2806
        %2961 = vmatprep.subr.mxu0 %v2805
        %2962 = vmatpush2.msra.mxu0 %v2804
        %2963 = vmatprep.subr.mxu0 %v2803
        %2964 = vmatpush2.msra.mxu0 %v2802
        %2965 = vmatprep.subr.mxu0 %v2801
        %2966 = vmatpush2.msra.mxu0 %v2800
        %2967 = vmatprep.subr.mxu0 %v2799
        %2968 = vmatpush2.msra.mxu0 %v2798
        %2969 = vmatprep.subr.mxu0 %v2797
        %2970 = vmatpush2.msra.mxu0 %v2796
        %2971 = vmatprep.mubr.f32.mxu0 %v2825
        %2972 = vmatmul.mubr.f32.gmra.mxu0 %v2689
        %v2973 = vpop.f32.mrf.mxu0
        %v2974 = vadd.f32 %v2897, %v2973
        %v2975 = vpop.f32.mrf.mxu0
        %v2976 = vadd.f32 %v2899, %v2975
        %2977 = vmatprep.mubr.f32.mxu0 %v2828
        %2978 = vmatmul.mubr.f32.gmra.mxu0 %v2695
        %v2979 = vpop.f32.mrf.mxu0
        %v2980 = vadd.f32 %v2903, %v2979
        %v2981 = vpop.f32.mrf.mxu0
        %v2982 = vadd.f32 %v2905, %v2981
        %2983 = vdwg.mxu0
        %v2985 = vsel %vm2034, %v2404, 0
        %v2988 = vsel %vm2034, %v2410, 0
        %2990 = vmatprep.subr.mxu0 %v2443
        %2991 = vmatpush1.msra.mxu0 %v2442
        %2992 = vmatprep.subr.mxu0 %v2441
        %2993 = vmatpush1.msra.mxu0 %v2440
        %2994 = vmatprep.subr.mxu0 %v2439
        %2995 = vmatpush1.msra.mxu0 %v2438
        %2996 = vmatprep.subr.mxu0 %v2437
        %2997 = vmatpush1.msra.mxu0 %v2436
        %2998 = vmatprep.subr.mxu0 %v2435
        %2999 = vmatpush1.msra.mxu0 %v2434
        %3000 = vmatprep.subr.mxu0 %v2433
        %3001 = vmatpush1.msra.mxu0 %v2432
        %3002 = vmatprep.subr.mxu0 %v2431
        %3003 = vmatpush1.msra.mxu0 %v2430
        %3004 = vmatprep.subr.mxu0 %v2429
        %3005 = vmatpush1.msra.mxu0 %v2428
        %3006 = vmatprep.subr.mxu0 %v2427
        %3007 = vmatpush1.msra.mxu0 %v2426
        %3008 = vmatprep.subr.mxu0 %v2425
        %3009 = vmatpush1.msra.mxu0 %v2424
        %3010 = vmatprep.subr.mxu0 %v2423
        %3011 = vmatpush1.msra.mxu0 %v2422
        %3012 = vmatprep.subr.mxu0 %v2421
        %3013 = vmatpush1.msra.mxu0 %v2420
        %3014 = vmatprep.subr.mxu0 %v2419
        %3015 = vmatpush1.msra.mxu0 %v2418
        %3016 = vmatprep.subr.mxu0 %v2417
        %3017 = vmatpush1.msra.mxu0 %v2416
        %3018 = vmatprep.subr.mxu0 %v2415
        %3019 = vmatpush1.msra.mxu0 %v2414
        %3020 = vmatprep.subr.mxu0 %v2413
        %3021 = vmatpush1.msra.mxu0 %v2412
        %3022 = vmatprep.subr.mxu0 %v2475
        %3023 = vmatpush2.msra.mxu0 %v2474
        %3024 = vmatprep.subr.mxu0 %v2473
        %3025 = vmatpush2.msra.mxu0 %v2472
        %3026 = vmatprep.subr.mxu0 %v2471
        %3027 = vmatpush2.msra.mxu0 %v2470
        %3028 = vmatprep.subr.mxu0 %v2469
        %3029 = vmatpush2.msra.mxu0 %v2468
        %3030 = vmatprep.subr.mxu0 %v2467
        %3031 = vmatpush2.msra.mxu0 %v2466
        %3032 = vmatprep.subr.mxu0 %v2465
        %3033 = vmatpush2.msra.mxu0 %v2464
        %3034 = vmatprep.subr.mxu0 %v2463
        %3035 = vmatpush2.msra.mxu0 %v2462
        %3036 = vmatprep.subr.mxu0 %v2461
        %3037 = vmatpush2.msra.mxu0 %v2460
        %3038 = vmatprep.subr.mxu0 %v2459
        %3039 = vmatpush2.msra.mxu0 %v2458
        %3040 = vmatprep.subr.mxu0 %v2457
        %3041 = vmatpush2.msra.mxu0 %v2456
        %3042 = vmatprep.subr.mxu0 %v2455
        %3043 = vmatpush2.msra.mxu0 %v2454
        %3044 = vmatprep.subr.mxu0 %v2453
        %3045 = vmatpush2.msra.mxu0 %v2452
        %3046 = vmatprep.subr.mxu0 %v2451
        %3047 = vmatpush2.msra.mxu0 %v2450
        %3048 = vmatprep.subr.mxu0 %v2449
        %3049 = vmatpush2.msra.mxu0 %v2448
        %3050 = vmatprep.subr.mxu0 %v2447
        %3051 = vmatpush2.msra.mxu0 %v2446
        %3052 = vmatprep.subr.mxu0 %v2445
        %3053 = vmatpush2.msra.mxu0 %v2444
        %3054 = vmatprep.mubr.f32.mxu0 %v2327
        %3055 = vmatmul.mubr.f32.gmra.mxu0 %v2325
        %v3056 = vpop.f32.mrf.mxu0
        %v3057 = vadd.f32 %v2974, %v3056
        %v3058 = vpop.f32.mrf.mxu0
        %v3059 = vadd.f32 %v2976, %v3058
        %3060 = vmatprep.mubr.f32.mxu0 %v2333
        %3061 = vmatmul.mubr.f32.gmra.mxu0 %v2331
        %v3062 = vpop.f32.mrf.mxu0
        %v3063 = vadd.f32 %v2980, %v3062
        %v3064 = vpop.f32.mrf.mxu0
        %v3065 = vadd.f32 %v2982, %v3064
        %3066 = vdwg.mxu0
        %3067 = vmatprep.subr.mxu0 %v2507
        %3068 = vmatpush1.msra.mxu0 %v2506
        %3069 = vmatprep.subr.mxu0 %v2505
        %3070 = vmatpush1.msra.mxu0 %v2504
        %3071 = vmatprep.subr.mxu0 %v2503
        %3072 = vmatpush1.msra.mxu0 %v2502
        %3073 = vmatprep.subr.mxu0 %v2501
        %3074 = vmatpush1.msra.mxu0 %v2500
        %3075 = vmatprep.subr.mxu0 %v2499
        %3076 = vmatpush1.msra.mxu0 %v2498
        %3077 = vmatprep.subr.mxu0 %v2497
        %3078 = vmatpush1.msra.mxu0 %v2496
        %3079 = vmatprep.subr.mxu0 %v2495
        %3080 = vmatpush1.msra.mxu0 %v2494
        %3081 = vmatprep.subr.mxu0 %v2493
        %3082 = vmatpush1.msra.mxu0 %v2492
        %3083 = vmatprep.subr.mxu0 %v2491
        %3084 = vmatpush1.msra.mxu0 %v2490
        %3085 = vmatprep.subr.mxu0 %v2489
        %3086 = vmatpush1.msra.mxu0 %v2488
        %3087 = vmatprep.subr.mxu0 %v2487
        %3088 = vmatpush1.msra.mxu0 %v2486
        %3089 = vmatprep.subr.mxu0 %v2485
        %3090 = vmatpush1.msra.mxu0 %v2484
        %3091 = vmatprep.subr.mxu0 %v2483
        %3092 = vmatpush1.msra.mxu0 %v2482
        %3093 = vmatprep.subr.mxu0 %v2481
        %3094 = vmatpush1.msra.mxu0 %v2480
        %3095 = vmatprep.subr.mxu0 %v2479
        %3096 = vmatpush1.msra.mxu0 %v2478
        %3097 = vmatprep.subr.mxu0 %v2477
        %3098 = vmatpush1.msra.mxu0 %v2476
        %3099 = vmatprep.subr.mxu0 0.0
        %3100 = vmatpush2.msra.mxu0 0.0
        %3101 = vmatprep.subr.mxu0 0.0
        %3102 = vmatpush2.msra.mxu0 0.0
        %3103 = vmatprep.subr.mxu0 %v2535
        %3104 = vmatpush2.msra.mxu0 %v2534
        %3105 = vmatprep.subr.mxu0 %v2533
        %3106 = vmatpush2.msra.mxu0 %v2532
        %3107 = vmatprep.subr.mxu0 %v2531
        %3108 = vmatpush2.msra.mxu0 %v2530
        %3109 = vmatprep.subr.mxu0 %v2529
        %3110 = vmatpush2.msra.mxu0 %v2528
        %3111 = vmatprep.subr.mxu0 %v2527
        %3112 = vmatpush2.msra.mxu0 %v2526
        %3113 = vmatprep.subr.mxu0 %v2525
        %3114 = vmatpush2.msra.mxu0 %v2524
        %3115 = vmatprep.subr.mxu0 %v2523
        %3116 = vmatpush2.msra.mxu0 %v2522
        %3117 = vmatprep.subr.mxu0 %v2521
        %3118 = vmatpush2.msra.mxu0 %v2520
        %3119 = vmatprep.subr.mxu0 %v2519
        %3120 = vmatpush2.msra.mxu0 %v2518
        %3121 = vmatprep.subr.mxu0 %v2517
        %3122 = vmatpush2.msra.mxu0 %v2516
        %3123 = vmatprep.subr.mxu0 %v2515
        %3124 = vmatpush2.msra.mxu0 %v2514
        %3125 = vmatprep.subr.mxu0 %v2513
        %3126 = vmatpush2.msra.mxu0 %v2512
        %3127 = vmatprep.subr.mxu0 %v2511
        %3128 = vmatpush2.msra.mxu0 %v2510
        %3129 = vmatprep.subr.mxu0 %v2509
        %3130 = vmatpush2.msra.mxu0 %v2508
        %3131 = vmatprep.mubr.f32.mxu0 %v2985
        %3132 = vmatmul.mubr.f32.gmra.mxu0 %v2402
        %v3133 = vpop.f32.mrf.mxu0
        %v3134 = vadd.f32 %v3057, %v3133
        %v3135 = vpop.f32.mrf.mxu0
        %v3136 = vadd.f32 %v3059, %v3135
        %3137 = vmatprep.mubr.f32.mxu0 %v2988
        %3138 = vmatmul.mubr.f32.gmra.mxu0 %v2408
        %v3139 = vpop.f32.mrf.mxu0
        %v3140 = vadd.f32 %v3063, %v3139
        %v3141 = vpop.f32.mrf.mxu0
        %v3142 = vadd.f32 %v3065, %v3141
        %3143 = vdwg.mxu0
        %s3144 = scalar_lea.vmem %s7, 32
        %v3145 = vld [vmem:[%s3144] sm:$0xff]
        %v3146 = vld [vmem:[%s3144 + $0x8] sm:$0x7f]
        %v3148 = vsel %vm2239, %v3145, 0
        %v3151 = vsel %vm2239, %v3146, 0
        %3153 = vmatprep.subr.mxu0 0.0
        %3154 = vmatpush1.msra.mxu0 0.0
        %3155 = vmatprep.subr.mxu0 0.0
        %3156 = vmatpush1.msra.mxu0 0.0
        %3157 = vmatprep.subr.mxu0 0.0
        %3158 = vmatpush1.msra.mxu0 0.0
        %3159 = vmatprep.subr.mxu0 0.0
        %3160 = vmatpush1.msra.mxu0 0.0
        %3161 = vmatprep.subr.mxu0 0.0
        %3162 = vmatpush1.msra.mxu0 0.0
        %3163 = vmatprep.subr.mxu0 0.0
        %3164 = vmatpush1.msra.mxu0 0.0
        %3165 = vmatprep.subr.mxu0 0.0
        %3166 = vmatpush1.msra.mxu0 0.0
        %3167 = vmatprep.subr.mxu0 0.0
        %3168 = vmatpush1.msra.mxu0 0.0
        %3169 = vmatprep.subr.mxu0 0.0
        %3170 = vmatpush1.msra.mxu0 0.0
        %3171 = vmatprep.subr.mxu0 0.0
        %3172 = vmatpush1.msra.mxu0 0.0
        %3173 = vmatprep.subr.mxu0 0.0
        %3174 = vmatpush1.msra.mxu0 0.0
        %3175 = vmatprep.subr.mxu0 0.0
        %3176 = vmatpush1.msra.mxu0 0.0
        %3177 = vmatprep.subr.mxu0 %v2250
        %3178 = vmatpush1.msra.mxu0 %v2247
        %3179 = vmatprep.subr.mxu0 %v2230
        %3180 = vmatpush1.msra.mxu0 %v2229
        %3181 = vmatprep.subr.mxu0 %v2226
        %3182 = vmatpush1.msra.mxu0 %v2225
        %3183 = vmatprep.subr.mxu0 %v2222
        %3184 = vmatpush1.msra.mxu0 %v2221
        %3185 = vmatprep.subr.mxu0 0.0
        %3186 = vmatpush2.msra.mxu0 0.0
        %3187 = vmatprep.subr.mxu0 0.0
        %3188 = vmatpush2.msra.mxu0 0.0
        %3189 = vmatprep.subr.mxu0 0.0
        %3190 = vmatpush2.msra.mxu0 0.0
        %3191 = vmatprep.subr.mxu0 0.0
        %3192 = vmatpush2.msra.mxu0 0.0
        %3193 = vmatprep.subr.mxu0 0.0
        %3194 = vmatpush2.msra.mxu0 0.0
        %3195 = vmatprep.subr.mxu0 0.0
        %3196 = vmatpush2.msra.mxu0 0.0
        %3197 = vmatprep.subr.mxu0 0.0
        %3198 = vmatpush2.msra.mxu0 0.0
        %3199 = vmatprep.subr.mxu0 0.0
        %3200 = vmatpush2.msra.mxu0 0.0
        %3201 = vmatprep.subr.mxu0 0.0
        %3202 = vmatpush2.msra.mxu0 0.0
        %3203 = vmatprep.subr.mxu0 0.0
        %3204 = vmatpush2.msra.mxu0 0.0
        %3205 = vmatprep.subr.mxu0 0.0
        %3206 = vmatpush2.msra.mxu0 0.0
        %3207 = vmatprep.subr.mxu0 0.0
        %3208 = vmatpush2.msra.mxu0 0.0
        %3209 = vmatprep.subr.mxu0 0.0
        %3210 = vmatpush2.msra.mxu0 0.0
        %3211 = vmatprep.subr.mxu0 0.0
        %3212 = vmatpush2.msra.mxu0 0.0
        %3213 = vmatprep.subr.mxu0 0.0
        %3214 = vmatpush2.msra.mxu0 0.0
        %3215 = vmatprep.subr.mxu0 0.0
        %3216 = vmatpush2.msra.mxu0 0.0
        %3217 = vmatprep.mubr.f32.mxu0 0.0
        %3218 = vmatmul.mubr.f32.gmra.mxu0 %v3148
        %v3219 = vpop.f32.mrf.mxu0
        %v3220 = vadd.f32 0.0, %v3219
        %v3221 = vpop.f32.mrf.mxu0
        %v3222 = vadd.f32 0.0, %v3221
        %3223 = vmatprep.mubr.f32.mxu0 0.0
        %3224 = vmatmul.mubr.f32.gmra.mxu0 %v3151
        %v3225 = vpop.f32.mrf.mxu0
        %v3226 = vadd.f32 0.0, %v3225
        %v3227 = vpop.f32.mrf.mxu0
        %v3228 = vadd.f32 0.0, %v3227
        %3229 = vdwg.mxu0
        %3230 = vmatprep.subr.mxu0 0.0
        %3231 = vmatpush1.msra.mxu0 0.0
        %3232 = vmatprep.subr.mxu0 0.0
        %3233 = vmatpush1.msra.mxu0 0.0
        %3234 = vmatprep.subr.mxu0 0.0
        %3235 = vmatpush1.msra.mxu0 0.0
        %3236 = vmatprep.subr.mxu0 0.0
        %3237 = vmatpush1.msra.mxu0 0.0
        %3238 = vmatprep.subr.mxu0 0.0
        %3239 = vmatpush1.msra.mxu0 0.0
        %3240 = vmatprep.subr.mxu0 0.0
        %3241 = vmatpush1.msra.mxu0 0.0
        %3242 = vmatprep.subr.mxu0 0.0
        %3243 = vmatpush1.msra.mxu0 0.0
        %3244 = vmatprep.subr.mxu0 0.0
        %3245 = vmatpush1.msra.mxu0 0.0
        %3246 = vmatprep.subr.mxu0 0.0
        %3247 = vmatpush1.msra.mxu0 0.0
        %3248 = vmatprep.subr.mxu0 0.0
        %3249 = vmatpush1.msra.mxu0 0.0
        %3250 = vmatprep.subr.mxu0 0.0
        %3251 = vmatpush1.msra.mxu0 0.0
        %3252 = vmatprep.subr.mxu0 0.0
        %3253 = vmatpush1.msra.mxu0 0.0
        %3254 = vmatprep.subr.mxu0 %v2256
        %3255 = vmatpush1.msra.mxu0 %v2253
        %3256 = vmatprep.subr.mxu0 %v2232
        %3257 = vmatpush1.msra.mxu0 %v2231
        %3258 = vmatprep.subr.mxu0 %v2228
        %3259 = vmatpush1.msra.mxu0 %v2227
        %3260 = vmatprep.subr.mxu0 %v2224
        %3261 = vmatpush1.msra.mxu0 %v2223
        %3262 = vmatprep.subr.mxu0 0.0
        %3263 = vmatpush2.msra.mxu0 0.0
        %3264 = vmatprep.subr.mxu0 0.0
        %3265 = vmatpush2.msra.mxu0 0.0
        %3266 = vmatprep.subr.mxu0 0.0
        %3267 = vmatpush2.msra.mxu0 0.0
        %3268 = vmatprep.subr.mxu0 0.0
        %3269 = vmatpush2.msra.mxu0 0.0
        %3270 = vmatprep.subr.mxu0 0.0
        %3271 = vmatpush2.msra.mxu0 0.0
        %3272 = vmatprep.subr.mxu0 0.0
        %3273 = vmatpush2.msra.mxu0 0.0
        %3274 = vmatprep.subr.mxu0 0.0
        %3275 = vmatpush2.msra.mxu0 0.0
        %3276 = vmatprep.subr.mxu0 0.0
        %3277 = vmatpush2.msra.mxu0 0.0
        %3278 = vmatprep.subr.mxu0 0.0
        %3279 = vmatpush2.msra.mxu0 0.0
        %3280 = vmatprep.subr.mxu0 0.0
        %3281 = vmatpush2.msra.mxu0 0.0
        %3282 = vmatprep.subr.mxu0 0.0
        %3283 = vmatpush2.msra.mxu0 0.0
        %3284 = vmatprep.subr.mxu0 0.0
        %3285 = vmatpush2.msra.mxu0 0.0
        %3286 = vmatprep.subr.mxu0 0.0
        %3287 = vmatpush2.msra.mxu0 0.0
        %3288 = vmatprep.subr.mxu0 0.0
        %3289 = vmatpush2.msra.mxu0 0.0
        %3290 = vmatprep.subr.mxu0 0.0
        %3291 = vmatpush2.msra.mxu0 0.0
        %3292 = vmatprep.subr.mxu0 0.0
        %3293 = vmatpush2.msra.mxu0 0.0
        %3294 = vmatprep.mubr.f32.mxu0 0.0
        %3295 = vmatmul.mubr.f32.gmra.mxu0 %v3148
        %v3296 = vpop.f32.mrf.mxu0
        %v3297 = vadd.f32 0.0, %v3296
        %v3298 = vpop.f32.mrf.mxu0
        %v3299 = vadd.f32 0.0, %v3298
        %3300 = vmatprep.mubr.f32.mxu0 0.0
        %3301 = vmatmul.mubr.f32.gmra.mxu0 %v3151
        %v3302 = vpop.f32.mrf.mxu0
        %v3303 = vadd.f32 0.0, %v3302
        %v3304 = vpop.f32.mrf.mxu0
        %v3305 = vadd.f32 0.0, %v3304
        %3306 = vdwg.mxu0
        %s3307 = scalar_lea.vmem %s8, 1984
        %v3308 = vld [vmem:[%s3307] sm:$0xff]
        %v3309 = vld [vmem:[%s3307 + $0x8] sm:$0xff]
        %v3310 = vld [vmem:[%s3307 + $0x10] sm:$0xff]
        %v3311 = vld [vmem:[%s3307 + $0x18] sm:$0xff]
        %v3312 = vld [vmem:[%s3307 + $0x20] sm:$0xff]
        %v3313 = vld [vmem:[%s3307 + $0x28] sm:$0xff]
        %v3314 = vld [vmem:[%s3307 + $0x30] sm:$0xff]
        %v3315 = vld [vmem:[%s3307 + $0x38] sm:$0xff]
        %v3316 = vld [vmem:[%s3307 + $0x40] sm:$0xff]
        %v3317 = vld [vmem:[%s3307 + $0x48] sm:$0xff]
        %v3318 = vld [vmem:[%s3307 + $0x50] sm:$0xff]
        %v3319 = vld [vmem:[%s3307 + $0x58] sm:$0xff]
        %v3320 = vld [vmem:[%s3307 + $0x60] sm:$0xff]
        %v3321 = vld [vmem:[%s3307 + $0x68] sm:$0xff]
        %v3322 = vld [vmem:[%s3307 + $0x70] sm:$0xff]
        %v3323 = vld [vmem:[%s3307 + $0x78] sm:$0xff]
        %v3324 = vld [vmem:[%s3307 + $0x80] sm:$0xff]
        %v3325 = vld [vmem:[%s3307 + $0x88] sm:$0xff]
        %v3326 = vld [vmem:[%s3307 + $0x90] sm:$0xff]
        %v3327 = vld [vmem:[%s3307 + $0x98] sm:$0xff]
        %v3328 = vld [vmem:[%s3307 + $0xa0] sm:$0xff]
        %v3329 = vld [vmem:[%s3307 + $0xa8] sm:$0xff]
        %v3330 = vld [vmem:[%s3307 + $0xb0] sm:$0xff]
        %v3331 = vld [vmem:[%s3307 + $0xb8] sm:$0xff]
        %v3332 = vld [vmem:[%s3307 + $0xc0] sm:$0xff]
        %v3333 = vld [vmem:[%s3307 + $0xc8] sm:$0xff]
        %v3334 = vld [vmem:[%s3307 + $0xd0] sm:$0xff]
        %v3335 = vld [vmem:[%s3307 + $0xd8] sm:$0xff]
        %v3336 = vld [vmem:[%s3307 + $0xe0] sm:$0xff]
        %v3337 = vld [vmem:[%s3307 + $0xe8] sm:$0xff]
        %v3338 = vld [vmem:[%s3307 + $0xf0] sm:$0xff]
        %v3339 = vld [vmem:[%s3307 + $0xf8] sm:$0xff]
        %v3340 = vld [vmem:[%s3307 + $0x100] sm:$0xff]
        %v3341 = vld [vmem:[%s3307 + $0x108] sm:$0xff]
        %v3342 = vld [vmem:[%s3307 + $0x110] sm:$0xff]
        %v3343 = vld [vmem:[%s3307 + $0x118] sm:$0xff]
        %v3344 = vld [vmem:[%s3307 + $0x120] sm:$0xff]
        %v3345 = vld [vmem:[%s3307 + $0x128] sm:$0xff]
        %v3346 = vld [vmem:[%s3307 + $0x130] sm:$0xff]
        %v3347 = vld [vmem:[%s3307 + $0x138] sm:$0xff]
        %v3348 = vld [vmem:[%s3307 + $0x140] sm:$0xff]
        %v3349 = vld [vmem:[%s3307 + $0x148] sm:$0xff]
        %v3350 = vld [vmem:[%s3307 + $0x150] sm:$0xff]
        %v3351 = vld [vmem:[%s3307 + $0x158] sm:$0xff]
        %v3352 = vld [vmem:[%s3307 + $0x160] sm:$0xff]
        %v3353 = vld [vmem:[%s3307 + $0x168] sm:$0xff]
        %v3354 = vld [vmem:[%s3307 + $0x170] sm:$0xff]
        %v3355 = vld [vmem:[%s3307 + $0x178] sm:$0xff]
        %v3356 = vld [vmem:[%s3307 + $0x180] sm:$0xff]
        %v3357 = vld [vmem:[%s3307 + $0x188] sm:$0xff]
        %v3358 = vld [vmem:[%s3307 + $0x190] sm:$0xff]
        %v3359 = vld [vmem:[%s3307 + $0x198] sm:$0xff]
        %v3360 = vld [vmem:[%s3307 + $0x1a0] sm:$0xff]
        %v3361 = vld [vmem:[%s3307 + $0x1a8] sm:$0xff]
        %v3362 = vld [vmem:[%s3307 + $0x1b0] sm:$0xff]
        %v3363 = vld [vmem:[%s3307 + $0x1b8] sm:$0xff]
        %v3364 = vld [vmem:[%s3307 + $0x1c0] sm:$0xff]
        %v3365 = vld [vmem:[%s3307 + $0x1c8] sm:$0xff]
        %v3366 = vld [vmem:[%s3307 + $0x1d0] sm:$0xff]
        %v3367 = vld [vmem:[%s3307 + $0x1d8] sm:$0xff]
        %v3368 = vld [vmem:[%s3307 + $0x1e0] sm:$0xff]
        %v3369 = vld [vmem:[%s3307 + $0x1e8] sm:$0xff]
        %v3370 = vld [vmem:[%s3307 + $0x1f0] sm:$0xff]
        %v3371 = vld [vmem:[%s3307 + $0x1f8] sm:$0xff]
        %v3372 = vld [vmem:[%s3307 + $0x200] sm:$0xff]
        %v3373 = vld [vmem:[%s3307 + $0x208] sm:$0xff]
        %v3374 = vld [vmem:[%s3307 + $0x210] sm:$0xff]
        %v3375 = vld [vmem:[%s3307 + $0x218] sm:$0xff]
        %v3376 = vld [vmem:[%s3307 + $0x220] sm:$0xff]
        %v3377 = vld [vmem:[%s3307 + $0x228] sm:$0xff]
        %v3378 = vld [vmem:[%s3307 + $0x230] sm:$0xff]
        %v3379 = vld [vmem:[%s3307 + $0x238] sm:$0xff]
        %v3380 = vld [vmem:[%s3307 + $0x240] sm:$0xff]
        %v3381 = vld [vmem:[%s3307 + $0x248] sm:$0xff]
        %v3382 = vld [vmem:[%s3307 + $0x250] sm:$0xff]
        %v3383 = vld [vmem:[%s3307 + $0x258] sm:$0xff]
        %v3384 = vld [vmem:[%s3307 + $0x260] sm:$0xff]
        %v3385 = vld [vmem:[%s3307 + $0x268] sm:$0xff]
        %v3386 = vld [vmem:[%s3307 + $0x270] sm:$0xff]
        %v3387 = vld [vmem:[%s3307 + $0x278] sm:$0xff]
        %v3388 = vld [vmem:[%s3307 + $0x280] sm:$0xff]
        %v3389 = vld [vmem:[%s3307 + $0x288] sm:$0xff]
        %v3390 = vld [vmem:[%s3307 + $0x290] sm:$0xff]
        %v3391 = vld [vmem:[%s3307 + $0x298] sm:$0xff]
        %v3392 = vld [vmem:[%s3307 + $0x2a0] sm:$0xff]
        %v3393 = vld [vmem:[%s3307 + $0x2a8] sm:$0xff]
        %v3394 = vld [vmem:[%s3307 + $0x2b0] sm:$0xff]
        %v3395 = vld [vmem:[%s3307 + $0x2b8] sm:$0xff]
        %v3396 = vld [vmem:[%s3307 + $0x2c0] sm:$0xff]
        %v3397 = vld [vmem:[%s3307 + $0x2c8] sm:$0xff]
        %v3398 = vld [vmem:[%s3307 + $0x2d0] sm:$0xff]
        %v3399 = vld [vmem:[%s3307 + $0x2d8] sm:$0xff]
        %v3400 = vld [vmem:[%s3307 + $0x2e0] sm:$0xff]
        %v3401 = vld [vmem:[%s3307 + $0x2e8] sm:$0xff]
        %v3402 = vld [vmem:[%s3307 + $0x2f0] sm:$0xff]
        %v3403 = vld [vmem:[%s3307 + $0x2f8] sm:$0xff]
        %v3404 = vld [vmem:[%s3307 + $0x300] sm:$0xff]
        %v3405 = vld [vmem:[%s3307 + $0x308] sm:$0xff]
        %v3406 = vld [vmem:[%s3307 + $0x310] sm:$0xff]
        %v3407 = vld [vmem:[%s3307 + $0x318] sm:$0xff]
        %v3408 = vld [vmem:[%s3307 + $0x320] sm:$0xff]
        %v3409 = vld [vmem:[%s3307 + $0x328] sm:$0xff]
        %v3410 = vld [vmem:[%s3307 + $0x330] sm:$0xff]
        %v3411 = vld [vmem:[%s3307 + $0x338] sm:$0xff]
        %v3412 = vld [vmem:[%s3307 + $0x340] sm:$0xff]
        %v3413 = vld [vmem:[%s3307 + $0x348] sm:$0xff]
        %v3414 = vld [vmem:[%s3307 + $0x350] sm:$0xff]
        %v3415 = vld [vmem:[%s3307 + $0x358] sm:$0xff]
        %v3416 = vld [vmem:[%s3307 + $0x360] sm:$0xff]
        %v3417 = vld [vmem:[%s3307 + $0x368] sm:$0xff]
        %v3418 = vld [vmem:[%s3307 + $0x370] sm:$0xff]
        %v3419 = vld [vmem:[%s3307 + $0x378] sm:$0xff]
        %v3420 = vld [vmem:[%s3307 + $0x380] sm:$0xff]
        %v3421 = vld [vmem:[%s3307 + $0x388] sm:$0xff]
        %v3422 = vld [vmem:[%s3307 + $0x390] sm:$0xff]
        %v3423 = vld [vmem:[%s3307 + $0x398] sm:$0xff]
        %v3424 = vld [vmem:[%s3307 + $0x3a0] sm:$0xff]
        %v3425 = vld [vmem:[%s3307 + $0x3a8] sm:$0xff]
        %v3426 = vld [vmem:[%s3307 + $0x3b0] sm:$0xff]
        %v3427 = vld [vmem:[%s3307 + $0x3b8] sm:$0xff]
        %v3428 = vld [vmem:[%s3307 + $0x3c0] sm:$0xff]
        %v3429 = vld [vmem:[%s3307 + $0x3c8] sm:$0xff]
        %v3430 = vld [vmem:[%s3307 + $0x3d0] sm:$0xff]
        %v3431 = vld [vmem:[%s3307 + $0x3d8] sm:$0xff]
        %v3433 = vsel %vm2034, %v3299, 0
        %v3436 = vsel %vm2034, %v3305, 0
        %3438 = vmatprep.subr.mxu0 %v3339
        %3439 = vmatpush1.msra.mxu0 %v3338
        %3440 = vmatprep.subr.mxu0 %v3337
        %3441 = vmatpush1.msra.mxu0 %v3336
        %3442 = vmatprep.subr.mxu0 %v3335
        %3443 = vmatpush1.msra.mxu0 %v3334
        %3444 = vmatprep.subr.mxu0 %v3333
        %3445 = vmatpush1.msra.mxu0 %v3332
        %3446 = vmatprep.subr.mxu0 %v3331
        %3447 = vmatpush1.msra.mxu0 %v3330
        %3448 = vmatprep.subr.mxu0 %v3329
        %3449 = vmatpush1.msra.mxu0 %v3328
        %3450 = vmatprep.subr.mxu0 %v3327
        %3451 = vmatpush1.msra.mxu0 %v3326
        %3452 = vmatprep.subr.mxu0 %v3325
        %3453 = vmatpush1.msra.mxu0 %v3324
        %3454 = vmatprep.subr.mxu0 %v3323
        %3455 = vmatpush1.msra.mxu0 %v3322
        %3456 = vmatprep.subr.mxu0 %v3321
        %3457 = vmatpush1.msra.mxu0 %v3320
        %3458 = vmatprep.subr.mxu0 %v3319
        %3459 = vmatpush1.msra.mxu0 %v3318
        %3460 = vmatprep.subr.mxu0 %v3317
        %3461 = vmatpush1.msra.mxu0 %v3316
        %3462 = vmatprep.subr.mxu0 %v3315
        %3463 = vmatpush1.msra.mxu0 %v3314
        %3464 = vmatprep.subr.mxu0 %v3313
        %3465 = vmatpush1.msra.mxu0 %v3312
        %3466 = vmatprep.subr.mxu0 %v3311
        %3467 = vmatpush1.msra.mxu0 %v3310
        %3468 = vmatprep.subr.mxu0 %v3309
        %3469 = vmatpush1.msra.mxu0 %v3308
        %3470 = vmatprep.subr.mxu0 %v3371
        %3471 = vmatpush2.msra.mxu0 %v3370
        %3472 = vmatprep.subr.mxu0 %v3369
        %3473 = vmatpush2.msra.mxu0 %v3368
        %3474 = vmatprep.subr.mxu0 %v3367
        %3475 = vmatpush2.msra.mxu0 %v3366
        %3476 = vmatprep.subr.mxu0 %v3365
        %3477 = vmatpush2.msra.mxu0 %v3364
        %3478 = vmatprep.subr.mxu0 %v3363
        %3479 = vmatpush2.msra.mxu0 %v3362
        %3480 = vmatprep.subr.mxu0 %v3361
        %3481 = vmatpush2.msra.mxu0 %v3360
        %3482 = vmatprep.subr.mxu0 %v3359
        %3483 = vmatpush2.msra.mxu0 %v3358
        %3484 = vmatprep.subr.mxu0 %v3357
        %3485 = vmatpush2.msra.mxu0 %v3356
        %3486 = vmatprep.subr.mxu0 %v3355
        %3487 = vmatpush2.msra.mxu0 %v3354
        %3488 = vmatprep.subr.mxu0 %v3353
        %3489 = vmatpush2.msra.mxu0 %v3352
        %3490 = vmatprep.subr.mxu0 %v3351
        %3491 = vmatpush2.msra.mxu0 %v3350
        %3492 = vmatprep.subr.mxu0 %v3349
        %3493 = vmatpush2.msra.mxu0 %v3348
        %3494 = vmatprep.subr.mxu0 %v3347
        %3495 = vmatpush2.msra.mxu0 %v3346
        %3496 = vmatprep.subr.mxu0 %v3345
        %3497 = vmatpush2.msra.mxu0 %v3344
        %3498 = vmatprep.subr.mxu0 %v3343
        %3499 = vmatpush2.msra.mxu0 %v3342
        %3500 = vmatprep.subr.mxu0 %v3341
        %3501 = vmatpush2.msra.mxu0 %v3340
        %3502 = vmatprep.mubr.f32.mxu0 %v3222
        %3503 = vmatmul.mubr.f32.gmra.mxu0 %v3220
        %v3504 = vpop.f32.mrf.mxu0
        %v3505 = vadd.f32 0.0, %v3504
        %v3506 = vpop.f32.mrf.mxu0
        %v3507 = vadd.f32 0.0, %v3506
        %3508 = vmatprep.mubr.f32.mxu0 %v3228
        %3509 = vmatmul.mubr.f32.gmra.mxu0 %v3226
        %v3510 = vpop.f32.mrf.mxu0
        %v3511 = vadd.f32 0.0, %v3510
        %v3512 = vpop.f32.mrf.mxu0
        %v3513 = vadd.f32 0.0, %v3512
        %3514 = vdwg.mxu0
        %3515 = vmatprep.subr.mxu0 %v3403
        %3516 = vmatpush1.msra.mxu0 %v3402
        %3517 = vmatprep.subr.mxu0 %v3401
        %3518 = vmatpush1.msra.mxu0 %v3400
        %3519 = vmatprep.subr.mxu0 %v3399
        %3520 = vmatpush1.msra.mxu0 %v3398
        %3521 = vmatprep.subr.mxu0 %v3397
        %3522 = vmatpush1.msra.mxu0 %v3396
        %3523 = vmatprep.subr.mxu0 %v3395
        %3524 = vmatpush1.msra.mxu0 %v3394
        %3525 = vmatprep.subr.mxu0 %v3393
        %3526 = vmatpush1.msra.mxu0 %v3392
        %3527 = vmatprep.subr.mxu0 %v3391
        %3528 = vmatpush1.msra.mxu0 %v3390
        %3529 = vmatprep.subr.mxu0 %v3389
        %3530 = vmatpush1.msra.mxu0 %v3388
        %3531 = vmatprep.subr.mxu0 %v3387
        %3532 = vmatpush1.msra.mxu0 %v3386
        %3533 = vmatprep.subr.mxu0 %v3385
        %3534 = vmatpush1.msra.mxu0 %v3384
        %3535 = vmatprep.subr.mxu0 %v3383
        %3536 = vmatpush1.msra.mxu0 %v3382
        %3537 = vmatprep.subr.mxu0 %v3381
        %3538 = vmatpush1.msra.mxu0 %v3380
        %3539 = vmatprep.subr.mxu0 %v3379
        %3540 = vmatpush1.msra.mxu0 %v3378
        %3541 = vmatprep.subr.mxu0 %v3377
        %3542 = vmatpush1.msra.mxu0 %v3376
        %3543 = vmatprep.subr.mxu0 %v3375
        %3544 = vmatpush1.msra.mxu0 %v3374
        %3545 = vmatprep.subr.mxu0 %v3373
        %3546 = vmatpush1.msra.mxu0 %v3372
        %3547 = vmatprep.subr.mxu0 0.0
        %3548 = vmatpush2.msra.mxu0 0.0
        %3549 = vmatprep.subr.mxu0 0.0
        %3550 = vmatpush2.msra.mxu0 0.0
        %3551 = vmatprep.subr.mxu0 %v3431
        %3552 = vmatpush2.msra.mxu0 %v3430
        %3553 = vmatprep.subr.mxu0 %v3429
        %3554 = vmatpush2.msra.mxu0 %v3428
        %3555 = vmatprep.subr.mxu0 %v3427
        %3556 = vmatpush2.msra.mxu0 %v3426
        %3557 = vmatprep.subr.mxu0 %v3425
        %3558 = vmatpush2.msra.mxu0 %v3424
        %3559 = vmatprep.subr.mxu0 %v3423
        %3560 = vmatpush2.msra.mxu0 %v3422
        %3561 = vmatprep.subr.mxu0 %v3421
        %3562 = vmatpush2.msra.mxu0 %v3420
        %3563 = vmatprep.subr.mxu0 %v3419
        %3564 = vmatpush2.msra.mxu0 %v3418
        %3565 = vmatprep.subr.mxu0 %v3417
        %3566 = vmatpush2.msra.mxu0 %v3416
        %3567 = vmatprep.subr.mxu0 %v3415
        %3568 = vmatpush2.msra.mxu0 %v3414
        %3569 = vmatprep.subr.mxu0 %v3413
        %3570 = vmatpush2.msra.mxu0 %v3412
        %3571 = vmatprep.subr.mxu0 %v3411
        %3572 = vmatpush2.msra.mxu0 %v3410
        %3573 = vmatprep.subr.mxu0 %v3409
        %3574 = vmatpush2.msra.mxu0 %v3408
        %3575 = vmatprep.subr.mxu0 %v3407
        %3576 = vmatpush2.msra.mxu0 %v3406
        %3577 = vmatprep.subr.mxu0 %v3405
        %3578 = vmatpush2.msra.mxu0 %v3404
        %3579 = vmatprep.mubr.f32.mxu0 %v3433
        %3580 = vmatmul.mubr.f32.gmra.mxu0 %v3297
        %v3581 = vpop.f32.mrf.mxu0
        %v3582 = vadd.f32 %v3505, %v3581
        %v3583 = vpop.f32.mrf.mxu0
        %v3584 = vadd.f32 %v3507, %v3583
        %3585 = vmatprep.mubr.f32.mxu0 %v3436
        %3586 = vmatmul.mubr.f32.gmra.mxu0 %v3303
        %v3587 = vpop.f32.mrf.mxu0
        %v3588 = vadd.f32 %v3511, %v3587
        %v3589 = vpop.f32.mrf.mxu0
        %v3590 = vadd.f32 %v3513, %v3589
        %3591 = vdwg.mxu0
        %v3592 = vadd.f32 %v3134, %v3582
        %v3593 = vadd.f32 %v3136, %v3584
        %v3594 = vadd.f32 %v3140, %v3588
        %v3595 = vadd.f32 %v3142, %v3590
        %v3596 = vld [vmem:[%s9] sm:$0x3]
        %v3598 = vlaneseq
        %v3599 = vshrl.u32 %v3598, 7
        %v3600 = vsub.s32 0, %v3599
        %v3601 = vrot.slane %v3596, %v3600
        %v3602 = vlaneseq
        %v3603 = vshrl.u32 %v3602, 7
        %v3604 = vsub.s32 1, %v3603
        %v3605 = vrot.slane %v3596, %v3604
        %v3608 = vadd.f32 %v3592, %v3601
        %v3609 = vadd.f32 %v3593, %v3605
        %v3610 = vadd.f32 %v3594, %v3601
        %v3611 = vadd.f32 %v3595, %v3605
        %v3612 = vsel %vm2034, %v3609, 0.0
        %v3613 = vadd.f32 %v3608, %v3612
        %v3614 = vsel %vm2047, %v3610, 0.0
        %v3615 = vadd.f32 %v3613, %v3614
        %v3616 = vsel %vm2054, %v3611, 0.0
        %v3617 = vadd.f32 %v3615, %v3616
        %3618 = vadd.xlane.f32.xlu0 %v3617
        %v3619 = vpop.xlane.xlu0 %3618
        %v3620 = vrot.slane %v3619, 4
        %v3621 = vadd.f32 %v3619, %v3620
        %v3622 = vrot.slane %v3621, 2
        %v3623 = vadd.f32 %v3621, %v3622
        %v3624 = vrot.slane %v3623, 1
        %v3625 = vadd.f32 %v3623, %v3624
        %s3626 = vtos %v3625
        %v3627 = vrcp.pop 3600.0
        %s3628 = vtos %v3627
        %s3629 = smul.f32 %s3626, %s3628
        %v3630 = vstv %s3629
        %v3631 = vsub.f32 %v3608, %v3630
        %v3632 = vsub.f32 %v3609, %v3630
        %v3633 = vsub.f32 %v3610, %v3630
        %v3634 = vsub.f32 %v3611, %v3630
        %v3635 = vmul.f32 %v3631, %v3631
        %v3636 = vmul.f32 %v3632, %v3632
        %v3637 = vmul.f32 %v3633, %v3633
        %v3638 = vmul.f32 %v3634, %v3634
        %v3639 = vsel %vm2034, %v3636, 0.0
        %v3640 = vadd.f32 %v3635, %v3639
        %v3641 = vsel %vm2047, %v3637, 0.0
        %v3642 = vadd.f32 %v3640, %v3641
        %v3643 = vsel %vm2054, %v3638, 0.0
        %v3644 = vadd.f32 %v3642, %v3643
        %3645 = vadd.xlane.f32.xlu0 %v3644
        %v3646 = vpop.xlane.xlu0 %3645
        %v3647 = vrot.slane %v3646, 4
        %v3648 = vadd.f32 %v3646, %v3647
        %v3649 = vrot.slane %v3648, 2
        %v3650 = vadd.f32 %v3648, %v3649
        %v3651 = vrot.slane %v3650, 1
        %v3652 = vadd.f32 %v3650, %v3651
        %s3653 = vtos %v3652
        %v3654 = vrcp.pop 3600.0
        %s3655 = vtos %v3654
        %s3656 = smul.f32 %s3653, %s3655
        %s3657 = sadd.f32 %s3656, 1e-05
        %v3658 = vstv %s3657
        %v3659 = vrsqrt.pop %v3658
        %s3660 = vtos %v3659
        %v3661 = vstv %s3660
        %v3662 = vmul.f32 %v3631, %v3661
        %v3663 = vmul.f32 %v3632, %v3661
        %v3664 = vmul.f32 %v3633, %v3661
        %v3665 = vmul.f32 %v3634, %v3661
        %v3666 = vld [vmem:[%s10] sm:$0xff]
        %v3667 = vld [vmem:[%s10 + $0x8] sm:$0xff]
        %v3668 = vld [vmem:[%s10 + $0x10] sm:$0x7f]
        %v3669 = vld [vmem:[%s10 + $0x18] sm:$0x7f]
        %v3670 = vmul.f32 %v3662, %v3666
        %v3671 = vmul.f32 %v3663, %v3667
        %v3672 = vmul.f32 %v3664, %v3668
        %v3673 = vmul.f32 %v3665, %v3669
        %v3674 = vld [vmem:[%s11] sm:$0xff]
        %v3675 = vld [vmem:[%s11 + $0x8] sm:$0xff]
        %v3676 = vld [vmem:[%s11 + $0x10] sm:$0x7f]
        %v3677 = vld [vmem:[%s11 + $0x18] sm:$0x7f]
        %v3678 = vadd.f32 %v3670, %v3674
        %v3679 = vadd.f32 %v3671, %v3675
        %v3680 = vadd.f32 %v3672, %v3676
        %v3681 = vadd.f32 %v3673, %v3677
        %v3682 = vmax.f32 %v3678, 0.0
        %v3683 = vmax.f32 %v3679, 0.0
        %v3684 = vmax.f32 %v3680, 0.0
        %v3685 = vmax.f32 %v3681, 0.0
        %v3686 = vld [vmem:[%s12] sm:$0x7f]
        %vm3687 = vcmask 121856
        %v3689 = vsel %vm3687, %v3686, 0
        %v3692 = vsel %vm2047, %v3684, 0
        %v3695 = vsel %vm2047, %v3685, 0
        %3697 = vmatprep.subr.mxu0 0.0
        %3698 = vmatpush1.msra.mxu0 0.0
        %3699 = vmatprep.subr.mxu0 0.0
        %3700 = vmatpush1.msra.mxu0 0.0
        %3701 = vmatprep.subr.mxu0 0.0
        %3702 = vmatpush1.msra.mxu0 0.0
        %3703 = vmatprep.subr.mxu0 0.0
        %3704 = vmatpush1.msra.mxu0 0.0
        %3705 = vmatprep.subr.mxu0 0.0
        %3706 = vmatpush1.msra.mxu0 0.0
        %3707 = vmatprep.subr.mxu0 0.0
        %3708 = vmatpush1.msra.mxu0 0.0
        %3709 = vmatprep.subr.mxu0 0.0
        %3710 = vmatpush1.msra.mxu0 0.0
        %3711 = vmatprep.subr.mxu0 0.0
        %3712 = vmatpush1.msra.mxu0 0.0
        %3713 = vmatprep.subr.mxu0 0.0
        %3714 = vmatpush1.msra.mxu0 0.0
        %3715 = vmatprep.subr.mxu0 0.0
        %3716 = vmatpush1.msra.mxu0 0.0
        %3717 = vmatprep.subr.mxu0 0.0
        %3718 = vmatpush1.msra.mxu0 0.0
        %3719 = vmatprep.subr.mxu0 0.0
        %3720 = vmatpush1.msra.mxu0 0.0
        %3721 = vmatprep.subr.mxu0 0.0
        %3722 = vmatpush1.msra.mxu0 0.0
        %3723 = vmatprep.subr.mxu0 0.0
        %3724 = vmatpush1.msra.mxu0 0.0
        %3725 = vmatprep.subr.mxu0 %v3695
        %3726 = vmatpush1.msra.mxu0 %v3692
        %3727 = vmatprep.subr.mxu0 %v3683
        %3728 = vmatpush1.msra.mxu0 %v3682
        %3729 = vmatprep.subr.mxu0 0.0
        %3730 = vmatpush2.msra.mxu0 0.0
        %3731 = vmatprep.subr.mxu0 0.0
        %3732 = vmatpush2.msra.mxu0 0.0
        %3733 = vmatprep.subr.mxu0 0.0
        %3734 = vmatpush2.msra.mxu0 0.0
        %3735 = vmatprep.subr.mxu0 0.0
        %3736 = vmatpush2.msra.mxu0 0.0
        %3737 = vmatprep.subr.mxu0 0.0
        %3738 = vmatpush2.msra.mxu0 0.0
        %3739 = vmatprep.subr.mxu0 0.0
        %3740 = vmatpush2.msra.mxu0 0.0
        %3741 = vmatprep.subr.mxu0 0.0
        %3742 = vmatpush2.msra.mxu0 0.0
        %3743 = vmatprep.subr.mxu0 0.0
        %3744 = vmatpush2.msra.mxu0 0.0
        %3745 = vmatprep.subr.mxu0 0.0
        %3746 = vmatpush2.msra.mxu0 0.0
        %3747 = vmatprep.subr.mxu0 0.0
        %3748 = vmatpush2.msra.mxu0 0.0
        %3749 = vmatprep.subr.mxu0 0.0
        %3750 = vmatpush2.msra.mxu0 0.0
        %3751 = vmatprep.subr.mxu0 0.0
        %3752 = vmatpush2.msra.mxu0 0.0
        %3753 = vmatprep.subr.mxu0 0.0
        %3754 = vmatpush2.msra.mxu0 0.0
        %3755 = vmatprep.subr.mxu0 0.0
        %3756 = vmatpush2.msra.mxu0 0.0
        %3757 = vmatprep.subr.mxu0 0.0
        %3758 = vmatpush2.msra.mxu0 0.0
        %3759 = vmatprep.subr.mxu0 0.0
        %3760 = vmatpush2.msra.mxu0 0.0
        %3761 = vmatprep.mubr.f32.mxu0 0.0
        %3762 = vmatmul.mubr.f32.gmra.mxu0 %v3689
        %v3763 = vpop.f32.mrf.mxu0
        %v3764 = vadd.f32 0.0, %v3763
        %v3765 = vpop.f32.mrf.mxu0
        %v3766 = vadd.f32 0.0, %v3765
        %3767 = vdwg.mxu0
        %v3768 = vld [vmem:[%s13] sm:$0xff]
        %v3769 = vld [vmem:[%s13 + $0x8] sm:$0xff]
        %v3770 = vld [vmem:[%s13 + $0x10] sm:$0xff]
        %v3771 = vld [vmem:[%s13 + $0x18] sm:$0xff]
        %v3772 = vld [vmem:[%s13 + $0x20] sm:$0xff]
        %v3773 = vld [vmem:[%s13 + $0x28] sm:$0xff]
        %v3774 = vld [vmem:[%s13 + $0x30] sm:$0xff]
        %v3775 = vld [vmem:[%s13 + $0x38] sm:$0xff]
        %v3776 = vld [vmem:[%s13 + $0x40] sm:$0xff]
        %v3777 = vld [vmem:[%s13 + $0x48] sm:$0xff]
        %v3778 = vld [vmem:[%s13 + $0x50] sm:$0xff]
        %v3779 = vld [vmem:[%s13 + $0x58] sm:$0xff]
        %v3780 = vld [vmem:[%s13 + $0x60] sm:$0xff]
        %v3781 = vld [vmem:[%s13 + $0x68] sm:$0xff]
        %v3782 = vld [vmem:[%s13 + $0x70] sm:$0xff]
        %v3783 = vld [vmem:[%s13 + $0x78] sm:$0xff]
        %v3784 = vld [vmem:[%s13 + $0x80] sm:$0xff]
        %v3785 = vld [vmem:[%s13 + $0x88] sm:$0xff]
        %v3786 = vld [vmem:[%s13 + $0x90] sm:$0xff]
        %v3787 = vld [vmem:[%s13 + $0x98] sm:$0xff]
        %v3788 = vld [vmem:[%s13 + $0xa0] sm:$0xff]
        %v3789 = vld [vmem:[%s13 + $0xa8] sm:$0xff]
        %v3790 = vld [vmem:[%s13 + $0xb0] sm:$0xff]
        %v3791 = vld [vmem:[%s13 + $0xb8] sm:$0xff]
        %v3792 = vld [vmem:[%s13 + $0xc0] sm:$0xff]
        %v3793 = vld [vmem:[%s13 + $0xc8] sm:$0xff]
        %v3794 = vld [vmem:[%s13 + $0xd0] sm:$0xff]
        %v3795 = vld [vmem:[%s13 + $0xd8] sm:$0xff]
        %v3796 = vld [vmem:[%s13 + $0xe0] sm:$0xff]
        %v3797 = vld [vmem:[%s13 + $0xe8] sm:$0xff]
        %s3798 = scalar_lea.vmem %s12, 8
        %v3799 = vld [vmem:[%s3798] sm:$0x7f]
        %v3801 = vsel %vm3687, %v3799, 0
        %3803 = vmatprep.subr.mxu0 0.0
        %3804 = vmatpush1.msra.mxu0 0.0
        %3805 = vmatprep.subr.mxu0 0.0
        %3806 = vmatpush1.msra.mxu0 0.0
        %3807 = vmatprep.subr.mxu0 0.0
        %3808 = vmatpush1.msra.mxu0 0.0
        %3809 = vmatprep.subr.mxu0 0.0
        %3810 = vmatpush1.msra.mxu0 0.0
        %3811 = vmatprep.subr.mxu0 0.0
        %3812 = vmatpush1.msra.mxu0 0.0
        %3813 = vmatprep.subr.mxu0 0.0
        %3814 = vmatpush1.msra.mxu0 0.0
        %3815 = vmatprep.subr.mxu0 0.0
        %3816 = vmatpush1.msra.mxu0 0.0
        %3817 = vmatprep.subr.mxu0 0.0
        %3818 = vmatpush1.msra.mxu0 0.0
        %3819 = vmatprep.subr.mxu0 0.0
        %3820 = vmatpush1.msra.mxu0 0.0
        %3821 = vmatprep.subr.mxu0 0.0
        %3822 = vmatpush1.msra.mxu0 0.0
        %3823 = vmatprep.subr.mxu0 0.0
        %3824 = vmatpush1.msra.mxu0 0.0
        %3825 = vmatprep.subr.mxu0 0.0
        %3826 = vmatpush1.msra.mxu0 0.0
        %3827 = vmatprep.subr.mxu0 0.0
        %3828 = vmatpush1.msra.mxu0 0.0
        %3829 = vmatprep.subr.mxu0 0.0
        %3830 = vmatpush1.msra.mxu0 0.0
        %3831 = vmatprep.subr.mxu0 %v3695
        %3832 = vmatpush1.msra.mxu0 %v3692
        %3833 = vmatprep.subr.mxu0 %v3683
        %3834 = vmatpush1.msra.mxu0 %v3682
        %3835 = vmatprep.subr.mxu0 0.0
        %3836 = vmatpush2.msra.mxu0 0.0
        %3837 = vmatprep.subr.mxu0 0.0
        %3838 = vmatpush2.msra.mxu0 0.0
        %3839 = vmatprep.subr.mxu0 0.0
        %3840 = vmatpush2.msra.mxu0 0.0
        %3841 = vmatprep.subr.mxu0 0.0
        %3842 = vmatpush2.msra.mxu0 0.0
        %3843 = vmatprep.subr.mxu0 0.0
        %3844 = vmatpush2.msra.mxu0 0.0
        %3845 = vmatprep.subr.mxu0 0.0
        %3846 = vmatpush2.msra.mxu0 0.0
        %3847 = vmatprep.subr.mxu0 0.0
        %3848 = vmatpush2.msra.mxu0 0.0
        %3849 = vmatprep.subr.mxu0 0.0
        %3850 = vmatpush2.msra.mxu0 0.0
        %3851 = vmatprep.subr.mxu0 0.0
        %3852 = vmatpush2.msra.mxu0 0.0
        %3853 = vmatprep.subr.mxu0 0.0
        %3854 = vmatpush2.msra.mxu0 0.0
        %3855 = vmatprep.subr.mxu0 0.0
        %3856 = vmatpush2.msra.mxu0 0.0
        %3857 = vmatprep.subr.mxu0 0.0
        %3858 = vmatpush2.msra.mxu0 0.0
        %3859 = vmatprep.subr.mxu0 0.0
        %3860 = vmatpush2.msra.mxu0 0.0
        %3861 = vmatprep.subr.mxu0 0.0
        %3862 = vmatpush2.msra.mxu0 0.0
        %3863 = vmatprep.subr.mxu0 0.0
        %3864 = vmatpush2.msra.mxu0 0.0
        %3865 = vmatprep.subr.mxu0 0.0
        %3866 = vmatpush2.msra.mxu0 0.0
        %3867 = vmatprep.mubr.f32.mxu0 0.0
        %3868 = vmatmul.mubr.f32.gmra.mxu0 %v3801
        %v3869 = vpop.f32.mrf.mxu0
        %v3870 = vadd.f32 0.0, %v3869
        %v3871 = vpop.f32.mrf.mxu0
        %v3872 = vadd.f32 0.0, %v3871
        %3873 = vdwg.mxu0
        %s3874 = scalar_lea.vmem %s13, 240
        %v3875 = vld [vmem:[%s3874] sm:$0xff]
        %v3876 = vld [vmem:[%s3874 + $0x8] sm:$0xff]
        %v3877 = vld [vmem:[%s3874 + $0x10] sm:$0xff]
        %v3878 = vld [vmem:[%s3874 + $0x18] sm:$0xff]
        %v3879 = vld [vmem:[%s3874 + $0x20] sm:$0xff]
        %v3880 = vld [vmem:[%s3874 + $0x28] sm:$0xff]
        %v3881 = vld [vmem:[%s3874 + $0x30] sm:$0xff]
        %v3882 = vld [vmem:[%s3874 + $0x38] sm:$0xff]
        %v3883 = vld [vmem:[%s3874 + $0x40] sm:$0xff]
        %v3884 = vld [vmem:[%s3874 + $0x48] sm:$0xff]
        %v3885 = vld [vmem:[%s3874 + $0x50] sm:$0xff]
        %v3886 = vld [vmem:[%s3874 + $0x58] sm:$0xff]
        %v3887 = vld [vmem:[%s3874 + $0x60] sm:$0xff]
        %v3888 = vld [vmem:[%s3874 + $0x68] sm:$0xff]
        %v3889 = vld [vmem:[%s3874 + $0x70] sm:$0xff]
        %v3890 = vld [vmem:[%s3874 + $0x78] sm:$0xff]
        %v3891 = vld [vmem:[%s3874 + $0x80] sm:$0xff]
        %v3892 = vld [vmem:[%s3874 + $0x88] sm:$0xff]
        %v3893 = vld [vmem:[%s3874 + $0x90] sm:$0xff]
        %v3894 = vld [vmem:[%s3874 + $0x98] sm:$0xff]
        %v3895 = vld [vmem:[%s3874 + $0xa0] sm:$0xff]
        %v3896 = vld [vmem:[%s3874 + $0xa8] sm:$0xff]
        %v3897 = vld [vmem:[%s3874 + $0xb0] sm:$0xff]
        %v3898 = vld [vmem:[%s3874 + $0xb8] sm:$0xff]
        %v3899 = vld [vmem:[%s3874 + $0xc0] sm:$0xff]
        %v3900 = vld [vmem:[%s3874 + $0xc8] sm:$0xff]
        %v3901 = vld [vmem:[%s3874 + $0xd0] sm:$0xff]
        %v3902 = vld [vmem:[%s3874 + $0xd8] sm:$0xff]
        %v3903 = vld [vmem:[%s3874 + $0xe0] sm:$0xff]
        %v3904 = vld [vmem:[%s3874 + $0xe8] sm:$0xff]
        %v3906 = vsel %vm2034, %v3872, 0
        %3908 = vmatprep.subr.mxu0 0.0
        %3909 = vmatpush1.msra.mxu0 %v3890
        %3910 = vmatprep.subr.mxu0 0.0
        %3911 = vmatpush1.msra.mxu0 %v3889
        %3912 = vmatprep.subr.mxu0 0.0
        %3913 = vmatpush1.msra.mxu0 %v3888
        %3914 = vmatprep.subr.mxu0 0.0
        %3915 = vmatpush1.msra.mxu0 %v3887
        %3916 = vmatprep.subr.mxu0 0.0
        %3917 = vmatpush1.msra.mxu0 %v3886
        %3918 = vmatprep.subr.mxu0 0.0
        %3919 = vmatpush1.msra.mxu0 %v3885
        %3920 = vmatprep.subr.mxu0 0.0
        %3921 = vmatpush1.msra.mxu0 %v3884
        %3922 = vmatprep.subr.mxu0 0.0
        %3923 = vmatpush1.msra.mxu0 %v3883
        %3924 = vmatprep.subr.mxu0 0.0
        %3925 = vmatpush1.msra.mxu0 %v3882
        %3926 = vmatprep.subr.mxu0 0.0
        %3927 = vmatpush1.msra.mxu0 %v3881
        %3928 = vmatprep.subr.mxu0 0.0
        %3929 = vmatpush1.msra.mxu0 %v3880
        %3930 = vmatprep.subr.mxu0 0.0
        %3931 = vmatpush1.msra.mxu0 %v3879
        %3932 = vmatprep.subr.mxu0 0.0
        %3933 = vmatpush1.msra.mxu0 %v3878
        %3934 = vmatprep.subr.mxu0 0.0
        %3935 = vmatpush1.msra.mxu0 %v3877
        %3936 = vmatprep.subr.mxu0 0.0
        %3937 = vmatpush1.msra.mxu0 %v3876
        %3938 = vmatprep.subr.mxu0 0.0
        %3939 = vmatpush1.msra.mxu0 %v3875
        %3940 = vmatprep.subr.mxu0 0.0
        %3941 = vmatpush2.msra.mxu0 0.0
        %3942 = vmatprep.subr.mxu0 0.0
        %3943 = vmatpush2.msra.mxu0 0.0
        %3944 = vmatprep.subr.mxu0 0.0
        %3945 = vmatpush2.msra.mxu0 %v3904
        %3946 = vmatprep.subr.mxu0 0.0
        %3947 = vmatpush2.msra.mxu0 %v3903
        %3948 = vmatprep.subr.mxu0 0.0
        %3949 = vmatpush2.msra.mxu0 %v3902
        %3950 = vmatprep.subr.mxu0 0.0
        %3951 = vmatpush2.msra.mxu0 %v3901
        %3952 = vmatprep.subr.mxu0 0.0
        %3953 = vmatpush2.msra.mxu0 %v3900
        %3954 = vmatprep.subr.mxu0 0.0
        %3955 = vmatpush2.msra.mxu0 %v3899
        %3956 = vmatprep.subr.mxu0 0.0
        %3957 = vmatpush2.msra.mxu0 %v3898
        %3958 = vmatprep.subr.mxu0 0.0
        %3959 = vmatpush2.msra.mxu0 %v3897
        %3960 = vmatprep.subr.mxu0 0.0
        %3961 = vmatpush2.msra.mxu0 %v3896
        %3962 = vmatprep.subr.mxu0 0.0
        %3963 = vmatpush2.msra.mxu0 %v3895
        %3964 = vmatprep.subr.mxu0 0.0
        %3965 = vmatpush2.msra.mxu0 %v3894
        %3966 = vmatprep.subr.mxu0 0.0
        %3967 = vmatpush2.msra.mxu0 %v3893
        %3968 = vmatprep.subr.mxu0 0.0
        %3969 = vmatpush2.msra.mxu0 %v3892
        %3970 = vmatprep.subr.mxu0 0.0
        %3971 = vmatpush2.msra.mxu0 %v3891
        %3972 = vmatprep.mubr.f32.mxu0 %v3906
        %3973 = vmatmul.mubr.f32.gmra.mxu0 %v3870
        %v3974 = vpop.f32.mrf.mxu0
        %v3975 = vadd.f32 0.0, %v3974
        %v3976 = vpop.f32.mrf.mxu0
        %3977 = vdwg.mxu0
        %v3979 = vsel %vm2034, %v3766, 0
        %3981 = vmatprep.subr.mxu0 0.0
        %3982 = vmatpush1.msra.mxu0 %v3783
        %3983 = vmatprep.subr.mxu0 0.0
        %3984 = vmatpush1.msra.mxu0 %v3782
        %3985 = vmatprep.subr.mxu0 0.0
        %3986 = vmatpush1.msra.mxu0 %v3781
        %3987 = vmatprep.subr.mxu0 0.0
        %3988 = vmatpush1.msra.mxu0 %v3780
        %3989 = vmatprep.subr.mxu0 0.0
        %3990 = vmatpush1.msra.mxu0 %v3779
        %3991 = vmatprep.subr.mxu0 0.0
        %3992 = vmatpush1.msra.mxu0 %v3778
        %3993 = vmatprep.subr.mxu0 0.0
        %3994 = vmatpush1.msra.mxu0 %v3777
        %3995 = vmatprep.subr.mxu0 0.0
        %3996 = vmatpush1.msra.mxu0 %v3776
        %3997 = vmatprep.subr.mxu0 0.0
        %3998 = vmatpush1.msra.mxu0 %v3775
        %3999 = vmatprep.subr.mxu0 0.0
        %4000 = vmatpush1.msra.mxu0 %v3774
        %4001 = vmatprep.subr.mxu0 0.0
        %4002 = vmatpush1.msra.mxu0 %v3773
        %4003 = vmatprep.subr.mxu0 0.0
        %4004 = vmatpush1.msra.mxu0 %v3772
        %4005 = vmatprep.subr.mxu0 0.0
        %4006 = vmatpush1.msra.mxu0 %v3771
        %4007 = vmatprep.subr.mxu0 0.0
        %4008 = vmatpush1.msra.mxu0 %v3770
        %4009 = vmatprep.subr.mxu0 0.0
        %4010 = vmatpush1.msra.mxu0 %v3769
        %4011 = vmatprep.subr.mxu0 0.0
        %4012 = vmatpush1.msra.mxu0 %v3768
        %4013 = vmatprep.subr.mxu0 0.0
        %4014 = vmatpush2.msra.mxu0 0.0
        %4015 = vmatprep.subr.mxu0 0.0
        %4016 = vmatpush2.msra.mxu0 0.0
        %4017 = vmatprep.subr.mxu0 0.0
        %4018 = vmatpush2.msra.mxu0 %v3797
        %4019 = vmatprep.subr.mxu0 0.0
        %4020 = vmatpush2.msra.mxu0 %v3796
        %4021 = vmatprep.subr.mxu0 0.0
        %4022 = vmatpush2.msra.mxu0 %v3795
        %4023 = vmatprep.subr.mxu0 0.0
        %4024 = vmatpush2.msra.mxu0 %v3794
        %4025 = vmatprep.subr.mxu0 0.0
        %4026 = vmatpush2.msra.mxu0 %v3793
        %4027 = vmatprep.subr.mxu0 0.0
        %4028 = vmatpush2.msra.mxu0 %v3792
        %4029 = vmatprep.subr.mxu0 0.0
        %4030 = vmatpush2.msra.mxu0 %v3791
        %4031 = vmatprep.subr.mxu0 0.0
        %4032 = vmatpush2.msra.mxu0 %v3790
        %4033 = vmatprep.subr.mxu0 0.0
        %4034 = vmatpush2.msra.mxu0 %v3789
        %4035 = vmatprep.subr.mxu0 0.0
        %4036 = vmatpush2.msra.mxu0 %v3788
        %4037 = vmatprep.subr.mxu0 0.0
        %4038 = vmatpush2.msra.mxu0 %v3787
        %4039 = vmatprep.subr.mxu0 0.0
        %4040 = vmatpush2.msra.mxu0 %v3786
        %4041 = vmatprep.subr.mxu0 0.0
        %4042 = vmatpush2.msra.mxu0 %v3785
        %4043 = vmatprep.subr.mxu0 0.0
        %4044 = vmatpush2.msra.mxu0 %v3784
        %4045 = vmatprep.mubr.f32.mxu0 %v3979
        %4046 = vmatmul.mubr.f32.gmra.mxu0 %v3764
        %v4047 = vpop.f32.mrf.mxu0
        %v4048 = vadd.f32 %v3975, %v4047
        %v4049 = vpop.f32.mrf.mxu0
        %4050 = vdwg.mxu0
        %s4051 = scalar_lea.vmem %s12, 16
        %v4052 = vld [vmem:[%s4051] sm:$0x7f]
        %v4054 = vsel %vm3687, %v4052, 0
        %4056 = vmatprep.subr.mxu0 0.0
        %4057 = vmatpush1.msra.mxu0 0.0
        %4058 = vmatprep.subr.mxu0 0.0
        %4059 = vmatpush1.msra.mxu0 0.0
        %4060 = vmatprep.subr.mxu0 0.0
        %4061 = vmatpush1.msra.mxu0 0.0
        %4062 = vmatprep.subr.mxu0 0.0
        %4063 = vmatpush1.msra.mxu0 0.0
        %4064 = vmatprep.subr.mxu0 0.0
        %4065 = vmatpush1.msra.mxu0 0.0
        %4066 = vmatprep.subr.mxu0 0.0
        %4067 = vmatpush1.msra.mxu0 0.0
        %4068 = vmatprep.subr.mxu0 0.0
        %4069 = vmatpush1.msra.mxu0 0.0
        %4070 = vmatprep.subr.mxu0 0.0
        %4071 = vmatpush1.msra.mxu0 0.0
        %4072 = vmatprep.subr.mxu0 0.0
        %4073 = vmatpush1.msra.mxu0 0.0
        %4074 = vmatprep.subr.mxu0 0.0
        %4075 = vmatpush1.msra.mxu0 0.0
        %4076 = vmatprep.subr.mxu0 0.0
        %4077 = vmatpush1.msra.mxu0 0.0
        %4078 = vmatprep.subr.mxu0 0.0
        %4079 = vmatpush1.msra.mxu0 0.0
        %4080 = vmatprep.subr.mxu0 0.0
        %4081 = vmatpush1.msra.mxu0 0.0
        %4082 = vmatprep.subr.mxu0 0.0
        %4083 = vmatpush1.msra.mxu0 0.0
        %4084 = vmatprep.subr.mxu0 %v3695
        %4085 = vmatpush1.msra.mxu0 %v3692
        %4086 = vmatprep.subr.mxu0 %v3683
        %4087 = vmatpush1.msra.mxu0 %v3682
        %4088 = vmatprep.subr.mxu0 0.0
        %4089 = vmatpush2.msra.mxu0 0.0
        %4090 = vmatprep.subr.mxu0 0.0
        %4091 = vmatpush2.msra.mxu0 0.0
        %4092 = vmatprep.subr.mxu0 0.0
        %4093 = vmatpush2.msra.mxu0 0.0
        %4094 = vmatprep.subr.mxu0 0.0
        %4095 = vmatpush2.msra.mxu0 0.0
        %4096 = vmatprep.subr.mxu0 0.0
        %4097 = vmatpush2.msra.mxu0 0.0
        %4098 = vmatprep.subr.mxu0 0.0
        %4099 = vmatpush2.msra.mxu0 0.0
        %4100 = vmatprep.subr.mxu0 0.0
        %4101 = vmatpush2.msra.mxu0 0.0
        %4102 = vmatprep.subr.mxu0 0.0
        %4103 = vmatpush2.msra.mxu0 0.0
        %4104 = vmatprep.subr.mxu0 0.0
        %4105 = vmatpush2.msra.mxu0 0.0
        %4106 = vmatprep.subr.mxu0 0.0
        %4107 = vmatpush2.msra.mxu0 0.0
        %4108 = vmatprep.subr.mxu0 0.0
        %4109 = vmatpush2.msra.mxu0 0.0
        %4110 = vmatprep.subr.mxu0 0.0
        %4111 = vmatpush2.msra.mxu0 0.0
        %4112 = vmatprep.subr.mxu0 0.0
        %4113 = vmatpush2.msra.mxu0 0.0
        %4114 = vmatprep.subr.mxu0 0.0
        %4115 = vmatpush2.msra.mxu0 0.0
        %4116 = vmatprep.subr.mxu0 0.0
        %4117 = vmatpush2.msra.mxu0 0.0
        %4118 = vmatprep.subr.mxu0 0.0
        %4119 = vmatpush2.msra.mxu0 0.0
        %4120 = vmatprep.mubr.f32.mxu0 0.0
        %4121 = vmatmul.mubr.f32.gmra.mxu0 %v4054
        %v4122 = vpop.f32.mrf.mxu0
        %v4123 = vadd.f32 0.0, %v4122
        %v4124 = vpop.f32.mrf.mxu0
        %v4125 = vadd.f32 0.0, %v4124
        %4126 = vdwg.mxu0
        %s4127 = scalar_lea.vmem %s13, 480
        %v4128 = vld [vmem:[%s4127] sm:$0xff]
        %v4129 = vld [vmem:[%s4127 + $0x8] sm:$0xff]
        %v4130 = vld [vmem:[%s4127 + $0x10] sm:$0xff]
        %v4131 = vld [vmem:[%s4127 + $0x18] sm:$0xff]
        %v4132 = vld [vmem:[%s4127 + $0x20] sm:$0xff]
        %v4133 = vld [vmem:[%s4127 + $0x28] sm:$0xff]
        %v4134 = vld [vmem:[%s4127 + $0x30] sm:$0xff]
        %v4135 = vld [vmem:[%s4127 + $0x38] sm:$0xff]
        %v4136 = vld [vmem:[%s4127 + $0x40] sm:$0xff]
        %v4137 = vld [vmem:[%s4127 + $0x48] sm:$0xff]
        %v4138 = vld [vmem:[%s4127 + $0x50] sm:$0xff]
        %v4139 = vld [vmem:[%s4127 + $0x58] sm:$0xff]
        %v4140 = vld [vmem:[%s4127 + $0x60] sm:$0xff]
        %v4141 = vld [vmem:[%s4127 + $0x68] sm:$0xff]
        %v4142 = vld [vmem:[%s4127 + $0x70] sm:$0xff]
        %v4143 = vld [vmem:[%s4127 + $0x78] sm:$0xff]
        %v4144 = vld [vmem:[%s4127 + $0x80] sm:$0xff]
        %v4145 = vld [vmem:[%s4127 + $0x88] sm:$0xff]
        %v4146 = vld [vmem:[%s4127 + $0x90] sm:$0xff]
        %v4147 = vld [vmem:[%s4127 + $0x98] sm:$0xff]
        %v4148 = vld [vmem:[%s4127 + $0xa0] sm:$0xff]
        %v4149 = vld [vmem:[%s4127 + $0xa8] sm:$0xff]
        %v4150 = vld [vmem:[%s4127 + $0xb0] sm:$0xff]
        %v4151 = vld [vmem:[%s4127 + $0xb8] sm:$0xff]
        %v4152 = vld [vmem:[%s4127 + $0xc0] sm:$0xff]
        %v4153 = vld [vmem:[%s4127 + $0xc8] sm:$0xff]
        %v4154 = vld [vmem:[%s4127 + $0xd0] sm:$0xff]
        %v4155 = vld [vmem:[%s4127 + $0xd8] sm:$0xff]
        %v4156 = vld [vmem:[%s4127 + $0xe0] sm:$0xff]
        %v4157 = vld [vmem:[%s4127 + $0xe8] sm:$0xff]
        %v4159 = vsel %vm2034, %v4125, 0
        %4161 = vmatprep.subr.mxu0 0.0
        %4162 = vmatpush1.msra.mxu0 %v4143
        %4163 = vmatprep.subr.mxu0 0.0
        %4164 = vmatpush1.msra.mxu0 %v4142
        %4165 = vmatprep.subr.mxu0 0.0
        %4166 = vmatpush1.msra.mxu0 %v4141
        %4167 = vmatprep.subr.mxu0 0.0
        %4168 = vmatpush1.msra.mxu0 %v4140
        %4169 = vmatprep.subr.mxu0 0.0
        %4170 = vmatpush1.msra.mxu0 %v4139
        %4171 = vmatprep.subr.mxu0 0.0
        %4172 = vmatpush1.msra.mxu0 %v4138
        %4173 = vmatprep.subr.mxu0 0.0
        %4174 = vmatpush1.msra.mxu0 %v4137
        %4175 = vmatprep.subr.mxu0 0.0
        %4176 = vmatpush1.msra.mxu0 %v4136
        %4177 = vmatprep.subr.mxu0 0.0
        %4178 = vmatpush1.msra.mxu0 %v4135
        %4179 = vmatprep.subr.mxu0 0.0
        %4180 = vmatpush1.msra.mxu0 %v4134
        %4181 = vmatprep.subr.mxu0 0.0
        %4182 = vmatpush1.msra.mxu0 %v4133
        %4183 = vmatprep.subr.mxu0 0.0
        %4184 = vmatpush1.msra.mxu0 %v4132
        %4185 = vmatprep.subr.mxu0 0.0
        %4186 = vmatpush1.msra.mxu0 %v4131
        %4187 = vmatprep.subr.mxu0 0.0
        %4188 = vmatpush1.msra.mxu0 %v4130
        %4189 = vmatprep.subr.mxu0 0.0
        %4190 = vmatpush1.msra.mxu0 %v4129
        %4191 = vmatprep.subr.mxu0 0.0
        %4192 = vmatpush1.msra.mxu0 %v4128
        %4193 = vmatprep.subr.mxu0 0.0
        %4194 = vmatpush2.msra.mxu0 0.0
        %4195 = vmatprep.subr.mxu0 0.0
        %4196 = vmatpush2.msra.mxu0 0.0
        %4197 = vmatprep.subr.mxu0 0.0
        %4198 = vmatpush2.msra.mxu0 %v4157
        %4199 = vmatprep.subr.mxu0 0.0
        %4200 = vmatpush2.msra.mxu0 %v4156
        %4201 = vmatprep.subr.mxu0 0.0
        %4202 = vmatpush2.msra.mxu0 %v4155
        %4203 = vmatprep.subr.mxu0 0.0
        %4204 = vmatpush2.msra.mxu0 %v4154
        %4205 = vmatprep.subr.mxu0 0.0
        %4206 = vmatpush2.msra.mxu0 %v4153
        %4207 = vmatprep.subr.mxu0 0.0
        %4208 = vmatpush2.msra.mxu0 %v4152
        %4209 = vmatprep.subr.mxu0 0.0
        %4210 = vmatpush2.msra.mxu0 %v4151
        %4211 = vmatprep.subr.mxu0 0.0
        %4212 = vmatpush2.msra.mxu0 %v4150
        %4213 = vmatprep.subr.mxu0 0.0
        %4214 = vmatpush2.msra.mxu0 %v4149
        %4215 = vmatprep.subr.mxu0 0.0
        %4216 = vmatpush2.msra.mxu0 %v4148
        %4217 = vmatprep.subr.mxu0 0.0
        %4218 = vmatpush2.msra.mxu0 %v4147
        %4219 = vmatprep.subr.mxu0 0.0
        %4220 = vmatpush2.msra.mxu0 %v4146
        %4221 = vmatprep.subr.mxu0 0.0
        %4222 = vmatpush2.msra.mxu0 %v4145
        %4223 = vmatprep.subr.mxu0 0.0
        %4224 = vmatpush2.msra.mxu0 %v4144
        %4225 = vmatprep.mubr.f32.mxu0 %v4159
        %4226 = vmatmul.mubr.f32.gmra.mxu0 %v4123
        %v4227 = vpop.f32.mrf.mxu0
        %v4228 = vadd.f32 0.0, %v4227
        %v4229 = vpop.f32.mrf.mxu0
        %4230 = vdwg.mxu0
        %v4231 = vadd.f32 %v4048, %v4228
        %v4232 = vld [vmem:[%s14] sm:$0x1]
        %v4234 = vlaneseq
        %v4235 = vshrl.u32 %v4234, 7
        %v4236 = vsub.s32 0, %v4235
        %v4237 = vrot.slane %v4232, %v4236
        %v4239 = vadd.f32 %v4231, %v4237
        %v4240 = vsel %vm2054, %v4239, 0.0
        %4241 = vadd.xlane.f32.xlu0 %v4240
        %v4242 = vpop.xlane.xlu0 %4241
        %v4243 = vrot.slane %v4242, 4
        %v4244 = vadd.f32 %v4242, %v4243
        %v4245 = vrot.slane %v4244, 2
        %v4246 = vadd.f32 %v4244, %v4245
        %v4247 = vrot.slane %v4246, 1
        %v4248 = vadd.f32 %v4246, %v4247
        %s4249 = vtos %v4248
        %v4250 = vrcp.pop 784.0
        %s4251 = vtos %v4250
        %s4252 = smul.f32 %s4249, %s4251
        %v4253 = vstv %s4252
        %v4254 = vsub.f32 %v4239, %v4253
        %v4255 = vmul.f32 %v4254, %v4254
        %v4256 = vsel %vm2054, %v4255, 0.0
        %4257 = vadd.xlane.f32.xlu0 %v4256
        %v4258 = vpop.xlane.xlu0 %4257
        %v4259 = vrot.slane %v4258, 4
        %v4260 = vadd.f32 %v4258, %v4259
        %v4261 = vrot.slane %v4260, 2
        %v4262 = vadd.f32 %v4260, %v4261
        %v4263 = vrot.slane %v4262, 1
        %v4264 = vadd.f32 %v4262, %v4263
        %s4265 = vtos %v4264
        %v4266 = vrcp.pop 784.0
        %s4267 = vtos %v4266
        %s4268 = smul.f32 %s4265, %s4267
        %s4269 = sadd.f32 %s4268, 1e-05
        %v4270 = vstv %s4269
        %v4271 = vrsqrt.pop %v4270
        %s4272 = vtos %v4271
        %v4273 = vstv %s4272
        %v4274 = vmul.f32 %v4254, %v4273
        %v4275 = vld [vmem:[%s15] sm:$0x7f]
        %v4276 = vmul.f32 %v4274, %v4275
        %v4277 = vld [vmem:[%s16] sm:$0x7f]
        %v4278 = vadd.f32 %v4276, %v4277
        %v4279 = vmax.f32 %v4278, 0.0
        %v4280 = vld [vmem:[%s17] sm:$0x7]
        %vm4281 = vcmask 56320
        %v4283 = vsel %vm4281, %v4280, 0
        %v4286 = vsel %vm2047, %v4279, 0
        %4288 = vmatprep.subr.mxu0 0.0
        %4289 = vmatpush1.msra.mxu0 0.0
        %4290 = vmatprep.subr.mxu0 0.0
        %4291 = vmatpush1.msra.mxu0 0.0
        %4292 = vmatprep.subr.mxu0 0.0
        %4293 = vmatpush1.msra.mxu0 0.0
        %4294 = vmatprep.subr.mxu0 0.0
        %4295 = vmatpush1.msra.mxu0 0.0
        %4296 = vmatprep.subr.mxu0 0.0
        %4297 = vmatpush1.msra.mxu0 0.0
        %4298 = vmatprep.subr.mxu0 0.0
        %4299 = vmatpush1.msra.mxu0 0.0
        %4300 = vmatprep.subr.mxu0 0.0
        %4301 = vmatpush1.msra.mxu0 0.0
        %4302 = vmatprep.subr.mxu0 0.0
        %4303 = vmatpush1.msra.mxu0 0.0
        %4304 = vmatprep.subr.mxu0 0.0
        %4305 = vmatpush1.msra.mxu0 0.0
        %4306 = vmatprep.subr.mxu0 0.0
        %4307 = vmatpush1.msra.mxu0 0.0
        %4308 = vmatprep.subr.mxu0 0.0
        %4309 = vmatpush1.msra.mxu0 0.0
        %4310 = vmatprep.subr.mxu0 0.0
        %4311 = vmatpush1.msra.mxu0 0.0
        %4312 = vmatprep.subr.mxu0 0.0
        %4313 = vmatpush1.msra.mxu0 0.0
        %4314 = vmatprep.subr.mxu0 0.0
        %4315 = vmatpush1.msra.mxu0 0.0
        %4316 = vmatprep.subr.mxu0 0.0
        %4317 = vmatpush1.msra.mxu0 0.0
        %4318 = vmatprep.subr.mxu0 0.0
        %4319 = vmatpush1.msra.mxu0 %v4286
        %4320 = vmatprep.subr.mxu0 0.0
        %4321 = vmatpush2.msra.mxu0 0.0
        %4322 = vmatprep.subr.mxu0 0.0
        %4323 = vmatpush2.msra.mxu0 0.0
        %4324 = vmatprep.subr.mxu0 0.0
        %4325 = vmatpush2.msra.mxu0 0.0
        %4326 = vmatprep.subr.mxu0 0.0
        %4327 = vmatpush2.msra.mxu0 0.0
        %4328 = vmatprep.subr.mxu0 0.0
        %4329 = vmatpush2.msra.mxu0 0.0
        %4330 = vmatprep.subr.mxu0 0.0
        %4331 = vmatpush2.msra.mxu0 0.0
        %4332 = vmatprep.subr.mxu0 0.0
        %4333 = vmatpush2.msra.mxu0 0.0
        %4334 = vmatprep.subr.mxu0 0.0
        %4335 = vmatpush2.msra.mxu0 0.0
        %4336 = vmatprep.subr.mxu0 0.0
        %4337 = vmatpush2.msra.mxu0 0.0
        %4338 = vmatprep.subr.mxu0 0.0
        %4339 = vmatpush2.msra.mxu0 0.0
        %4340 = vmatprep.subr.mxu0 0.0
        %4341 = vmatpush2.msra.mxu0 0.0
        %4342 = vmatprep.subr.mxu0 0.0
        %4343 = vmatpush2.msra.mxu0 0.0
        %4344 = vmatprep.subr.mxu0 0.0
        %4345 = vmatpush2.msra.mxu0 0.0
        %4346 = vmatprep.subr.mxu0 0.0
        %4347 = vmatpush2.msra.mxu0 0.0
        %4348 = vmatprep.subr.mxu0 0.0
        %4349 = vmatpush2.msra.mxu0 0.0
        %4350 = vmatprep.subr.mxu0 0.0
        %4351 = vmatpush2.msra.mxu0 0.0
        %4352 = vmatprep.mubr.f32.mxu0 0.0
        %4353 = vmatmul.mubr.f32.gmra.mxu0 %v4283
        %v4354 = vpop.f32.mrf.mxu0
        %v4355 = vadd.f32 0.0, %v4354
        %v4356 = vpop.f32.mrf.mxu0
        %4357 = vdwg.mxu0
        %v4358 = vld [vmem:[%s18] sm:$0xff]
        %v4359 = vld [vmem:[%s18 + $0x8] sm:$0xff]
        %v4360 = vld [vmem:[%s18 + $0x10] sm:$0xff]
        %v4361 = vld [vmem:[%s18 + $0x18] sm:$0xff]
        %v4362 = vld [vmem:[%s18 + $0x20] sm:$0xff]
        %v4363 = vld [vmem:[%s18 + $0x28] sm:$0xff]
        %v4364 = vld [vmem:[%s18 + $0x30] sm:$0xff]
        %v4365 = vld [vmem:[%s18 + $0x38] sm:$0xff]
        %v4366 = vld [vmem:[%s18 + $0x40] sm:$0xff]
        %v4367 = vld [vmem:[%s18 + $0x48] sm:$0xff]
        %v4368 = vld [vmem:[%s18 + $0x50] sm:$0xff]
        %v4369 = vld [vmem:[%s18 + $0x58] sm:$0xff]
        %v4370 = vld [vmem:[%s18 + $0x60] sm:$0xff]
        %v4371 = vld [vmem:[%s18 + $0x68] sm:$0xff]
        %s4372 = scalar_lea.vmem %s17, 4
        %v4373 = vld [vmem:[%s4372] sm:$0x7]
        %v4375 = vsel %vm4281, %v4373, 0
        %4377 = vmatprep.subr.mxu0 0.0
        %4378 = vmatpush1.msra.mxu0 0.0
        %4379 = vmatprep.subr.mxu0 0.0
        %4380 = vmatpush1.msra.mxu0 0.0
        %4381 = vmatprep.subr.mxu0 0.0
        %4382 = vmatpush1.msra.mxu0 0.0
        %4383 = vmatprep.subr.mxu0 0.0
        %4384 = vmatpush1.msra.mxu0 0.0
        %4385 = vmatprep.subr.mxu0 0.0
        %4386 = vmatpush1.msra.mxu0 0.0
        %4387 = vmatprep.subr.mxu0 0.0
        %4388 = vmatpush1.msra.mxu0 0.0
        %4389 = vmatprep.subr.mxu0 0.0
        %4390 = vmatpush1.msra.mxu0 0.0
        %4391 = vmatprep.subr.mxu0 0.0
        %4392 = vmatpush1.msra.mxu0 0.0
        %4393 = vmatprep.subr.mxu0 0.0
        %4394 = vmatpush1.msra.mxu0 0.0
        %4395 = vmatprep.subr.mxu0 0.0
        %4396 = vmatpush1.msra.mxu0 0.0
        %4397 = vmatprep.subr.mxu0 0.0
        %4398 = vmatpush1.msra.mxu0 0.0
        %4399 = vmatprep.subr.mxu0 0.0
        %4400 = vmatpush1.msra.mxu0 0.0
        %4401 = vmatprep.subr.mxu0 0.0
        %4402 = vmatpush1.msra.mxu0 0.0
        %4403 = vmatprep.subr.mxu0 0.0
        %4404 = vmatpush1.msra.mxu0 0.0
        %4405 = vmatprep.subr.mxu0 0.0
        %4406 = vmatpush1.msra.mxu0 0.0
        %4407 = vmatprep.subr.mxu0 0.0
        %4408 = vmatpush1.msra.mxu0 %v4286
        %4409 = vmatprep.subr.mxu0 0.0
        %4410 = vmatpush2.msra.mxu0 0.0
        %4411 = vmatprep.subr.mxu0 0.0
        %4412 = vmatpush2.msra.mxu0 0.0
        %4413 = vmatprep.subr.mxu0 0.0
        %4414 = vmatpush2.msra.mxu0 0.0
        %4415 = vmatprep.subr.mxu0 0.0
        %4416 = vmatpush2.msra.mxu0 0.0
        %4417 = vmatprep.subr.mxu0 0.0
        %4418 = vmatpush2.msra.mxu0 0.0
        %4419 = vmatprep.subr.mxu0 0.0
        %4420 = vmatpush2.msra.mxu0 0.0
        %4421 = vmatprep.subr.mxu0 0.0
        %4422 = vmatpush2.msra.mxu0 0.0
        %4423 = vmatprep.subr.mxu0 0.0
        %4424 = vmatpush2.msra.mxu0 0.0
        %4425 = vmatprep.subr.mxu0 0.0
        %4426 = vmatpush2.msra.mxu0 0.0
        %4427 = vmatprep.subr.mxu0 0.0
        %4428 = vmatpush2.msra.mxu0 0.0
        %4429 = vmatprep.subr.mxu0 0.0
        %4430 = vmatpush2.msra.mxu0 0.0
        %4431 = vmatprep.subr.mxu0 0.0
        %4432 = vmatpush2.msra.mxu0 0.0
        %4433 = vmatprep.subr.mxu0 0.0
        %4434 = vmatpush2.msra.mxu0 0.0
        %4435 = vmatprep.subr.mxu0 0.0
        %4436 = vmatpush2.msra.mxu0 0.0
        %4437 = vmatprep.subr.mxu0 0.0
        %4438 = vmatpush2.msra.mxu0 0.0
        %4439 = vmatprep.subr.mxu0 0.0
        %4440 = vmatpush2.msra.mxu0 0.0
        %4441 = vmatprep.mubr.f32.mxu0 0.0
        %4442 = vmatmul.mubr.f32.gmra.mxu0 %v4375
        %v4443 = vpop.f32.mrf.mxu0
        %v4444 = vadd.f32 0.0, %v4443
        %v4445 = vpop.f32.mrf.mxu0
        %4446 = vdwg.mxu0
        %s4447 = scalar_lea.vmem %s18, 112
        %v4448 = vld [vmem:[%s4447] sm:$0xff]
        %v4449 = vld [vmem:[%s4447 + $0x8] sm:$0xff]
        %v4450 = vld [vmem:[%s4447 + $0x10] sm:$0xff]
        %v4451 = vld [vmem:[%s4447 + $0x18] sm:$0xff]
        %v4452 = vld [vmem:[%s4447 + $0x20] sm:$0xff]
        %v4453 = vld [vmem:[%s4447 + $0x28] sm:$0xff]
        %v4454 = vld [vmem:[%s4447 + $0x30] sm:$0xff]
        %v4455 = vld [vmem:[%s4447 + $0x38] sm:$0xff]
        %v4456 = vld [vmem:[%s4447 + $0x40] sm:$0xff]
        %v4457 = vld [vmem:[%s4447 + $0x48] sm:$0xff]
        %v4458 = vld [vmem:[%s4447 + $0x50] sm:$0xff]
        %v4459 = vld [vmem:[%s4447 + $0x58] sm:$0xff]
        %v4460 = vld [vmem:[%s4447 + $0x60] sm:$0xff]
        %v4461 = vld [vmem:[%s4447 + $0x68] sm:$0xff]
        %v4463 = vsel %vm2034, %v4444, 0
        %4465 = vmatprep.subr.mxu0 0.0
        %4466 = vmatpush1.msra.mxu0 0.0
        %4467 = vmatprep.subr.mxu0 0.0
        %4468 = vmatpush1.msra.mxu0 0.0
        %4469 = vmatprep.subr.mxu0 0.0
        %4470 = vmatpush1.msra.mxu0 %v4461
        %4471 = vmatprep.subr.mxu0 0.0
        %4472 = vmatpush1.msra.mxu0 %v4460
        %4473 = vmatprep.subr.mxu0 0.0
        %4474 = vmatpush1.msra.mxu0 %v4459
        %4475 = vmatprep.subr.mxu0 0.0
        %4476 = vmatpush1.msra.mxu0 %v4458
        %4477 = vmatprep.subr.mxu0 0.0
        %4478 = vmatpush1.msra.mxu0 %v4457
        %4479 = vmatprep.subr.mxu0 0.0
        %4480 = vmatpush1.msra.mxu0 %v4456
        %4481 = vmatprep.subr.mxu0 0.0
        %4482 = vmatpush1.msra.mxu0 %v4455
        %4483 = vmatprep.subr.mxu0 0.0
        %4484 = vmatpush1.msra.mxu0 %v4454
        %4485 = vmatprep.subr.mxu0 0.0
        %4486 = vmatpush1.msra.mxu0 %v4453
        %4487 = vmatprep.subr.mxu0 0.0
        %4488 = vmatpush1.msra.mxu0 %v4452
        %4489 = vmatprep.subr.mxu0 0.0
        %4490 = vmatpush1.msra.mxu0 %v4451
        %4491 = vmatprep.subr.mxu0 0.0
        %4492 = vmatpush1.msra.mxu0 %v4450
        %4493 = vmatprep.subr.mxu0 0.0
        %4494 = vmatpush1.msra.mxu0 %v4449
        %4495 = vmatprep.subr.mxu0 0.0
        %4496 = vmatpush1.msra.mxu0 %v4448
        %4497 = vmatprep.subr.mxu0 0.0
        %4498 = vmatpush2.msra.mxu0 0.0
        %4499 = vmatprep.subr.mxu0 0.0
        %4500 = vmatpush2.msra.mxu0 0.0
        %4501 = vmatprep.subr.mxu0 0.0
        %4502 = vmatpush2.msra.mxu0 0.0
        %4503 = vmatprep.subr.mxu0 0.0
        %4504 = vmatpush2.msra.mxu0 0.0
        %4505 = vmatprep.subr.mxu0 0.0
        %4506 = vmatpush2.msra.mxu0 0.0
        %4507 = vmatprep.subr.mxu0 0.0
        %4508 = vmatpush2.msra.mxu0 0.0
        %4509 = vmatprep.subr.mxu0 0.0
        %4510 = vmatpush2.msra.mxu0 0.0
        %4511 = vmatprep.subr.mxu0 0.0
        %4512 = vmatpush2.msra.mxu0 0.0
        %4513 = vmatprep.subr.mxu0 0.0
        %4514 = vmatpush2.msra.mxu0 0.0
        %4515 = vmatprep.subr.mxu0 0.0
        %4516 = vmatpush2.msra.mxu0 0.0
        %4517 = vmatprep.subr.mxu0 0.0
        %4518 = vmatpush2.msra.mxu0 0.0
        %4519 = vmatprep.subr.mxu0 0.0
        %4520 = vmatpush2.msra.mxu0 0.0
        %4521 = vmatprep.subr.mxu0 0.0
        %4522 = vmatpush2.msra.mxu0 0.0
        %4523 = vmatprep.subr.mxu0 0.0
        %4524 = vmatpush2.msra.mxu0 0.0
        %4525 = vmatprep.subr.mxu0 0.0
        %4526 = vmatpush2.msra.mxu0 0.0
        %4527 = vmatprep.subr.mxu0 0.0
        %4528 = vmatpush2.msra.mxu0 0.0
        %4529 = vmatprep.mubr.f32.mxu0 0.0
        %4530 = vmatmul.mubr.f32.gmra.mxu0 %v4463
        %v4531 = vpop.f32.mrf.mxu0
        %v4532 = vadd.f32 0.0, %v4531
        %v4533 = vpop.f32.mrf.mxu0
        %4534 = vdwg.mxu0
        %v4536 = vsel %vm2034, %v4355, 0
        %4538 = vmatprep.subr.mxu0 0.0
        %4539 = vmatpush1.msra.mxu0 0.0
        %4540 = vmatprep.subr.mxu0 0.0
        %4541 = vmatpush1.msra.mxu0 0.0
        %4542 = vmatprep.subr.mxu0 0.0
        %4543 = vmatpush1.msra.mxu0 %v4371
        %4544 = vmatprep.subr.mxu0 0.0
        %4545 = vmatpush1.msra.mxu0 %v4370
        %4546 = vmatprep.subr.mxu0 0.0
        %4547 = vmatpush1.msra.mxu0 %v4369
        %4548 = vmatprep.subr.mxu0 0.0
        %4549 = vmatpush1.msra.mxu0 %v4368
        %4550 = vmatprep.subr.mxu0 0.0
        %4551 = vmatpush1.msra.mxu0 %v4367
        %4552 = vmatprep.subr.mxu0 0.0
        %4553 = vmatpush1.msra.mxu0 %v4366
        %4554 = vmatprep.subr.mxu0 0.0
        %4555 = vmatpush1.msra.mxu0 %v4365
        %4556 = vmatprep.subr.mxu0 0.0
        %4557 = vmatpush1.msra.mxu0 %v4364
        %4558 = vmatprep.subr.mxu0 0.0
        %4559 = vmatpush1.msra.mxu0 %v4363
        %4560 = vmatprep.subr.mxu0 0.0
        %4561 = vmatpush1.msra.mxu0 %v4362
        %4562 = vmatprep.subr.mxu0 0.0
        %4563 = vmatpush1.msra.mxu0 %v4361
        %4564 = vmatprep.subr.mxu0 0.0
        %4565 = vmatpush1.msra.mxu0 %v4360
        %4566 = vmatprep.subr.mxu0 0.0
        %4567 = vmatpush1.msra.mxu0 %v4359
        %4568 = vmatprep.subr.mxu0 0.0
        %4569 = vmatpush1.msra.mxu0 %v4358
        %4570 = vmatprep.subr.mxu0 0.0
        %4571 = vmatpush2.msra.mxu0 0.0
        %4572 = vmatprep.subr.mxu0 0.0
        %4573 = vmatpush2.msra.mxu0 0.0
        %4574 = vmatprep.subr.mxu0 0.0
        %4575 = vmatpush2.msra.mxu0 0.0
        %4576 = vmatprep.subr.mxu0 0.0
        %4577 = vmatpush2.msra.mxu0 0.0
        %4578 = vmatprep.subr.mxu0 0.0
        %4579 = vmatpush2.msra.mxu0 0.0
        %4580 = vmatprep.subr.mxu0 0.0
        %4581 = vmatpush2.msra.mxu0 0.0
        %4582 = vmatprep.subr.mxu0 0.0
        %4583 = vmatpush2.msra.mxu0 0.0
        %4584 = vmatprep.subr.mxu0 0.0
        %4585 = vmatpush2.msra.mxu0 0.0
        %4586 = vmatprep.subr.mxu0 0.0
        %4587 = vmatpush2.msra.mxu0 0.0
        %4588 = vmatprep.subr.mxu0 0.0
        %4589 = vmatpush2.msra.mxu0 0.0
        %4590 = vmatprep.subr.mxu0 0.0
        %4591 = vmatpush2.msra.mxu0 0.0
        %4592 = vmatprep.subr.mxu0 0.0
        %4593 = vmatpush2.msra.mxu0 0.0
        %4594 = vmatprep.subr.mxu0 0.0
        %4595 = vmatpush2.msra.mxu0 0.0
        %4596 = vmatprep.subr.mxu0 0.0
        %4597 = vmatpush2.msra.mxu0 0.0
        %4598 = vmatprep.subr.mxu0 0.0
        %4599 = vmatpush2.msra.mxu0 0.0
        %4600 = vmatprep.subr.mxu0 0.0
        %4601 = vmatpush2.msra.mxu0 0.0
        %4602 = vmatprep.mubr.f32.mxu0 0.0
        %4603 = vmatmul.mubr.f32.gmra.mxu0 %v4536
        %v4604 = vpop.f32.mrf.mxu0
        %v4605 = vadd.f32 %v4532, %v4604
        %v4606 = vpop.f32.mrf.mxu0
        %4607 = vdwg.mxu0
        %s4608 = scalar_lea.vmem %s17, 8
        %v4609 = vld [vmem:[%s4608] sm:$0x7]
        %v4611 = vsel %vm4281, %v4609, 0
        %4613 = vmatprep.subr.mxu0 0.0
        %4614 = vmatpush1.msra.mxu0 0.0
        %4615 = vmatprep.subr.mxu0 0.0
        %4616 = vmatpush1.msra.mxu0 0.0
        %4617 = vmatprep.subr.mxu0 0.0
        %4618 = vmatpush1.msra.mxu0 0.0
        %4619 = vmatprep.subr.mxu0 0.0
        %4620 = vmatpush1.msra.mxu0 0.0
        %4621 = vmatprep.subr.mxu0 0.0
        %4622 = vmatpush1.msra.mxu0 0.0
        %4623 = vmatprep.subr.mxu0 0.0
        %4624 = vmatpush1.msra.mxu0 0.0
        %4625 = vmatprep.subr.mxu0 0.0
        %4626 = vmatpush1.msra.mxu0 0.0
        %4627 = vmatprep.subr.mxu0 0.0
        %4628 = vmatpush1.msra.mxu0 0.0
        %4629 = vmatprep.subr.mxu0 0.0
        %4630 = vmatpush1.msra.mxu0 0.0
        %4631 = vmatprep.subr.mxu0 0.0
        %4632 = vmatpush1.msra.mxu0 0.0
        %4633 = vmatprep.subr.mxu0 0.0
        %4634 = vmatpush1.msra.mxu0 0.0
        %4635 = vmatprep.subr.mxu0 0.0
        %4636 = vmatpush1.msra.mxu0 0.0
        %4637 = vmatprep.subr.mxu0 0.0
        %4638 = vmatpush1.msra.mxu0 0.0
        %4639 = vmatprep.subr.mxu0 0.0
        %4640 = vmatpush1.msra.mxu0 0.0
        %4641 = vmatprep.subr.mxu0 0.0
        %4642 = vmatpush1.msra.mxu0 0.0
        %4643 = vmatprep.subr.mxu0 0.0
        %4644 = vmatpush1.msra.mxu0 %v4286
        %4645 = vmatprep.subr.mxu0 0.0
        %4646 = vmatpush2.msra.mxu0 0.0
        %4647 = vmatprep.subr.mxu0 0.0
        %4648 = vmatpush2.msra.mxu0 0.0
        %4649 = vmatprep.subr.mxu0 0.0
        %4650 = vmatpush2.msra.mxu0 0.0
        %4651 = vmatprep.subr.mxu0 0.0
        %4652 = vmatpush2.msra.mxu0 0.0
        %4653 = vmatprep.subr.mxu0 0.0
        %4654 = vmatpush2.msra.mxu0 0.0
        %4655 = vmatprep.subr.mxu0 0.0
        %4656 = vmatpush2.msra.mxu0 0.0
        %4657 = vmatprep.subr.mxu0 0.0
        %4658 = vmatpush2.msra.mxu0 0.0
        %4659 = vmatprep.subr.mxu0 0.0
        %4660 = vmatpush2.msra.mxu0 0.0
        %4661 = vmatprep.subr.mxu0 0.0
        %4662 = vmatpush2.msra.mxu0 0.0
        %4663 = vmatprep.subr.mxu0 0.0
        %4664 = vmatpush2.msra.mxu0 0.0
        %4665 = vmatprep.subr.mxu0 0.0
        %4666 = vmatpush2.msra.mxu0 0.0
        %4667 = vmatprep.subr.mxu0 0.0
        %4668 = vmatpush2.msra.mxu0 0.0
        %4669 = vmatprep.subr.mxu0 0.0
        %4670 = vmatpush2.msra.mxu0 0.0
        %4671 = vmatprep.subr.mxu0 0.0
        %4672 = vmatpush2.msra.mxu0 0.0
        %4673 = vmatprep.subr.mxu0 0.0
        %4674 = vmatpush2.msra.mxu0 0.0
        %4675 = vmatprep.subr.mxu0 0.0
        %4676 = vmatpush2.msra.mxu0 0.0
        %4677 = vmatprep.mubr.f32.mxu0 0.0
        %4678 = vmatmul.mubr.f32.gmra.mxu0 %v4611
        %v4679 = vpop.f32.mrf.mxu0
        %v4680 = vadd.f32 0.0, %v4679
        %v4681 = vpop.f32.mrf.mxu0
        %4682 = vdwg.mxu0
        %s4683 = scalar_lea.vmem %s18, 224
        %v4684 = vld [vmem:[%s4683] sm:$0xff]
        %v4685 = vld [vmem:[%s4683 + $0x8] sm:$0xff]
        %v4686 = vld [vmem:[%s4683 + $0x10] sm:$0xff]
        %v4687 = vld [vmem:[%s4683 + $0x18] sm:$0xff]
        %v4688 = vld [vmem:[%s4683 + $0x20] sm:$0xff]
        %v4689 = vld [vmem:[%s4683 + $0x28] sm:$0xff]
        %v4690 = vld [vmem:[%s4683 + $0x30] sm:$0xff]
        %v4691 = vld [vmem:[%s4683 + $0x38] sm:$0xff]
        %v4692 = vld [vmem:[%s4683 + $0x40] sm:$0xff]
        %v4693 = vld [vmem:[%s4683 + $0x48] sm:$0xff]
        %v4694 = vld [vmem:[%s4683 + $0x50] sm:$0xff]
        %v4695 = vld [vmem:[%s4683 + $0x58] sm:$0xff]
        %v4696 = vld [vmem:[%s4683 + $0x60] sm:$0xff]
        %v4697 = vld [vmem:[%s4683 + $0x68] sm:$0xff]
        %v4699 = vsel %vm2034, %v4680, 0
        %4701 = vmatprep.subr.mxu0 0.0
        %4702 = vmatpush1.msra.mxu0 0.0
        %4703 = vmatprep.subr.mxu0 0.0
        %4704 = vmatpush1.msra.mxu0 0.0
        %4705 = vmatprep.subr.mxu0 0.0
        %4706 = vmatpush1.msra.mxu0 %v4697
        %4707 = vmatprep.subr.mxu0 0.0
        %4708 = vmatpush1.msra.mxu0 %v4696
        %4709 = vmatprep.subr.mxu0 0.0
        %4710 = vmatpush1.msra.mxu0 %v4695
        %4711 = vmatprep.subr.mxu0 0.0
        %4712 = vmatpush1.msra.mxu0 %v4694
        %4713 = vmatprep.subr.mxu0 0.0
        %4714 = vmatpush1.msra.mxu0 %v4693
        %4715 = vmatprep.subr.mxu0 0.0
        %4716 = vmatpush1.msra.mxu0 %v4692
        %4717 = vmatprep.subr.mxu0 0.0
        %4718 = vmatpush1.msra.mxu0 %v4691
        %4719 = vmatprep.subr.mxu0 0.0
        %4720 = vmatpush1.msra.mxu0 %v4690
        %4721 = vmatprep.subr.mxu0 0.0
        %4722 = vmatpush1.msra.mxu0 %v4689
        %4723 = vmatprep.subr.mxu0 0.0
        %4724 = vmatpush1.msra.mxu0 %v4688
        %4725 = vmatprep.subr.mxu0 0.0
        %4726 = vmatpush1.msra.mxu0 %v4687
        %4727 = vmatprep.subr.mxu0 0.0
        %4728 = vmatpush1.msra.mxu0 %v4686
        %4729 = vmatprep.subr.mxu0 0.0
        %4730 = vmatpush1.msra.mxu0 %v4685
        %4731 = vmatprep.subr.mxu0 0.0
        %4732 = vmatpush1.msra.mxu0 %v4684
        %4733 = vmatprep.subr.mxu0 0.0
        %4734 = vmatpush2.msra.mxu0 0.0
        %4735 = vmatprep.subr.mxu0 0.0
        %4736 = vmatpush2.msra.mxu0 0.0
        %4737 = vmatprep.subr.mxu0 0.0
        %4738 = vmatpush2.msra.mxu0 0.0
        %4739 = vmatprep.subr.mxu0 0.0
        %4740 = vmatpush2.msra.mxu0 0.0
        %4741 = vmatprep.subr.mxu0 0.0
        %4742 = vmatpush2.msra.mxu0 0.0
        %4743 = vmatprep.subr.mxu0 0.0
        %4744 = vmatpush2.msra.mxu0 0.0
        %4745 = vmatprep.subr.mxu0 0.0
        %4746 = vmatpush2.msra.mxu0 0.0
        %4747 = vmatprep.subr.mxu0 0.0
        %4748 = vmatpush2.msra.mxu0 0.0
        %4749 = vmatprep.subr.mxu0 0.0
        %4750 = vmatpush2.msra.mxu0 0.0
        %4751 = vmatprep.subr.mxu0 0.0
        %4752 = vmatpush2.msra.mxu0 0.0
        %4753 = vmatprep.subr.mxu0 0.0
        %4754 = vmatpush2.msra.mxu0 0.0
        %4755 = vmatprep.subr.mxu0 0.0
        %4756 = vmatpush2.msra.mxu0 0.0
        %4757 = vmatprep.subr.mxu0 0.0
        %4758 = vmatpush2.msra.mxu0 0.0
        %4759 = vmatprep.subr.mxu0 0.0
        %4760 = vmatpush2.msra.mxu0 0.0
        %4761 = vmatprep.subr.mxu0 0.0
        %4762 = vmatpush2.msra.mxu0 0.0
        %4763 = vmatprep.subr.mxu0 0.0
        %4764 = vmatpush2.msra.mxu0 0.0
        %4765 = vmatprep.mubr.f32.mxu0 0.0
        %4766 = vmatmul.mubr.f32.gmra.mxu0 %v4699
        %v4767 = vpop.f32.mrf.mxu0
        %v4768 = vadd.f32 0.0, %v4767
        %v4769 = vpop.f32.mrf.mxu0
        %4770 = vdwg.mxu0
        %v4771 = vadd.f32 %v4605, %v4768
        %v4772 = vld [vmem:[%s19] sm:$0x1]
        %v4774 = vlaneseq
        %v4775 = vshrl.u32 %v4774, 7
        %v4776 = vsub.s32 0, %v4775
        %v4777 = vrot.slane %v4772, %v4776
        %v4779 = vadd.f32 %v4771, %v4777
        %vm4780 = vcmask 387072
        %v4781 = vsel %vm4780, %v4779, 0.0
        %4782 = vadd.xlane.f32.xlu0 %v4781
        %v4783 = vpop.xlane.xlu0 %4782
        %v4784 = vrot.slane %v4783, 4
        %v4785 = vadd.f32 %v4783, %v4784
        %v4786 = vrot.slane %v4785, 2
        %v4787 = vadd.f32 %v4785, %v4786
        %v4788 = vrot.slane %v4787, 1
        %v4789 = vadd.f32 %v4787, %v4788
        %s4790 = vtos %v4789
        %v4791 = vrcp.pop 144.0
        %s4792 = vtos %v4791
        %s4793 = smul.f32 %s4790, %s4792
        %v4794 = vstv %s4793
        %v4795 = vsub.f32 %v4779, %v4794
        %v4796 = vmul.f32 %v4795, %v4795
        %v4797 = vsel %vm4780, %v4796, 0.0
        %4798 = vadd.xlane.f32.xlu0 %v4797
        %v4799 = vpop.xlane.xlu0 %4798
        %v4800 = vrot.slane %v4799, 4
        %v4801 = vadd.f32 %v4799, %v4800
        %v4802 = vrot.slane %v4801, 2
        %v4803 = vadd.f32 %v4801, %v4802
        %v4804 = vrot.slane %v4803, 1
        %v4805 = vadd.f32 %v4803, %v4804
        %s4806 = vtos %v4805
        %v4807 = vrcp.pop 144.0
        %s4808 = vtos %v4807
        %s4809 = smul.f32 %s4806, %s4808
        %s4810 = sadd.f32 %s4809, 1e-05
        %v4811 = vstv %s4810
        %v4812 = vrsqrt.pop %v4811
        %s4813 = vtos %v4812
        %v4814 = vstv %s4813
        %v4815 = vmul.f32 %v4795, %v4814
        %v4816 = vld [vmem:[%s20] sm:$0x7]
        %v4817 = vmul.f32 %v4815, %v4816
        %v4818 = vld [vmem:[%s21] sm:$0x7]
        %v4819 = vadd.f32 %v4817, %v4818
        %v4820 = vmax.f32 %v4819, 0.0
        %v4821 = vld [vmem:[%s23] sm:$0x1]
        %v4822 = vld [vmem:[%s22] sm:$0xff]
        %v4823 = vld [vmem:[%s22 + $0x8] sm:$0xff]
        %v4824 = vld [vmem:[%s22 + $0x10] sm:$0xff]
        %v4825 = vld [vmem:[%s22 + $0x18] sm:$0xff]
        %v4826 = vld [vmem:[%s22 + $0x20] sm:$0xff]
        %v4827 = vld [vmem:[%s22 + $0x28] sm:$0xff]
        %vm4828 = vcmask 392192
        %v4830 = vsel %vm4828, %v4820, 0
        %4832 = vmatprep.subr.mxu0 0.0
        %4833 = vmatpush1.msra.mxu0 0.0
        %4834 = vmatprep.subr.mxu0 0.0
        %4835 = vmatpush1.msra.mxu0 0.0
        %4836 = vmatprep.subr.mxu0 0.0
        %4837 = vmatpush1.msra.mxu0 0.0
        %4838 = vmatprep.subr.mxu0 0.0
        %4839 = vmatpush1.msra.mxu0 0.0
        %4840 = vmatprep.subr.mxu0 0.0
        %4841 = vmatpush1.msra.mxu0 0.0
        %4842 = vmatprep.subr.mxu0 0.0
        %4843 = vmatpush1.msra.mxu0 0.0
        %4844 = vmatprep.subr.mxu0 0.0
        %4845 = vmatpush1.msra.mxu0 0.0
        %4846 = vmatprep.subr.mxu0 0.0
        %4847 = vmatpush1.msra.mxu0 0.0
        %4848 = vmatprep.subr.mxu0 0.0
        %4849 = vmatpush1.msra.mxu0 0.0
        %4850 = vmatprep.subr.mxu0 0.0
        %4851 = vmatpush1.msra.mxu0 0.0
        %4852 = vmatprep.subr.mxu0 0.0
        %4853 = vmatpush1.msra.mxu0 %v4827
        %4854 = vmatprep.subr.mxu0 0.0
        %4855 = vmatpush1.msra.mxu0 %v4826
        %4856 = vmatprep.subr.mxu0 0.0
        %4857 = vmatpush1.msra.mxu0 %v4825
        %4858 = vmatprep.subr.mxu0 0.0
        %4859 = vmatpush1.msra.mxu0 %v4824
        %4860 = vmatprep.subr.mxu0 0.0
        %4861 = vmatpush1.msra.mxu0 %v4823
        %4862 = vmatprep.subr.mxu0 0.0
        %4863 = vmatpush1.msra.mxu0 %v4822
        %4864 = vmatprep.subr.mxu0 0.0
        %4865 = vmatpush2.msra.mxu0 0.0
        %4866 = vmatprep.subr.mxu0 0.0
        %4867 = vmatpush2.msra.mxu0 0.0
        %4868 = vmatprep.subr.mxu0 0.0
        %4869 = vmatpush2.msra.mxu0 0.0
        %4870 = vmatprep.subr.mxu0 0.0
        %4871 = vmatpush2.msra.mxu0 0.0
        %4872 = vmatprep.subr.mxu0 0.0
        %4873 = vmatpush2.msra.mxu0 0.0
        %4874 = vmatprep.subr.mxu0 0.0
        %4875 = vmatpush2.msra.mxu0 0.0
        %4876 = vmatprep.subr.mxu0 0.0
        %4877 = vmatpush2.msra.mxu0 0.0
        %4878 = vmatprep.subr.mxu0 0.0
        %4879 = vmatpush2.msra.mxu0 0.0
        %4880 = vmatprep.subr.mxu0 0.0
        %4881 = vmatpush2.msra.mxu0 0.0
        %4882 = vmatprep.subr.mxu0 0.0
        %4883 = vmatpush2.msra.mxu0 0.0
        %4884 = vmatprep.subr.mxu0 0.0
        %4885 = vmatpush2.msra.mxu0 0.0
        %4886 = vmatprep.subr.mxu0 0.0
        %4887 = vmatpush2.msra.mxu0 0.0
        %4888 = vmatprep.subr.mxu0 0.0
        %4889 = vmatpush2.msra.mxu0 0.0
        %4890 = vmatprep.subr.mxu0 0.0
        %4891 = vmatpush2.msra.mxu0 0.0
        %4892 = vmatprep.subr.mxu0 0.0
        %4893 = vmatpush2.msra.mxu0 0.0
        %4894 = vmatprep.subr.mxu0 0.0
        %4895 = vmatpush2.msra.mxu0 0.0
        %4896 = vmatprep.mubr.f32.mxu0 0.0
        %4897 = vmatmul.mubr.f32.gmra.mxu0 %v4830
        %v4898 = vpop.f32.mrf.mxu0
        %v4899 = vadd.f32 0.0, %v4898
        %v4900 = vpop.f32.mrf.mxu0
        %4901 = vdwg.mxu0
        %v4902 = vadd.f32 %v4821, %v4899
        %s4903 = scalar_lea.vmem %s22, 48
        %v4904 = vld [vmem:[%s4903] sm:$0xff]
        %v4905 = vld [vmem:[%s4903 + $0x8] sm:$0xff]
        %v4906 = vld [vmem:[%s4903 + $0x10] sm:$0xff]
        %v4907 = vld [vmem:[%s4903 + $0x18] sm:$0xff]
        %v4908 = vld [vmem:[%s4903 + $0x20] sm:$0xff]
        %v4909 = vld [vmem:[%s4903 + $0x28] sm:$0xff]
        %v4910 = vrot.slane %v4820, 1
        %v4911 = vsel %vm4828, %v4910, 0
        %4913 = vmatprep.subr.mxu0 0.0
        %4914 = vmatpush1.msra.mxu0 0.0
        %4915 = vmatprep.subr.mxu0 0.0
        %4916 = vmatpush1.msra.mxu0 0.0
        %4917 = vmatprep.subr.mxu0 0.0
        %4918 = vmatpush1.msra.mxu0 0.0
        %4919 = vmatprep.subr.mxu0 0.0
        %4920 = vmatpush1.msra.mxu0 0.0
        %4921 = vmatprep.subr.mxu0 0.0
        %4922 = vmatpush1.msra.mxu0 0.0
        %4923 = vmatprep.subr.mxu0 0.0
        %4924 = vmatpush1.msra.mxu0 0.0
        %4925 = vmatprep.subr.mxu0 0.0
        %4926 = vmatpush1.msra.mxu0 0.0
        %4927 = vmatprep.subr.mxu0 0.0
        %4928 = vmatpush1.msra.mxu0 0.0
        %4929 = vmatprep.subr.mxu0 0.0
        %4930 = vmatpush1.msra.mxu0 0.0
        %4931 = vmatprep.subr.mxu0 0.0
        %4932 = vmatpush1.msra.mxu0 0.0
        %4933 = vmatprep.subr.mxu0 0.0
        %4934 = vmatpush1.msra.mxu0 %v4909
        %4935 = vmatprep.subr.mxu0 0.0
        %4936 = vmatpush1.msra.mxu0 %v4908
        %4937 = vmatprep.subr.mxu0 0.0
        %4938 = vmatpush1.msra.mxu0 %v4907
        %4939 = vmatprep.subr.mxu0 0.0
        %4940 = vmatpush1.msra.mxu0 %v4906
        %4941 = vmatprep.subr.mxu0 0.0
        %4942 = vmatpush1.msra.mxu0 %v4905
        %4943 = vmatprep.subr.mxu0 0.0
        %4944 = vmatpush1.msra.mxu0 %v4904
        %4945 = vmatprep.subr.mxu0 0.0
        %4946 = vmatpush2.msra.mxu0 0.0
        %4947 = vmatprep.subr.mxu0 0.0
        %4948 = vmatpush2.msra.mxu0 0.0
        %4949 = vmatprep.subr.mxu0 0.0
        %4950 = vmatpush2.msra.mxu0 0.0
        %4951 = vmatprep.subr.mxu0 0.0
        %4952 = vmatpush2.msra.mxu0 0.0
        %4953 = vmatprep.subr.mxu0 0.0
        %4954 = vmatpush2.msra.mxu0 0.0
        %4955 = vmatprep.subr.mxu0 0.0
        %4956 = vmatpush2.msra.mxu0 0.0
        %4957 = vmatprep.subr.mxu0 0.0
        %4958 = vmatpush2.msra.mxu0 0.0
        %4959 = vmatprep.subr.mxu0 0.0
        %4960 = vmatpush2.msra.mxu0 0.0
        %4961 = vmatprep.subr.mxu0 0.0
        %4962 = vmatpush2.msra.mxu0 0.0
        %4963 = vmatprep.subr.mxu0 0.0
        %4964 = vmatpush2.msra.mxu0 0.0
        %4965 = vmatprep.subr.mxu0 0.0
        %4966 = vmatpush2.msra.mxu0 0.0
        %4967 = vmatprep.subr.mxu0 0.0
        %4968 = vmatpush2.msra.mxu0 0.0
        %4969 = vmatprep.subr.mxu0 0.0
        %4970 = vmatpush2.msra.mxu0 0.0
        %4971 = vmatprep.subr.mxu0 0.0
        %4972 = vmatpush2.msra.mxu0 0.0
        %4973 = vmatprep.subr.mxu0 0.0
        %4974 = vmatpush2.msra.mxu0 0.0
        %4975 = vmatprep.subr.mxu0 0.0
        %4976 = vmatpush2.msra.mxu0 0.0
        %4977 = vmatprep.mubr.f32.mxu0 0.0
        %4978 = vmatmul.mubr.f32.gmra.mxu0 %v4911
        %v4979 = vpop.f32.mrf.mxu0
        %v4980 = vadd.f32 0.0, %v4979
        %v4981 = vpop.f32.mrf.mxu0
        %4982 = vdwg.mxu0
        %v4983 = vadd.f32 %v4902, %v4980
        %s4984 = scalar_lea.vmem %s22, 96
        %v4985 = vld [vmem:[%s4984] sm:$0xff]
        %v4986 = vld [vmem:[%s4984 + $0x8] sm:$0xff]
        %v4987 = vld [vmem:[%s4984 + $0x10] sm:$0xff]
        %v4988 = vld [vmem:[%s4984 + $0x18] sm:$0xff]
        %v4989 = vld [vmem:[%s4984 + $0x20] sm:$0xff]
        %v4990 = vld [vmem:[%s4984 + $0x28] sm:$0xff]
        %v4991 = vrot.slane %v4820, 2
        %v4992 = vsel %vm4828, %v4991, 0
        %4994 = vmatprep.subr.mxu0 0.0
        %4995 = vmatpush1.msra.mxu0 0.0
        %4996 = vmatprep.subr.mxu0 0.0
        %4997 = vmatpush1.msra.mxu0 0.0
        %4998 = vmatprep.subr.mxu0 0.0
        %4999 = vmatpush1.msra.mxu0 0.0
        %5000 = vmatprep.subr.mxu0 0.0
        %5001 = vmatpush1.msra.mxu0 0.0
        %5002 = vmatprep.subr.mxu0 0.0
        %5003 = vmatpush1.msra.mxu0 0.0
        %5004 = vmatprep.subr.mxu0 0.0
        %5005 = vmatpush1.msra.mxu0 0.0
        %5006 = vmatprep.subr.mxu0 0.0
        %5007 = vmatpush1.msra.mxu0 0.0
        %5008 = vmatprep.subr.mxu0 0.0
        %5009 = vmatpush1.msra.mxu0 0.0
        %5010 = vmatprep.subr.mxu0 0.0
        %5011 = vmatpush1.msra.mxu0 0.0
        %5012 = vmatprep.subr.mxu0 0.0
        %5013 = vmatpush1.msra.mxu0 0.0
        %5014 = vmatprep.subr.mxu0 0.0
        %5015 = vmatpush1.msra.mxu0 %v4990
        %5016 = vmatprep.subr.mxu0 0.0
        %5017 = vmatpush1.msra.mxu0 %v4989
        %5018 = vmatprep.subr.mxu0 0.0
        %5019 = vmatpush1.msra.mxu0 %v4988
        %5020 = vmatprep.subr.mxu0 0.0
        %5021 = vmatpush1.msra.mxu0 %v4987
        %5022 = vmatprep.subr.mxu0 0.0
        %5023 = vmatpush1.msra.mxu0 %v4986
        %5024 = vmatprep.subr.mxu0 0.0
        %5025 = vmatpush1.msra.mxu0 %v4985
        %5026 = vmatprep.subr.mxu0 0.0
        %5027 = vmatpush2.msra.mxu0 0.0
        %5028 = vmatprep.subr.mxu0 0.0
        %5029 = vmatpush2.msra.mxu0 0.0
        %5030 = vmatprep.subr.mxu0 0.0
        %5031 = vmatpush2.msra.mxu0 0.0
        %5032 = vmatprep.subr.mxu0 0.0
        %5033 = vmatpush2.msra.mxu0 0.0
        %5034 = vmatprep.subr.mxu0 0.0
        %5035 = vmatpush2.msra.mxu0 0.0
        %5036 = vmatprep.subr.mxu0 0.0
        %5037 = vmatpush2.msra.mxu0 0.0
        %5038 = vmatprep.subr.mxu0 0.0
        %5039 = vmatpush2.msra.mxu0 0.0
        %5040 = vmatprep.subr.mxu0 0.0
        %5041 = vmatpush2.msra.mxu0 0.0
        %5042 = vmatprep.subr.mxu0 0.0
        %5043 = vmatpush2.msra.mxu0 0.0
        %5044 = vmatprep.subr.mxu0 0.0
        %5045 = vmatpush2.msra.mxu0 0.0
        %5046 = vmatprep.subr.mxu0 0.0
        %5047 = vmatpush2.msra.mxu0 0.0
        %5048 = vmatprep.subr.mxu0 0.0
        %5049 = vmatpush2.msra.mxu0 0.0
        %5050 = vmatprep.subr.mxu0 0.0
        %5051 = vmatpush2.msra.mxu0 0.0
        %5052 = vmatprep.subr.mxu0 0.0
        %5053 = vmatpush2.msra.mxu0 0.0
        %5054 = vmatprep.subr.mxu0 0.0
        %5055 = vmatpush2.msra.mxu0 0.0
        %5056 = vmatprep.subr.mxu0 0.0
        %5057 = vmatpush2.msra.mxu0 0.0
        %5058 = vmatprep.mubr.f32.mxu0 0.0
        %5059 = vmatmul.mubr.f32.gmra.mxu0 %v4992
        %v5060 = vpop.f32.mrf.mxu0
        %v5061 = vadd.f32 0.0, %v5060
        %v5062 = vpop.f32.mrf.mxu0
        %5063 = vdwg.mxu0
        %v5064 = vadd.f32 %v4983, %v5061
        %vm5065 = vcmask 253952
        %v5066 = vsel %vm5065, %v5064, 0.0
        %5067 = vadd.xlane.f32.xlu0 %v5066
        %v5068 = vpop.xlane.xlu0 %5067
        %v5069 = vrot.slane %v5068, 4
        %v5070 = vadd.f32 %v5068, %v5069
        %v5071 = vrot.slane %v5070, 2
        %v5072 = vadd.f32 %v5070, %v5071
        %v5073 = vrot.slane %v5072, 1
        %v5074 = vadd.f32 %v5072, %v5073
        %s5075 = vtos %v5074
        %v5076 = vrcp.pop 32.0
        %s5077 = vtos %v5076
        %s5078 = smul.f32 %s5075, %s5077
        %v5079 = vstv %s5078
        %v5080 = vsub.f32 %v5064, %v5079
        %v5081 = vmul.f32 %v5080, %v5080
        %v5082 = vsel %vm5065, %v5081, 0.0
        %5083 = vadd.xlane.f32.xlu0 %v5082
        %v5084 = vpop.xlane.xlu0 %5083
        %v5085 = vrot.slane %v5084, 4
        %v5086 = vadd.f32 %v5084, %v5085
        %v5087 = vrot.slane %v5086, 2
        %v5088 = vadd.f32 %v5086, %v5087
        %v5089 = vrot.slane %v5088, 1
        %v5090 = vadd.f32 %v5088, %v5089
        %s5091 = vtos %v5090
        %v5092 = vrcp.pop 32.0
        %s5093 = vtos %v5092
        %s5094 = smul.f32 %s5091, %s5093
        %s5095 = sadd.f32 %s5094, 1e-05
        %v5096 = vstv %s5095
        %v5097 = vrsqrt.pop %v5096
        %s5098 = vtos %v5097
        %v5099 = vstv %s5098
        %v5100 = vmul.f32 %v5080, %v5099
        %v5101 = vld [vmem:[%s24] sm:$0x1]
        %v5102 = vmul.f32 %v5100, %v5101
        %v5103 = vld [vmem:[%s25] sm:$0x1]
        %v5104 = vadd.f32 %v5102, %v5103
        %v5105 = vtanh.pop %v5104
        %5106 = vst.msk [vmem:[%s758] sm:$0x1] %vm5065, %v5105
        %s5107 = sand.u32 %s579, 1
        %s5108 = scalar_lea.sflag [#allocation5], %s5107
        %s5109 = sand.u32 %s579, 1
        %s5110 = scalar_lea.vmem [#allocation4], %s5109
        // Predicated region
        $region121: #{pixel_encoder_forward.1} parent=119 // pred_check
          %p5111 = pneg %p589
        $region122: #{pixel_encoder_forward.1} parent=119 // pred_check_branch
          %5113 = sbr.rel (%p5111) target = $region124
        $region123: #{pixel_encoder_forward.1} parent=119 // pred_region
          %s5115 = ssub.s32 16, 16
          %5116 = vsyncadd %s5108, %s5115
          %s5117 = smul.addr %s41, 16
          %s5118 = scalar_lea.hbm %s26, %s5117
          %s5120 = sshll.u32 %s5110, 4
          %s5121 = int_to_ptr.vmem [resolvable:$true] %s5120
          %5123 = dma.vmem_to_hbm [thread:$0]  %s5121, 16, %s5118, %s5108
        $region124: #{pixel_encoder_forward.1} parent=119 // pred_fallthru
          _
      $region120: #{pixel_encoder_forward.1} parent=5 // pred_fallthru
        _
      %p5124 = scmp.le.s32.totalorder 2, %s36
      // Predicated region
      $region125: #{pixel_encoder_forward.1} parent=5 // pred_check
        %p5125 = pneg %p5124
      $region126: #{pixel_encoder_forward.1} parent=5 // pred_check_branch
        %5127 = sbr.rel (%p5125) target = $region128
      $region127: #{pixel_encoder_forward.1} parent=5 // pred_region
        %s5128 = ssub.s32 %s36, 2
        // Predicated region
        $region129: #{pixel_encoder_forward.1} parent=127 // pred_check
          %p5129 = pneg %p595
        $region130: #{pixel_encoder_forward.1} parent=127 // pred_check_branch
          %5131 = sbr.rel (%p5129) target = $region132
        $region131: #{pixel_encoder_forward.1} parent=127 // pred_region
          %s5132 = sand.u32 %s580, 1
          %s5133 = scalar_lea.sflag [#allocation5], %s5132
          %s5134 = sand.u32 %s580, 1
          %s5135 = scalar_lea.vmem [#allocation4], %s5134
          %5136 = dma.done %s5133, 16
        $region132: #{pixel_encoder_forward.1} parent=127 // pred_fallthru
          _
      $region128: #{pixel_encoder_forward.1} parent=5 // pred_fallthru
        _
    $region6: #{pixel_encoder_forward.1} parent=1 // loop_footer
      %s40 = sadd.s32 1, %s36
    $region7: #{pixel_encoder_forward.1} parent=1 // loop_footer_branch
      %35 = sbr.rel target = $region3
    $region8: #{pixel_encoder_forward.1} parent=1 // loop_exit
      _
    %5137 = vsyncpa [#allocation5], 1
    %s5138 = scalar_lea.sflag [#allocation5], 1
    %5139 = vsyncpa %s5138, 1

</llo_original>
